<compile_context>
chip_gen: v7x
topology: tpu7x:2x2x1
jax: 0.10.0
libtpu: 0.0.40
codegen_flags: <defaults>
</compile_context>

<pallas_src>
import jax
import jax.numpy as jnp
from jax.experimental import pallas as pl
from jax.experimental.pallas import tpu as pltpu


def _round_up(x, m):
    return (x + m - 1) // m * m


def conv_block(x_nchw, weight_oihw, kernel_size=7, stride=1):
    """Forward of ConvBlock. x_nchw: (N, Cin, H, W); weight: (Cout, Cin, KH, KW)."""
    assert stride == 1, "ConvBlock default stride=1 is what is implemented"
    p = 3  # matches nn.ReflectionPad2d(3)
    N, Cin, H, W = x_nchw.shape
    Cout, Cin_w, KH, KW = weight_oihw.shape
    assert Cin_w == Cin
    assert (KH, KW) == (kernel_size, kernel_size)
    assert H > p and W > p, "reflection pad of 3 needs H, W >= 4"
    # The shifted-window trick relies on every wrap-around lane (column index
    # j in [W, Wp)) being discarded by the final Wp->W compaction.  That only
    # holds when the horizontal kernel extent fits inside the padding budget.
    assert KW - 1 <= 2 * p, "kw shifts must stay within the padded columns"
    out_dtype = x_nchw.dtype

    # bf16 MXU operands: pad Cin to a multiple of 16 so each shifted
    # (Cin_p, HWp) piece is one full bf16 sublane tile (no sublane interleave
    # when stacking 49 of them along the contraction axis).
    Cin_p = _round_up(Cin, 16)
    if Cin_p != Cin:
        x_nchw = jnp.pad(x_nchw, ((0, 0), (0, Cin_p - Cin), (0, 0), (0, 0)))
        weight_oihw = jnp.pad(weight_oihw, ((0, 0), (0, Cin_p - Cin), (0, 0), (0, 0)))

    Hp, Wp = H + 2 * p, W + 2 * p
    HWp = H * Wp          # lanes of the in-kernel padded-width accumulator
    HW = H * W            # lanes of the lane-dense output block
    K_dim = KH * KW * Cin_p
    # Flat lane extent needed by the largest shift window, lane-aligned to 128.
    XL = _round_up(Hp * Wp + KW - 1, 128)

    # Wrapper glue (fused by XLA into one small pass, NO full-tensor
    # transposes): reflect-pad in NCHW, flatten spatial dims onto the lane
    # axis, pad the tail lanes, cast to bf16.
    # TODO(synk): for large images fold the reflection padding / flatten /
    # bf16 cast into the kernel (manual halo DMA) to remove this HBM pass.
    x_pad = jnp.pad(x_nchw, ((0, 0), (0, 0), (p, p), (p, p)), mode="reflect")
    x_flat = x_pad.reshape(N, Cin_p, Hp * Wp)
    x_flat = jnp.pad(x_flat, ((0, 0), (0, 0), (0, XL - Hp * Wp)))
    x_flat = x_flat.astype(jnp.bfloat16)

    # 2-D lane-friendly weight: (Cout, KH*KW*Cin_p),
    # column index = kh*KW*Cin_p + kw*Cin_p + ci (matches rhs stacking order).
    w2 = jnp.transpose(weight_oihw, (0, 2, 3, 1)).reshape(Cout, K_dim)
    w2 = w2.astype(jnp.bfloat16)

    # f32 0/1 selection matrix compacting padded-width lanes (H*Wp) to dense
    # H*W lanes.  Each output column selects exactly one accumulator lane, so
    # the compaction matmul is exact in f32.  Constant index_map -> DMA'd once.
    src = jax.lax.broadcasted_iota(jnp.int32, (HWp, HW), 0)
    dst = jax.lax.broadcasted_iota(jnp.int32, (HWp, HW), 1)
    sel = (src == (dst // W) * Wp + (dst % W)).astype(jnp.float32)

    def kernel(x_ref, w_ref, sel_ref, o_ref, rhs_ref):
        # x_ref:   (1, Cin_p, XL)   bf16 flattened reflect-padded image
        # w_ref:   (Cout, K_dim)    bf16 weight
        # sel_ref: (HWp, HW)        f32 0/1 compaction matrix
        # o_ref:   (1, Cout, HW)    lane-dense NCHW output block
        # rhs_ref: (K_dim, HWp)     bf16 VMEM scratch (stacked shifted views)

        # Stack all 49 kh/kw-shifted views of the flat image along the
        # contraction axis.  Static lane-offset ref loads, bf16 stays bf16,
        # each piece is a full 16-sublane bf16 tile.
        for kh in range(KH):
            for kw in range(KW):
                start = kh * Wp + kw
                row = (kh * KW + kw) * Cin_p
                rhs_ref[row:row + Cin_p, :] = x_ref[0, :, start:start + HWp]

        # One fused depth-K_dim bf16 MXU contraction, f32 accumulation.
        acc = jnp.dot(w_ref[...], rhs_ref[...],
                      preferred_element_type=jnp.float32)      # (Cout, HWp) f32
        acc = jnp.maximum(acc, 0.0)                             # ReLU in f32

        # Single Wp -> W compaction as a tiny 0/1 selection matmul -> one
        # unmasked lane-dense (Cout, H*W) store.
        out = jnp.dot(acc, sel_ref[...],
                      preferred_element_type=jnp.float32)       # (Cout, HW) f32
        o_ref[0, :, :] = out.astype(o_ref.dtype)

    out_flat = pl.pallas_call(
        kernel,
        out_shape=jax.ShapeDtypeStruct((N, Cout, HW), out_dtype),
        grid_spec=pltpu.PrefetchScalarGridSpec(
            num_scalar_prefetch=0,
            grid=(N,),
            in_specs=[
                pl.BlockSpec((1, Cin_p, XL), lambda b: (b, 0, 0)),
                pl.BlockSpec((Cout, K_dim), lambda b: (0, 0)),
                pl.BlockSpec((HWp, HW), lambda b: (0, 0)),
            ],
            out_specs=pl.BlockSpec((1, Cout, HW), lambda b: (b, 0, 0)),
            scratch_shapes=[pltpu.VMEM((K_dim, HWp), jnp.bfloat16)],
        ),
        compiler_params=pltpu.CompilerParams(
            dimension_semantics=("parallel",)),
    )(x_flat, w2, sel)

    # Free (contiguous) reshape back to NCHW — no transpose needed.
    return out_flat.reshape(N, Cout, H, W)


def _reference(x_nchw, weight_oihw):
    """Pure-JAX reference: reflect-pad + valid conv + relu (NCHW, like PyTorch)."""
    p = 3
    x_pad = jnp.pad(x_nchw, ((0, 0), (0, 0), (p, p), (p, p)), mode="reflect")
    y = jax.lax.conv_general_dilated(
        x_pad, weight_oihw, window_strides=(1, 1), padding="VALID",
        dimension_numbers=("NCHW", "OIHW", "NCHW"))
    return jnp.maximum(y, 0.0)


if __name__ == "__main__":
    # Small shapes consistent with the module: ConvBlock(in_planes=4, output_planes=8)
    N, Cin, Cout, H, W = 2, 4, 8, 16, 16
    key = jax.random.PRNGKey(0)
    kx, kw = jax.random.split(key)
    x = jax.random.normal(kx, (N, Cin, H, W), dtype=jnp.float32)
    # Deterministic synthetic weight, PyTorch Conv2d layout (Cout, Cin, KH, KW).
    weight = 0.05 * jax.random.normal(kw, (Cout, Cin, 7, 7), dtype=jnp.float32)

    out = jax.block_until_ready(jax.jit(conv_block)(x, weight))
    ref = jax.block_until_ready(_reference(x, weight))

    assert out.shape == (N, Cout, H, W)
    # bf16 MXU operands with f32 accumulation vs. the all-f32 reference -> loose tol.
    assert jnp.allclose(out, ref, atol=3e-2, rtol=3e-2), "mismatch vs reference conv"

    print("KERNEL_OK")
</pallas_src>

<mosaic_0001>
module attributes {stable_mosaic.version = 11 : i64} {
  func.func @kernel(%arg0: i32, %arg1: memref<1x16x512xbf16, #tpu.memory_space<vmem>>, %arg2: memref<8x784xbf16, #tpu.memory_space<vmem>>, %arg3: memref<352x256xf32, #tpu.memory_space<vmem>>, %arg4: memref<1x8x256xf32, #tpu.memory_space<vmem>>, %arg5: memref<784x352xbf16, #tpu.memory_space<vmem>>) attributes {dimension_semantics = [#tpu.dimension_semantics<parallel>], iteration_bounds = array<i64: 2>, scalar_prefetch = 0 : i64, scratch_operands = 1 : i64, tpu.core_type = #tpu.core_type<tc>, window_params = [{transform_indices = @transform_0, window_bounds = array<i64: 1, 16, 512>}, {pipeline_mode = #tpu.pipeline_mode<synchronous>, transform_indices = @transform_1, window_bounds = array<i64: 8, 784>}, {pipeline_mode = #tpu.pipeline_mode<synchronous>, transform_indices = @transform_2, window_bounds = array<i64: 352, 256>}, {transform_indices = @transform_3, window_bounds = array<i64: 1, 8, 256>}]} {
    %c0 = arith.constant 0 : index
    %c0_0 = arith.constant 0 : index
    %c0_1 = arith.constant 0 : index
    %0 = vector.load %arg1[%c0, %c0_0, %c0_1] : memref<1x16x512xbf16, #tpu.memory_space<vmem>>, vector<1x16x352xbf16>
    %1 = vector.shape_cast %0 : vector<1x16x352xbf16> to vector<16x352xbf16>
    %c0_2 = arith.constant 0 : index
    %c0_3 = arith.constant 0 : index
    %2 = vector.load %arg5[%c0_2, %c0_3] : memref<784x352xbf16, #tpu.memory_space<vmem>>, vector<16x352xbf16>
    tpu.vector_store %arg5[%c0_2, %c0_3], %1 {strides = array<i32>} : memref<784x352xbf16, #tpu.memory_space<vmem>>, vector<16x352xbf16>,
    %c0_4 = arith.constant 0 : index
    %c0_5 = arith.constant 0 : index
    %c1 = arith.constant 1 : index
    %3 = vector.load %arg1[%c0_4, %c0_5, %c1] : memref<1x16x512xbf16, #tpu.memory_space<vmem>>, vector<1x16x352xbf16>
    %4 = vector.shape_cast %3 : vector<1x16x352xbf16> to vector<16x352xbf16>
    %c16 = arith.constant 16 : index
    %c0_6 = arith.constant 0 : index
    %5 = vector.load %arg5[%c16, %c0_6] : memref<784x352xbf16, #tpu.memory_space<vmem>>, vector<16x352xbf16>
    tpu.vector_store %arg5[%c16, %c0_6], %4 {strides = array<i32>} : memref<784x352xbf16, #tpu.memory_space<vmem>>, vector<16x352xbf16>,
    %c0_7 = arith.constant 0 : index
    %c0_8 = arith.constant 0 : index
    %c2 = arith.constant 2 : index
    %6 = vector.load %arg1[%c0_7, %c0_8, %c2] : memref<1x16x512xbf16, #tpu.memory_space<vmem>>, vector<1x16x352xbf16>
    %7 = vector.shape_cast %6 : vector<1x16x352xbf16> to vector<16x352xbf16>
    %c32 = arith.constant 32 : index
    %c0_9 = arith.constant 0 : index
    %8 = vector.load %arg5[%c32, %c0_9] : memref<784x352xbf16, #tpu.memory_space<vmem>>, vector<16x352xbf16>
    tpu.vector_store %arg5[%c32, %c0_9], %7 {strides = array<i32>} : memref<784x352xbf16, #tpu.memory_space<vmem>>, vector<16x352xbf16>,
    %c0_10 = arith.constant 0 : index
    %c0_11 = arith.constant 0 : index
    %c3 = arith.constant 3 : index
    %9 = vector.load %arg1[%c0_10, %c0_11, %c3] : memref<1x16x512xbf16, #tpu.memory_space<vmem>>, vector<1x16x352xbf16>
    %10 = vector.shape_cast %9 : vector<1x16x352xbf16> to vector<16x352xbf16>
    %c48 = arith.constant 48 : index
    %c0_12 = arith.constant 0 : index
    %11 = vector.load %arg5[%c48, %c0_12] : memref<784x352xbf16, #tpu.memory_space<vmem>>, vector<16x352xbf16>
    tpu.vector_store %arg5[%c48, %c0_12], %10 {strides = array<i32>} : memref<784x352xbf16, #tpu.memory_space<vmem>>, vector<16x352xbf16>,
    %c0_13 = arith.constant 0 : index
    %c0_14 = arith.constant 0 : index
    %c4 = arith.constant 4 : index
    %12 = vector.load %arg1[%c0_13, %c0_14, %c4] : memref<1x16x512xbf16, #tpu.memory_space<vmem>>, vector<1x16x352xbf16>
    %13 = vector.shape_cast %12 : vector<1x16x352xbf16> to vector<16x352xbf16>
    %c64 = arith.constant 64 : index
    %c0_15 = arith.constant 0 : index
    %14 = vector.load %arg5[%c64, %c0_15] : memref<784x352xbf16, #tpu.memory_space<vmem>>, vector<16x352xbf16>
    tpu.vector_store %arg5[%c64, %c0_15], %13 {strides = array<i32>} : memref<784x352xbf16, #tpu.memory_space<vmem>>, vector<16x352xbf16>,
    %c0_16 = arith.constant 0 : index
    %c0_17 = arith.constant 0 : index
    %c5 = arith.constant 5 : index
    %15 = vector.load %arg1[%c0_16, %c0_17, %c5] : memref<1x16x512xbf16, #tpu.memory_space<vmem>>, vector<1x16x352xbf16>
    %16 = vector.shape_cast %15 : vector<1x16x352xbf16> to vector<16x352xbf16>
    %c80 = arith.constant 80 : index
    %c0_18 = arith.constant 0 : index
    %17 = vector.load %arg5[%c80, %c0_18] : memref<784x352xbf16, #tpu.memory_space<vmem>>, vector<16x352xbf16>
    tpu.vector_store %arg5[%c80, %c0_18], %16 {strides = array<i32>} : memref<784x352xbf16, #tpu.memory_space<vmem>>, vector<16x352xbf16>,
    %c0_19 = arith.constant 0 : index
    %c0_20 = arith.constant 0 : index
    %c6 = arith.constant 6 : index
    %18 = vector.load %arg1[%c0_19, %c0_20, %c6] : memref<1x16x512xbf16, #tpu.memory_space<vmem>>, vector<1x16x352xbf16>
    %19 = vector.shape_cast %18 : vector<1x16x352xbf16> to vector<16x352xbf16>
    %c96 = arith.constant 96 : index
    %c0_21 = arith.constant 0 : index
    %20 = vector.load %arg5[%c96, %c0_21] : memref<784x352xbf16, #tpu.memory_space<vmem>>, vector<16x352xbf16>
    tpu.vector_store %arg5[%c96, %c0_21], %19 {strides = array<i32>} : memref<784x352xbf16, #tpu.memory_space<vmem>>, vector<16x352xbf16>,
    %c0_22 = arith.constant 0 : index
    %c0_23 = arith.constant 0 : index
    %c22 = arith.constant 22 : index
    %21 = vector.load %arg1[%c0_22, %c0_23, %c22] : memref<1x16x512xbf16, #tpu.memory_space<vmem>>, vector<1x16x352xbf16>
    %22 = vector.shape_cast %21 : vector<1x16x352xbf16> to vector<16x352xbf16>
    %c112 = arith.constant 112 : index
    %c0_24 = arith.constant 0 : index
    %23 = vector.load %arg5[%c112, %c0_24] : memref<784x352xbf16, #tpu.memory_space<vmem>>, vector<16x352xbf16>
    tpu.vector_store %arg5[%c112, %c0_24], %22 {strides = array<i32>} : memref<784x352xbf16, #tpu.memory_space<vmem>>, vector<16x352xbf16>,
    %c0_25 = arith.constant 0 : index
    %c0_26 = arith.constant 0 : index
    %c23 = arith.constant 23 : index
    %24 = vector.load %arg1[%c0_25, %c0_26, %c23] : memref<1x16x512xbf16, #tpu.memory_space<vmem>>, vector<1x16x352xbf16>
    %25 = vector.shape_cast %24 : vector<1x16x352xbf16> to vector<16x352xbf16>
    %c128 = arith.constant 128 : index
    %c0_27 = arith.constant 0 : index
    %26 = vector.load %arg5[%c128, %c0_27] : memref<784x352xbf16, #tpu.memory_space<vmem>>, vector<16x352xbf16>
    tpu.vector_store %arg5[%c128, %c0_27], %25 {strides = array<i32>} : memref<784x352xbf16, #tpu.memory_space<vmem>>, vector<16x352xbf16>,
    %c0_28 = arith.constant 0 : index
    %c0_29 = arith.constant 0 : index
    %c24 = arith.constant 24 : index
    %27 = vector.load %arg1[%c0_28, %c0_29, %c24] : memref<1x16x512xbf16, #tpu.memory_space<vmem>>, vector<1x16x352xbf16>
    %28 = vector.shape_cast %27 : vector<1x16x352xbf16> to vector<16x352xbf16>
    %c144 = arith.constant 144 : index
    %c0_30 = arith.constant 0 : index
    %29 = vector.load %arg5[%c144, %c0_30] : memref<784x352xbf16, #tpu.memory_space<vmem>>, vector<16x352xbf16>
    tpu.vector_store %arg5[%c144, %c0_30], %28 {strides = array<i32>} : memref<784x352xbf16, #tpu.memory_space<vmem>>, vector<16x352xbf16>,
    %c0_31 = arith.constant 0 : index
    %c0_32 = arith.constant 0 : index
    %c25 = arith.constant 25 : index
    %30 = vector.load %arg1[%c0_31, %c0_32, %c25] : memref<1x16x512xbf16, #tpu.memory_space<vmem>>, vector<1x16x352xbf16>
    %31 = vector.shape_cast %30 : vector<1x16x352xbf16> to vector<16x352xbf16>
    %c160 = arith.constant 160 : index
    %c0_33 = arith.constant 0 : index
    %32 = vector.load %arg5[%c160, %c0_33] : memref<784x352xbf16, #tpu.memory_space<vmem>>, vector<16x352xbf16>
    tpu.vector_store %arg5[%c160, %c0_33], %31 {strides = array<i32>} : memref<784x352xbf16, #tpu.memory_space<vmem>>, vector<16x352xbf16>,
    %c0_34 = arith.constant 0 : index
    %c0_35 = arith.constant 0 : index
    %c26 = arith.constant 26 : index
    %33 = vector.load %arg1[%c0_34, %c0_35, %c26] : memref<1x16x512xbf16, #tpu.memory_space<vmem>>, vector<1x16x352xbf16>
    %34 = vector.shape_cast %33 : vector<1x16x352xbf16> to vector<16x352xbf16>
    %c176 = arith.constant 176 : index
    %c0_36 = arith.constant 0 : index
    %35 = vector.load %arg5[%c176, %c0_36] : memref<784x352xbf16, #tpu.memory_space<vmem>>, vector<16x352xbf16>
    tpu.vector_store %arg5[%c176, %c0_36], %34 {strides = array<i32>} : memref<784x352xbf16, #tpu.memory_space<vmem>>, vector<16x352xbf16>,
    %c0_37 = arith.constant 0 : index
    %c0_38 = arith.constant 0 : index
    %c27 = arith.constant 27 : index
    %36 = vector.load %arg1[%c0_37, %c0_38, %c27] : memref<1x16x512xbf16, #tpu.memory_space<vmem>>, vector<1x16x352xbf16>
    %37 = vector.shape_cast %36 : vector<1x16x352xbf16> to vector<16x352xbf16>
    %c192 = arith.constant 192 : index
    %c0_39 = arith.constant 0 : index
    %38 = vector.load %arg5[%c192, %c0_39] : memref<784x352xbf16, #tpu.memory_space<vmem>>, vector<16x352xbf16>
    tpu.vector_store %arg5[%c192, %c0_39], %37 {strides = array<i32>} : memref<784x352xbf16, #tpu.memory_space<vmem>>, vector<16x352xbf16>,
    %c0_40 = arith.constant 0 : index
    %c0_41 = arith.constant 0 : index
    %c28 = arith.constant 28 : index
    %39 = vector.load %arg1[%c0_40, %c0_41, %c28] : memref<1x16x512xbf16, #tpu.memory_space<vmem>>, vector<1x16x352xbf16>
    %40 = vector.shape_cast %39 : vector<1x16x352xbf16> to vector<16x352xbf16>
    %c208 = arith.constant 208 : index
    %c0_42 = arith.constant 0 : index
    %41 = vector.load %arg5[%c208, %c0_42] : memref<784x352xbf16, #tpu.memory_space<vmem>>, vector<16x352xbf16>
    tpu.vector_store %arg5[%c208, %c0_42], %40 {strides = array<i32>} : memref<784x352xbf16, #tpu.memory_space<vmem>>, vector<16x352xbf16>,
    %c0_43 = arith.constant 0 : index
    %c0_44 = arith.constant 0 : index
    %c44 = arith.constant 44 : index
    %42 = vector.load %arg1[%c0_43, %c0_44, %c44] : memref<1x16x512xbf16, #tpu.memory_space<vmem>>, vector<1x16x352xbf16>
    %43 = vector.shape_cast %42 : vector<1x16x352xbf16> to vector<16x352xbf16>
    %c224 = arith.constant 224 : index
    %c0_45 = arith.constant 0 : index
    %44 = vector.load %arg5[%c224, %c0_45] : memref<784x352xbf16, #tpu.memory_space<vmem>>, vector<16x352xbf16>
    tpu.vector_store %arg5[%c224, %c0_45], %43 {strides = array<i32>} : memref<784x352xbf16, #tpu.memory_space<vmem>>, vector<16x352xbf16>,
    %c0_46 = arith.constant 0 : index
    %c0_47 = arith.constant 0 : index
    %c45 = arith.constant 45 : index
    %45 = vector.load %arg1[%c0_46, %c0_47, %c45] : memref<1x16x512xbf16, #tpu.memory_space<vmem>>, vector<1x16x352xbf16>
    %46 = vector.shape_cast %45 : vector<1x16x352xbf16> to vector<16x352xbf16>
    %c240 = arith.constant 240 : index
    %c0_48 = arith.constant 0 : index
    %47 = vector.load %arg5[%c240, %c0_48] : memref<784x352xbf16, #tpu.memory_space<vmem>>, vector<16x352xbf16>
    tpu.vector_store %arg5[%c240, %c0_48], %46 {strides = array<i32>} : memref<784x352xbf16, #tpu.memory_space<vmem>>, vector<16x352xbf16>,
    %c0_49 = arith.constant 0 : index
    %c0_50 = arith.constant 0 : index
    %c46 = arith.constant 46 : index
    %48 = vector.load %arg1[%c0_49, %c0_50, %c46] : memref<1x16x512xbf16, #tpu.memory_space<vmem>>, vector<1x16x352xbf16>
    %49 = vector.shape_cast %48 : vector<1x16x352xbf16> to vector<16x352xbf16>
    %c256 = arith.constant 256 : index
    %c0_51 = arith.constant 0 : index
    %50 = vector.load %arg5[%c256, %c0_51] : memref<784x352xbf16, #tpu.memory_space<vmem>>, vector<16x352xbf16>
    tpu.vector_store %arg5[%c256, %c0_51], %49 {strides = array<i32>} : memref<784x352xbf16, #tpu.memory_space<vmem>>, vector<16x352xbf16>,
    %c0_52 = arith.constant 0 : index
    %c0_53 = arith.constant 0 : index
    %c47 = arith.constant 47 : index
    %51 = vector.load %arg1[%c0_52, %c0_53, %c47] : memref<1x16x512xbf16, #tpu.memory_space<vmem>>, vector<1x16x352xbf16>
    %52 = vector.shape_cast %51 : vector<1x16x352xbf16> to vector<16x352xbf16>
    %c272 = arith.constant 272 : index
    %c0_54 = arith.constant 0 : index
    %53 = vector.load %arg5[%c272, %c0_54] : memref<784x352xbf16, #tpu.memory_space<vmem>>, vector<16x352xbf16>
    tpu.vector_store %arg5[%c272, %c0_54], %52 {strides = array<i32>} : memref<784x352xbf16, #tpu.memory_space<vmem>>, vector<16x352xbf16>,
    %c0_55 = arith.constant 0 : index
    %c0_56 = arith.constant 0 : index
    %c48_57 = arith.constant 48 : index
    %54 = vector.load %arg1[%c0_55, %c0_56, %c48_57] : memref<1x16x512xbf16, #tpu.memory_space<vmem>>, vector<1x16x352xbf16>
    %55 = vector.shape_cast %54 : vector<1x16x352xbf16> to vector<16x352xbf16>
    %c288 = arith.constant 288 : index
    %c0_58 = arith.constant 0 : index
    %56 = vector.load %arg5[%c288, %c0_58] : memref<784x352xbf16, #tpu.memory_space<vmem>>, vector<16x352xbf16>
    tpu.vector_store %arg5[%c288, %c0_58], %55 {strides = array<i32>} : memref<784x352xbf16, #tpu.memory_space<vmem>>, vector<16x352xbf16>,
    %c0_59 = arith.constant 0 : index
    %c0_60 = arith.constant 0 : index
    %c49 = arith.constant 49 : index
    %57 = vector.load %arg1[%c0_59, %c0_60, %c49] : memref<1x16x512xbf16, #tpu.memory_space<vmem>>, vector<1x16x352xbf16>
    %58 = vector.shape_cast %57 : vector<1x16x352xbf16> to vector<16x352xbf16>
    %c304 = arith.constant 304 : index
    %c0_61 = arith.constant 0 : index
    %59 = vector.load %arg5[%c304, %c0_61] : memref<784x352xbf16, #tpu.memory_space<vmem>>, vector<16x352xbf16>
    tpu.vector_store %arg5[%c304, %c0_61], %58 {strides = array<i32>} : memref<784x352xbf16, #tpu.memory_space<vmem>>, vector<16x352xbf16>,
    %c0_62 = arith.constant 0 : index
    %c0_63 = arith.constant 0 : index
    %c50 = arith.constant 50 : index
    %60 = vector.load %arg1[%c0_62, %c0_63, %c50] : memref<1x16x512xbf16, #tpu.memory_space<vmem>>, vector<1x16x352xbf16>
    %61 = vector.shape_cast %60 : vector<1x16x352xbf16> to vector<16x352xbf16>
    %c320 = arith.constant 320 : index
    %c0_64 = arith.constant 0 : index
    %62 = vector.load %arg5[%c320, %c0_64] : memref<784x352xbf16, #tpu.memory_space<vmem>>, vector<16x352xbf16>
    tpu.vector_store %arg5[%c320, %c0_64], %61 {strides = array<i32>} : memref<784x352xbf16, #tpu.memory_space<vmem>>, vector<16x352xbf16>,
    %c0_65 = arith.constant 0 : index
    %c0_66 = arith.constant 0 : index
    %c66 = arith.constant 66 : index
    %63 = vector.load %arg1[%c0_65, %c0_66, %c66] : memref<1x16x512xbf16, #tpu.memory_space<vmem>>, vector<1x16x352xbf16>
    %64 = vector.shape_cast %63 : vector<1x16x352xbf16> to vector<16x352xbf16>
    %c336 = arith.constant 336 : index
    %c0_67 = arith.constant 0 : index
    %65 = vector.load %arg5[%c336, %c0_67] : memref<784x352xbf16, #tpu.memory_space<vmem>>, vector<16x352xbf16>
    tpu.vector_store %arg5[%c336, %c0_67], %64 {strides = array<i32>} : memref<784x352xbf16, #tpu.memory_space<vmem>>, vector<16x352xbf16>,
    %c0_68 = arith.constant 0 : index
    %c0_69 = arith.constant 0 : index
    %c67 = arith.constant 67 : index
    %66 = vector.load %arg1[%c0_68, %c0_69, %c67] : memref<1x16x512xbf16, #tpu.memory_space<vmem>>, vector<1x16x352xbf16>
    %67 = vector.shape_cast %66 : vector<1x16x352xbf16> to vector<16x352xbf16>
    %c352 = arith.constant 352 : index
    %c0_70 = arith.constant 0 : index
    %68 = vector.load %arg5[%c352, %c0_70] : memref<784x352xbf16, #tpu.memory_space<vmem>>, vector<16x352xbf16>
    tpu.vector_store %arg5[%c352, %c0_70], %67 {strides = array<i32>} : memref<784x352xbf16, #tpu.memory_space<vmem>>, vector<16x352xbf16>,
    %c0_71 = arith.constant 0 : index
    %c0_72 = arith.constant 0 : index
    %c68 = arith.constant 68 : index
    %69 = vector.load %arg1[%c0_71, %c0_72, %c68] : memref<1x16x512xbf16, #tpu.memory_space<vmem>>, vector<1x16x352xbf16>
    %70 = vector.shape_cast %69 : vector<1x16x352xbf16> to vector<16x352xbf16>
    %c368 = arith.constant 368 : index
    %c0_73 = arith.constant 0 : index
    %71 = vector.load %arg5[%c368, %c0_73] : memref<784x352xbf16, #tpu.memory_space<vmem>>, vector<16x352xbf16>
    tpu.vector_store %arg5[%c368, %c0_73], %70 {strides = array<i32>} : memref<784x352xbf16, #tpu.memory_space<vmem>>, vector<16x352xbf16>,
    %c0_74 = arith.constant 0 : index
    %c0_75 = arith.constant 0 : index
    %c69 = arith.constant 69 : index
    %72 = vector.load %arg1[%c0_74, %c0_75, %c69] : memref<1x16x512xbf16, #tpu.memory_space<vmem>>, vector<1x16x352xbf16>
    %73 = vector.shape_cast %72 : vector<1x16x352xbf16> to vector<16x352xbf16>
    %c384 = arith.constant 384 : index
    %c0_76 = arith.constant 0 : index
    %74 = vector.load %arg5[%c384, %c0_76] : memref<784x352xbf16, #tpu.memory_space<vmem>>, vector<16x352xbf16>
    tpu.vector_store %arg5[%c384, %c0_76], %73 {strides = array<i32>} : memref<784x352xbf16, #tpu.memory_space<vmem>>, vector<16x352xbf16>,
    %c0_77 = arith.constant 0 : index
    %c0_78 = arith.constant 0 : index
    %c70 = arith.constant 70 : index
    %75 = vector.load %arg1[%c0_77, %c0_78, %c70] : memref<1x16x512xbf16, #tpu.memory_space<vmem>>, vector<1x16x352xbf16>
    %76 = vector.shape_cast %75 : vector<1x16x352xbf16> to vector<16x352xbf16>
    %c400 = arith.constant 400 : index
    %c0_79 = arith.constant 0 : index
    %77 = vector.load %arg5[%c400, %c0_79] : memref<784x352xbf16, #tpu.memory_space<vmem>>, vector<16x352xbf16>
    tpu.vector_store %arg5[%c400, %c0_79], %76 {strides = array<i32>} : memref<784x352xbf16, #tpu.memory_space<vmem>>, vector<16x352xbf16>,
    %c0_80 = arith.constant 0 : index
    %c0_81 = arith.constant 0 : index
    %c71 = arith.constant 71 : index
    %78 = vector.load %arg1[%c0_80, %c0_81, %c71] : memref<1x16x512xbf16, #tpu.memory_space<vmem>>, vector<1x16x352xbf16>
    %79 = vector.shape_cast %78 : vector<1x16x352xbf16> to vector<16x352xbf16>
    %c416 = arith.constant 416 : index
    %c0_82 = arith.constant 0 : index
    %80 = vector.load %arg5[%c416, %c0_82] : memref<784x352xbf16, #tpu.memory_space<vmem>>, vector<16x352xbf16>
    tpu.vector_store %arg5[%c416, %c0_82], %79 {strides = array<i32>} : memref<784x352xbf16, #tpu.memory_space<vmem>>, vector<16x352xbf16>,
    %c0_83 = arith.constant 0 : index
    %c0_84 = arith.constant 0 : index
    %c72 = arith.constant 72 : index
    %81 = vector.load %arg1[%c0_83, %c0_84, %c72] : memref<1x16x512xbf16, #tpu.memory_space<vmem>>, vector<1x16x352xbf16>
    %82 = vector.shape_cast %81 : vector<1x16x352xbf16> to vector<16x352xbf16>
    %c432 = arith.constant 432 : index
    %c0_85 = arith.constant 0 : index
    %83 = vector.load %arg5[%c432, %c0_85] : memref<784x352xbf16, #tpu.memory_space<vmem>>, vector<16x352xbf16>
    tpu.vector_store %arg5[%c432, %c0_85], %82 {strides = array<i32>} : memref<784x352xbf16, #tpu.memory_space<vmem>>, vector<16x352xbf16>,
    %c0_86 = arith.constant 0 : index
    %c0_87 = arith.constant 0 : index
    %c88 = arith.constant 88 : index
    %84 = vector.load %arg1[%c0_86, %c0_87, %c88] : memref<1x16x512xbf16, #tpu.memory_space<vmem>>, vector<1x16x352xbf16>
    %85 = vector.shape_cast %84 : vector<1x16x352xbf16> to vector<16x352xbf16>
    %c448 = arith.constant 448 : index
    %c0_88 = arith.constant 0 : index
    %86 = vector.load %arg5[%c448, %c0_88] : memref<784x352xbf16, #tpu.memory_space<vmem>>, vector<16x352xbf16>
    tpu.vector_store %arg5[%c448, %c0_88], %85 {strides = array<i32>} : memref<784x352xbf16, #tpu.memory_space<vmem>>, vector<16x352xbf16>,
    %c0_89 = arith.constant 0 : index
    %c0_90 = arith.constant 0 : index
    %c89 = arith.constant 89 : index
    %87 = vector.load %arg1[%c0_89, %c0_90, %c89] : memref<1x16x512xbf16, #tpu.memory_space<vmem>>, vector<1x16x352xbf16>
    %88 = vector.shape_cast %87 : vector<1x16x352xbf16> to vector<16x352xbf16>
    %c464 = arith.constant 464 : index
    %c0_91 = arith.constant 0 : index
    %89 = vector.load %arg5[%c464, %c0_91] : memref<784x352xbf16, #tpu.memory_space<vmem>>, vector<16x352xbf16>
    tpu.vector_store %arg5[%c464, %c0_91], %88 {strides = array<i32>} : memref<784x352xbf16, #tpu.memory_space<vmem>>, vector<16x352xbf16>,
    %c0_92 = arith.constant 0 : index
    %c0_93 = arith.constant 0 : index
    %c90 = arith.constant 90 : index
    %90 = vector.load %arg1[%c0_92, %c0_93, %c90] : memref<1x16x512xbf16, #tpu.memory_space<vmem>>, vector<1x16x352xbf16>
    %91 = vector.shape_cast %90 : vector<1x16x352xbf16> to vector<16x352xbf16>
    %c480 = arith.constant 480 : index
    %c0_94 = arith.constant 0 : index
    %92 = vector.load %arg5[%c480, %c0_94] : memref<784x352xbf16, #tpu.memory_space<vmem>>, vector<16x352xbf16>
    tpu.vector_store %arg5[%c480, %c0_94], %91 {strides = array<i32>} : memref<784x352xbf16, #tpu.memory_space<vmem>>, vector<16x352xbf16>,
    %c0_95 = arith.constant 0 : index
    %c0_96 = arith.constant 0 : index
    %c91 = arith.constant 91 : index
    %93 = vector.load %arg1[%c0_95, %c0_96, %c91] : memref<1x16x512xbf16, #tpu.memory_space<vmem>>, vector<1x16x352xbf16>
    %94 = vector.shape_cast %93 : vector<1x16x352xbf16> to vector<16x352xbf16>
    %c496 = arith.constant 496 : index
    %c0_97 = arith.constant 0 : index
    %95 = vector.load %arg5[%c496, %c0_97] : memref<784x352xbf16, #tpu.memory_space<vmem>>, vector<16x352xbf16>
    tpu.vector_store %arg5[%c496, %c0_97], %94 {strides = array<i32>} : memref<784x352xbf16, #tpu.memory_space<vmem>>, vector<16x352xbf16>,
    %c0_98 = arith.constant 0 : index
    %c0_99 = arith.constant 0 : index
    %c92 = arith.constant 92 : index
    %96 = vector.load %arg1[%c0_98, %c0_99, %c92] : memref<1x16x512xbf16, #tpu.memory_space<vmem>>, vector<1x16x352xbf16>
    %97 = vector.shape_cast %96 : vector<1x16x352xbf16> to vector<16x352xbf16>
    %c512 = arith.constant 512 : index
    %c0_100 = arith.constant 0 : index
    %98 = vector.load %arg5[%c512, %c0_100] : memref<784x352xbf16, #tpu.memory_space<vmem>>, vector<16x352xbf16>
    tpu.vector_store %arg5[%c512, %c0_100], %97 {strides = array<i32>} : memref<784x352xbf16, #tpu.memory_space<vmem>>, vector<16x352xbf16>,
    %c0_101 = arith.constant 0 : index
    %c0_102 = arith.constant 0 : index
    %c93 = arith.constant 93 : index
    %99 = vector.load %arg1[%c0_101, %c0_102, %c93] : memref<1x16x512xbf16, #tpu.memory_space<vmem>>, vector<1x16x352xbf16>
    %100 = vector.shape_cast %99 : vector<1x16x352xbf16> to vector<16x352xbf16>
    %c528 = arith.constant 528 : index
    %c0_103 = arith.constant 0 : index
    %101 = vector.load %arg5[%c528, %c0_103] : memref<784x352xbf16, #tpu.memory_space<vmem>>, vector<16x352xbf16>
    tpu.vector_store %arg5[%c528, %c0_103], %100 {strides = array<i32>} : memref<784x352xbf16, #tpu.memory_space<vmem>>, vector<16x352xbf16>,
    %c0_104 = arith.constant 0 : index
    %c0_105 = arith.constant 0 : index
    %c94 = arith.constant 94 : index
    %102 = vector.load %arg1[%c0_104, %c0_105, %c94] : memref<1x16x512xbf16, #tpu.memory_space<vmem>>, vector<1x16x352xbf16>
    %103 = vector.shape_cast %102 : vector<1x16x352xbf16> to vector<16x352xbf16>
    %c544 = arith.constant 544 : index
    %c0_106 = arith.constant 0 : index
    %104 = vector.load %arg5[%c544, %c0_106] : memref<784x352xbf16, #tpu.memory_space<vmem>>, vector<16x352xbf16>
    tpu.vector_store %arg5[%c544, %c0_106], %103 {strides = array<i32>} : memref<784x352xbf16, #tpu.memory_space<vmem>>, vector<16x352xbf16>,
    %c0_107 = arith.constant 0 : index
    %c0_108 = arith.constant 0 : index
    %c110 = arith.constant 110 : index
    %105 = vector.load %arg1[%c0_107, %c0_108, %c110] : memref<1x16x512xbf16, #tpu.memory_space<vmem>>, vector<1x16x352xbf16>
    %106 = vector.shape_cast %105 : vector<1x16x352xbf16> to vector<16x352xbf16>
    %c560 = arith.constant 560 : index
    %c0_109 = arith.constant 0 : index
    %107 = vector.load %arg5[%c560, %c0_109] : memref<784x352xbf16, #tpu.memory_space<vmem>>, vector<16x352xbf16>
    tpu.vector_store %arg5[%c560, %c0_109], %106 {strides = array<i32>} : memref<784x352xbf16, #tpu.memory_space<vmem>>, vector<16x352xbf16>,
    %c0_110 = arith.constant 0 : index
    %c0_111 = arith.constant 0 : index
    %c111 = arith.constant 111 : index
    %108 = vector.load %arg1[%c0_110, %c0_111, %c111] : memref<1x16x512xbf16, #tpu.memory_space<vmem>>, vector<1x16x352xbf16>
    %109 = vector.shape_cast %108 : vector<1x16x352xbf16> to vector<16x352xbf16>
    %c576 = arith.constant 576 : index
    %c0_112 = arith.constant 0 : index
    %110 = vector.load %arg5[%c576, %c0_112] : memref<784x352xbf16, #tpu.memory_space<vmem>>, vector<16x352xbf16>
    tpu.vector_store %arg5[%c576, %c0_112], %109 {strides = array<i32>} : memref<784x352xbf16, #tpu.memory_space<vmem>>, vector<16x352xbf16>,
    %c0_113 = arith.constant 0 : index
    %c0_114 = arith.constant 0 : index
    %c112_115 = arith.constant 112 : index
    %111 = vector.load %arg1[%c0_113, %c0_114, %c112_115] : memref<1x16x512xbf16, #tpu.memory_space<vmem>>, vector<1x16x352xbf16>
    %112 = vector.shape_cast %111 : vector<1x16x352xbf16> to vector<16x352xbf16>
    %c592 = arith.constant 592 : index
    %c0_116 = arith.constant 0 : index
    %113 = vector.load %arg5[%c592, %c0_116] : memref<784x352xbf16, #tpu.memory_space<vmem>>, vector<16x352xbf16>
    tpu.vector_store %arg5[%c592, %c0_116], %112 {strides = array<i32>} : memref<784x352xbf16, #tpu.memory_space<vmem>>, vector<16x352xbf16>,
    %c0_117 = arith.constant 0 : index
    %c0_118 = arith.constant 0 : index
    %c113 = arith.constant 113 : index
    %114 = vector.load %arg1[%c0_117, %c0_118, %c113] : memref<1x16x512xbf16, #tpu.memory_space<vmem>>, vector<1x16x352xbf16>
    %115 = vector.shape_cast %114 : vector<1x16x352xbf16> to vector<16x352xbf16>
    %c608 = arith.constant 608 : index
    %c0_119 = arith.constant 0 : index
    %116 = vector.load %arg5[%c608, %c0_119] : memref<784x352xbf16, #tpu.memory_space<vmem>>, vector<16x352xbf16>
    tpu.vector_store %arg5[%c608, %c0_119], %115 {strides = array<i32>} : memref<784x352xbf16, #tpu.memory_space<vmem>>, vector<16x352xbf16>,
    %c0_120 = arith.constant 0 : index
    %c0_121 = arith.constant 0 : index
    %c114 = arith.constant 114 : index
    %117 = vector.load %arg1[%c0_120, %c0_121, %c114] : memref<1x16x512xbf16, #tpu.memory_space<vmem>>, vector<1x16x352xbf16>
    %118 = vector.shape_cast %117 : vector<1x16x352xbf16> to vector<16x352xbf16>
    %c624 = arith.constant 624 : index
    %c0_122 = arith.constant 0 : index
    %119 = vector.load %arg5[%c624, %c0_122] : memref<784x352xbf16, #tpu.memory_space<vmem>>, vector<16x352xbf16>
    tpu.vector_store %arg5[%c624, %c0_122], %118 {strides = array<i32>} : memref<784x352xbf16, #tpu.memory_space<vmem>>, vector<16x352xbf16>,
    %c0_123 = arith.constant 0 : index
    %c0_124 = arith.constant 0 : index
    %c115 = arith.constant 115 : index
    %120 = vector.load %arg1[%c0_123, %c0_124, %c115] : memref<1x16x512xbf16, #tpu.memory_space<vmem>>, vector<1x16x352xbf16>
    %121 = vector.shape_cast %120 : vector<1x16x352xbf16> to vector<16x352xbf16>
    %c640 = arith.constant 640 : index
    %c0_125 = arith.constant 0 : index
    %122 = vector.load %arg5[%c640, %c0_125] : memref<784x352xbf16, #tpu.memory_space<vmem>>, vector<16x352xbf16>
    tpu.vector_store %arg5[%c640, %c0_125], %121 {strides = array<i32>} : memref<784x352xbf16, #tpu.memory_space<vmem>>, vector<16x352xbf16>,
    %c0_126 = arith.constant 0 : index
    %c0_127 = arith.constant 0 : index
    %c116 = arith.constant 116 : index
    %123 = vector.load %arg1[%c0_126, %c0_127, %c116] : memref<1x16x512xbf16, #tpu.memory_space<vmem>>, vector<1x16x352xbf16>
    %124 = vector.shape_cast %123 : vector<1x16x352xbf16> to vector<16x352xbf16>
    %c656 = arith.constant 656 : index
    %c0_128 = arith.constant 0 : index
    %125 = vector.load %arg5[%c656, %c0_128] : memref<784x352xbf16, #tpu.memory_space<vmem>>, vector<16x352xbf16>
    tpu.vector_store %arg5[%c656, %c0_128], %124 {strides = array<i32>} : memref<784x352xbf16, #tpu.memory_space<vmem>>, vector<16x352xbf16>,
    %c0_129 = arith.constant 0 : index
    %c0_130 = arith.constant 0 : index
    %c132 = arith.constant 132 : index
    %126 = vector.load %arg1[%c0_129, %c0_130, %c132] : memref<1x16x512xbf16, #tpu.memory_space<vmem>>, vector<1x16x352xbf16>
    %127 = vector.shape_cast %126 : vector<1x16x352xbf16> to vector<16x352xbf16>
    %c672 = arith.constant 672 : index
    %c0_131 = arith.constant 0 : index
    %128 = vector.load %arg5[%c672, %c0_131] : memref<784x352xbf16, #tpu.memory_space<vmem>>, vector<16x352xbf16>
    tpu.vector_store %arg5[%c672, %c0_131], %127 {strides = array<i32>} : memref<784x352xbf16, #tpu.memory_space<vmem>>, vector<16x352xbf16>,
    %c0_132 = arith.constant 0 : index
    %c0_133 = arith.constant 0 : index
    %c133 = arith.constant 133 : index
    %129 = vector.load %arg1[%c0_132, %c0_133, %c133] : memref<1x16x512xbf16, #tpu.memory_space<vmem>>, vector<1x16x352xbf16>
    %130 = vector.shape_cast %129 : vector<1x16x352xbf16> to vector<16x352xbf16>
    %c688 = arith.constant 688 : index
    %c0_134 = arith.constant 0 : index
    %131 = vector.load %arg5[%c688, %c0_134] : memref<784x352xbf16, #tpu.memory_space<vmem>>, vector<16x352xbf16>
    tpu.vector_store %arg5[%c688, %c0_134], %130 {strides = array<i32>} : memref<784x352xbf16, #tpu.memory_space<vmem>>, vector<16x352xbf16>,
    %c0_135 = arith.constant 0 : index
    %c0_136 = arith.constant 0 : index
    %c134 = arith.constant 134 : index
    %132 = vector.load %arg1[%c0_135, %c0_136, %c134] : memref<1x16x512xbf16, #tpu.memory_space<vmem>>, vector<1x16x352xbf16>
    %133 = vector.shape_cast %132 : vector<1x16x352xbf16> to vector<16x352xbf16>
    %c704 = arith.constant 704 : index
    %c0_137 = arith.constant 0 : index
    %134 = vector.load %arg5[%c704, %c0_137] : memref<784x352xbf16, #tpu.memory_space<vmem>>, vector<16x352xbf16>
    tpu.vector_store %arg5[%c704, %c0_137], %133 {strides = array<i32>} : memref<784x352xbf16, #tpu.memory_space<vmem>>, vector<16x352xbf16>,
    %c0_138 = arith.constant 0 : index
    %c0_139 = arith.constant 0 : index
    %c135 = arith.constant 135 : index
    %135 = vector.load %arg1[%c0_138, %c0_139, %c135] : memref<1x16x512xbf16, #tpu.memory_space<vmem>>, vector<1x16x352xbf16>
    %136 = vector.shape_cast %135 : vector<1x16x352xbf16> to vector<16x352xbf16>
    %c720 = arith.constant 720 : index
    %c0_140 = arith.constant 0 : index
    %137 = vector.load %arg5[%c720, %c0_140] : memref<784x352xbf16, #tpu.memory_space<vmem>>, vector<16x352xbf16>
    tpu.vector_store %arg5[%c720, %c0_140], %136 {strides = array<i32>} : memref<784x352xbf16, #tpu.memory_space<vmem>>, vector<16x352xbf16>,
    %c0_141 = arith.constant 0 : index
    %c0_142 = arith.constant 0 : index
    %c136 = arith.constant 136 : index
    %138 = vector.load %arg1[%c0_141, %c0_142, %c136] : memref<1x16x512xbf16, #tpu.memory_space<vmem>>, vector<1x16x352xbf16>
    %139 = vector.shape_cast %138 : vector<1x16x352xbf16> to vector<16x352xbf16>
    %c736 = arith.constant 736 : index
    %c0_143 = arith.constant 0 : index
    %140 = vector.load %arg5[%c736, %c0_143] : memref<784x352xbf16, #tpu.memory_space<vmem>>, vector<16x352xbf16>
    tpu.vector_store %arg5[%c736, %c0_143], %139 {strides = array<i32>} : memref<784x352xbf16, #tpu.memory_space<vmem>>, vector<16x352xbf16>,
    %c0_144 = arith.constant 0 : index
    %c0_145 = arith.constant 0 : index
    %c137 = arith.constant 137 : index
    %141 = vector.load %arg1[%c0_144, %c0_145, %c137] : memref<1x16x512xbf16, #tpu.memory_space<vmem>>, vector<1x16x352xbf16>
    %142 = vector.shape_cast %141 : vector<1x16x352xbf16> to vector<16x352xbf16>
    %c752 = arith.constant 752 : index
    %c0_146 = arith.constant 0 : index
    %143 = vector.load %arg5[%c752, %c0_146] : memref<784x352xbf16, #tpu.memory_space<vmem>>, vector<16x352xbf16>
    tpu.vector_store %arg5[%c752, %c0_146], %142 {strides = array<i32>} : memref<784x352xbf16, #tpu.memory_space<vmem>>, vector<16x352xbf16>,
    %c0_147 = arith.constant 0 : index
    %c0_148 = arith.constant 0 : index
    %c138 = arith.constant 138 : index
    %144 = vector.load %arg1[%c0_147, %c0_148, %c138] : memref<1x16x512xbf16, #tpu.memory_space<vmem>>, vector<1x16x352xbf16>
    %145 = vector.shape_cast %144 : vector<1x16x352xbf16> to vector<16x352xbf16>
    %c768 = arith.constant 768 : index
    %c0_149 = arith.constant 0 : index
    %146 = vector.load %arg5[%c768, %c0_149] : memref<784x352xbf16, #tpu.memory_space<vmem>>, vector<16x352xbf16>
    tpu.vector_store %arg5[%c768, %c0_149], %145 {strides = array<i32>} : memref<784x352xbf16, #tpu.memory_space<vmem>>, vector<16x352xbf16>,
    %c0_150 = arith.constant 0 : index
    %c0_151 = arith.constant 0 : index
    %147 = vector.load %arg2[%c0_150, %c0_151] : memref<8x784xbf16, #tpu.memory_space<vmem>>, vector<8x784xbf16>
    %c0_152 = arith.constant 0 : index
    %c0_153 = arith.constant 0 : index
    %148 = vector.load %arg5[%c0_152, %c0_153] : memref<784x352xbf16, #tpu.memory_space<vmem>>, vector<784x352xbf16>
    %cst = arith.constant dense<0.000000e+00> : vector<8x352xf32>
    %149 = tpu.matmul %147, %148, %cst {dimension_numbers = #tpu.dot_dimension_numbers<[1], [0], [0], [1], [0, 0, 1, 1], [], []>} : vector<8x784xbf16>, vector<784x352xbf16>, vector<8x352xf32> -> vector<8x352xf32>
    %cst_154 = arith.constant 0.000000e+00 : f32
    %150 = vector.broadcast %cst_154 : f32 to vector<8x352xf32>
    %151 = arith.maximumf %149, %150 : vector<8x352xf32>
    %c0_155 = arith.constant 0 : index
    %c0_156 = arith.constant 0 : index
    %152 = vector.load %arg3[%c0_155, %c0_156] : memref<352x256xf32, #tpu.memory_space<vmem>>, vector<352x256xf32>
    %cst_157 = arith.constant dense<0.000000e+00> : vector<8x256xf32>
    %153 = tpu.matmul %151, %152, %cst_157 {dimension_numbers = #tpu.dot_dimension_numbers<[1], [0], [0], [1], [0, 0, 1, 1], [], []>} : vector<8x352xf32>, vector<352x256xf32>, vector<8x256xf32> -> vector<8x256xf32>
    %c0_158 = arith.constant 0 : index
    %c0_159 = arith.constant 0 : index
    %c0_160 = arith.constant 0 : index
    %154 = vector.load %arg4[%c0_158, %c0_159, %c0_160] : memref<1x8x256xf32, #tpu.memory_space<vmem>>, vector<1x8x256xf32>
    %155 = vector.shape_cast %154 : vector<1x8x256xf32> to vector<8x256xf32>
    %156 = vector.shape_cast %153 : vector<8x256xf32> to vector<1x8x256xf32>
    tpu.vector_store %arg4[%c0_158, %c0_159, %c0_160], %156 {strides = array<i32>} : memref<1x8x256xf32, #tpu.memory_space<vmem>>, vector<1x8x256xf32>,
    return
  }
  func.func @transform_0(%arg0: i32) -> (i32, i32, i32) {
    %c0_i32 = arith.constant 0 : i32
    %c0_i32_0 = arith.constant 0 : i32
    %c0_i32_1 = arith.constant 0 : i32
    return %arg0, %c0_i32, %c0_i32_0 : i32, i32, i32
  }
  func.func @transform_1(%arg0: i32) -> (i32, i32) {
    %c0_i32 = arith.constant 0 : i32
    %c0_i32_0 = arith.constant 0 : i32
    %c0_i32_1 = arith.constant 0 : i32
    return %c0_i32, %c0_i32_0 : i32, i32
  }
  func.func @transform_2(%arg0: i32) -> (i32, i32) {
    %c0_i32 = arith.constant 0 : i32
    %c0_i32_0 = arith.constant 0 : i32
    %c0_i32_1 = arith.constant 0 : i32
    return %c0_i32, %c0_i32_0 : i32, i32
  }
  func.func @transform_3(%arg0: i32) -> (i32, i32, i32) {
    %c0_i32 = arith.constant 0 : i32
    %c0_i32_0 = arith.constant 0 : i32
    %c0_i32_1 = arith.constant 0 : i32
    return %arg0, %c0_i32, %c0_i32_0 : i32, i32, i32
  }
}

</mosaic_0001>

<llo_original>
// kernel: conv_block.1
$region0: #{conv_block.1}
  #allocation0 [shape = 'u32[]', space=smem, size = 0x4, offset = 0x4, fixed_abs, tag = 'smem constant byte address 0x4 - core index']
  #allocation1 [shape = 'u32[144,128]{1,0:T(1,128)}', space=vmem, size = 0x12000, scoped, tag = 'internal scratch']
  #allocation2 [shape = 'bf16[784,352]{1,0:T(16,128)(2,1)}', space=vmem, size = 0x93000, scoped, tag = 'scratch operand']
  %s0 = inlined_call_operand.vmem [shape: bf16[2,16,512], index: 0, kind: input, shape index: {}]
  %s1 = inlined_call_operand.vmem [shape: bf16[8,784], index: 1, kind: input, shape index: {}]
  %s2 = inlined_call_operand.vmem [shape: f32[352,256], index: 2, kind: input, shape index: {}]
  %s3 = inlined_call_operand.vmem [shape: f32[2,8,256], index: 3, kind: output, shape index: {}]
  %s4 = sld [smem:[#allocation0]]
  $region45: #{conv_block.1} parent=0
    _
  %s6 = ssub.s32 1, %s4
  %s7 = scalar_select 0, %s6, %s4
  loop: start=0, step=1, limit=4
  $region2: #{conv_block.1} parent=0 // loop_pre_header
    _
  $region3: #{conv_block.1} parent=0 // loop_header
    %s9 = sphi 0, %s13
    %p10 = scmp.ge.s32.totalorder %s9, 4
    %s19 = sphi 0, %s21
    %s22 = sphi 0, %s19
    %s23 = sphi 0, %s22
    %s39 = sphi 0, %s23
    %s43 = sphi 0, %s43
    %s45 = sphi 0, %s43
    %s46 = sphi 0, %s45
    %s60 = sphi 0, %s46
    %s64 = sphi 0, %s64
    %s66 = sphi 0, %s64
    %s67 = sphi 0, %s66
    %s81 = sphi 0, %s67
    %s87 = sphi 0, %s89
    %s90 = sphi 0, %s87
    %s91 = sphi 0, %s90
    %s107 = sphi 0, %s91
  $region4: #{conv_block.1} parent=0 // loop_header_branch
    %12 = sbr.rel (%p10) target = $region8
  $region5: #{conv_block.1} parent=0 // loop_body
    %s14 = ssub.s32 %s9, 1
    %s15 = ssub.s32 %s9, 2
    %s16 = sadd.s32 %s9, 1
    %s17 = ssub.s32 %s9, %s16
    %p18 = scmp.eq.s32.totalorder %s17, 0
    %s20 = sadd.s32 %s19, 1
    %s21 = scalar_select %p18, %s19, %s20
    %p24 = pneg %p18
    %p25 = scmp.eq.s32.totalorder %s9, 1
    %p26 = por %p24, %p25
    %p27 = scmp.ne.s32.totalorder %s19, %s22
    %p28 = scmp.eq.s32.totalorder %s9, 0
    %p29 = por %p27, %p28
    %p30 = scmp.ne.s32.totalorder %s19, %s22
    %p31 = scmp.eq.s32.totalorder %s14, 1
    %p32 = por %p30, %p31
    %p33 = scmp.ne.s32.totalorder %s22, %s23
    %p34 = scmp.eq.s32.totalorder %s14, 0
    %p35 = por %p33, %p34
    %p36 = scmp.ne.s32.totalorder %s22, %s23
    %p37 = scmp.eq.s32.totalorder %s15, 1
    %p38 = por %p36, %p37
    %p40 = scmp.ne.s32.totalorder %s23, %s39
    %p41 = scmp.eq.s32.totalorder %s15, 0
    %p42 = por %p40, %p41
    %s44 = sadd.s32 %s43, 1
    %p47 = scmp.eq.s32.totalorder %s9, 1
    %p48 = scmp.ne.s32.totalorder %s43, %s45
    %p49 = scmp.eq.s32.totalorder %s9, 0
    %p50 = por %p48, %p49
    %p51 = scmp.ne.s32.totalorder %s43, %s45
    %p52 = scmp.eq.s32.totalorder %s14, 1
    %p53 = por %p51, %p52
    %p54 = scmp.ne.s32.totalorder %s45, %s46
    %p55 = scmp.eq.s32.totalorder %s14, 0
    %p56 = por %p54, %p55
    %p57 = scmp.ne.s32.totalorder %s45, %s46
    %p58 = scmp.eq.s32.totalorder %s15, 1
    %p59 = por %p57, %p58
    %p61 = scmp.ne.s32.totalorder %s46, %s60
    %p62 = scmp.eq.s32.totalorder %s15, 0
    %p63 = por %p61, %p62
    %s65 = sadd.s32 %s64, 1
    %p68 = scmp.eq.s32.totalorder %s9, 1
    %p69 = scmp.ne.s32.totalorder %s64, %s66
    %p70 = scmp.eq.s32.totalorder %s9, 0
    %p71 = por %p69, %p70
    %p72 = scmp.ne.s32.totalorder %s64, %s66
    %p73 = scmp.eq.s32.totalorder %s14, 1
    %p74 = por %p72, %p73
    %p75 = scmp.ne.s32.totalorder %s66, %s67
    %p76 = scmp.eq.s32.totalorder %s14, 0
    %p77 = por %p75, %p76
    %p78 = scmp.ne.s32.totalorder %s66, %s67
    %p79 = scmp.eq.s32.totalorder %s15, 1
    %p80 = por %p78, %p79
    %p82 = scmp.ne.s32.totalorder %s67, %s81
    %p83 = scmp.eq.s32.totalorder %s15, 0
    %p84 = por %p82, %p83
    %s85 = ssub.s32 %s9, %s16
    %p86 = scmp.eq.s32.totalorder %s85, 0
    %s88 = sadd.s32 %s87, 1
    %s89 = scalar_select %p86, %s87, %s88
    %p92 = pneg %p86
    %p93 = scmp.eq.s32.totalorder %s9, 1
    %p94 = por %p92, %p93
    %p95 = scmp.ne.s32.totalorder %s87, %s90
    %p96 = scmp.eq.s32.totalorder %s9, 0
    %p97 = por %p95, %p96
    %p98 = scmp.ne.s32.totalorder %s87, %s90
    %p99 = scmp.eq.s32.totalorder %s14, 1
    %p100 = por %p98, %p99
    %p101 = scmp.ne.s32.totalorder %s90, %s91
    %p102 = scmp.eq.s32.totalorder %s14, 0
    %p103 = por %p101, %p102
    %p104 = scmp.ne.s32.totalorder %s90, %s91
    %p105 = scmp.eq.s32.totalorder %s15, 1
    %p106 = por %p104, %p105
    %p108 = scmp.ne.s32.totalorder %s91, %s107
    %p109 = scmp.eq.s32.totalorder %s15, 0
    %p110 = por %p108, %p109
    %p111 = scmp.le.s32.totalorder 1, %s9
    %p112 = scmp.lt.s32.totalorder %s9, 3
    %p113 = pnand %p111, %p112
    %p114 = pneg %p113
    // Predicated region
    $region9: #{conv_block.1} parent=5 // pred_check
      _
    $region10: #{conv_block.1} parent=5 // pred_check_branch
      %116 = sbr.rel (%p113) target = $region12
    $region11: #{conv_block.1} parent=5 // pred_region
      %s117 = ssub.s32 %s9, 1
      // Predicated region
      $region13: #{conv_block.1} parent=11 // pred_check
        %p118 = pneg %p56
      $region14: #{conv_block.1} parent=11 // pred_check_branch
        %120 = sbr.rel (%p118) target = $region16
      $region15: #{conv_block.1} parent=11 // pred_region
        _
      $region16: #{conv_block.1} parent=11 // pred_fallthru
        _
      // Predicated region
      $region17: #{conv_block.1} parent=11 // pred_check
        %p121 = pneg %p77
      $region18: #{conv_block.1} parent=11 // pred_check_branch
        %123 = sbr.rel (%p121) target = $region20
      $region19: #{conv_block.1} parent=11 // pred_region
        _
      $region20: #{conv_block.1} parent=11 // pred_fallthru
        _
    $region12: #{conv_block.1} parent=5 // pred_fallthru
      _
    %p124 = scmp.lt.s32.totalorder %s9, 2
    // Predicated region
    $region21: #{conv_block.1} parent=5 // pred_check
      %p125 = pneg %p124
    $region22: #{conv_block.1} parent=5 // pred_check_branch
      %127 = sbr.rel (%p125) target = $region24
    $region23: #{conv_block.1} parent=5 // pred_region
      // Predicated region
      $region25: #{conv_block.1} parent=23 // pred_check
        %p128 = pneg %p29
      $region26: #{conv_block.1} parent=23 // pred_check_branch
        %130 = sbr.rel (%p128) target = $region28
      $region27: #{conv_block.1} parent=23 // pred_region
        %p131 = scmp.lt.s32.totalorder %s9, 1
        %s132 = scalar_select %p131, %s9, 1
        %s133 = smul.addr %s132, 8
        %s134 = smul.addr %s133, 4
        %s135 = scalar_lea.vmem %s0, %s134
      $region28: #{conv_block.1} parent=23 // pred_fallthru
        _
    $region24: #{conv_block.1} parent=5 // pred_fallthru
      _
    %p136 = scmp.le.s32.totalorder 1, %s9
    %p137 = scmp.lt.s32.totalorder %s9, 3
    %p138 = pnand %p136, %p137
    %p139 = pneg %p138
    // Predicated region
    $region29: #{conv_block.1} parent=5 // pred_check
      _
    $region30: #{conv_block.1} parent=5 // pred_check_branch
      %141 = sbr.rel (%p138) target = $region32
    $region31: #{conv_block.1} parent=5 // pred_region
      %s142 = ssub.s32 %s9, 1
      %p143 = scmp.lt.s32.totalorder %s14, 1
      %s144 = scalar_select %p143, %s14, 1
      %s145 = smul.addr %s144, 8
      %s146 = smul.addr %s145, 4
      %s147 = scalar_lea.vmem %s0, %s146
      %p148 = pneg %p35
      %p149 = pneg %p32
      %p150 = pneg %p56
      %p151 = pneg %p53
      %p152 = pneg %p77
      %p153 = pneg %p74
      %p154 = pneg %p103
      %p155 = pneg %p100
      %p156 = scmp.lt.s32.totalorder %s14, 1
      %s157 = scalar_select %p156, %s14, 1
      %s158 = smul.addr %s157, 2
      %s159 = smul.addr %s158, 8
      %s160 = scalar_lea.vmem %s3, %s159
      %p161 = scmp.lt.s32.totalorder %s14, 1
      %s162 = scalar_select %p161, %s14, 1
      %s163 = smul.addr %s162, 8
      %s164 = smul.addr %s163, 4
      %s165 = scalar_lea.vmem %s0, %s164
      %p166 = scmp.lt.s32.totalorder %s14, 1
      %s167 = scalar_select %p166, %s14, 1
      %s168 = smul.addr %s167, 2
      %s169 = smul.addr %s168, 8
      %s170 = scalar_lea.vmem %s3, %s169
      %v172 = vld [vmem:[%s165] sm:$0xff]
      %v173 = vld [vmem:[%s165 + $0x8] sm:$0xf]
      %v174 = vld [vmem:[%s165 + $0x10] sm:$0xff]
      %v175 = vld [vmem:[%s165 + $0x18] sm:$0xf]
      %v180 = vunpack.c.l.b16 %v172
      %v181 = vunpack.c.h.b16 %v172
      %v182 = vunpack.c.l.b16 %v173
      %v183 = vunpack.c.l.b16 %v174
      %v184 = vunpack.c.h.b16 %v174
      %v185 = vunpack.c.l.b16 %v175
      %v186 = vpack.c.b16 %v183, %v180
      %v187 = vpack.c.b16 %v184, %v181
      %v188 = vpack.c.b16 %v185, %v182
      %192 = vst [vmem:[#allocation2] sm:$0xff] %v186
      %193 = vst [vmem:[#allocation2 + $0x8] sm:$0xff] %v187
      %vm194 = vcmask 785408
      %195 = vst.msk [vmem:[#allocation2 + $0x10] sm:$0xff] %vm194, %v188
      %v196 = vld [vmem:[%s165] sm:$0xff]
      %v197 = vld [vmem:[%s165 + $0x8] sm:$0xf]
      %v198 = vld [vmem:[%s165 + $0x10] sm:$0xff]
      %v199 = vld [vmem:[%s165 + $0x18] sm:$0xf]
      %v204 = vunpack.c.l.b16 %v196
      %v205 = vunpack.c.h.b16 %v196
      %v206 = vunpack.c.l.b16 %v197
      %v207 = vunpack.c.l.b16 %v198
      %v208 = vunpack.c.h.b16 %v198
      %v209 = vunpack.c.l.b16 %v199
      %v210 = vpack.c.b16 %v207, %v204
      %v211 = vpack.c.b16 %v208, %v205
      %v212 = vpack.c.b16 %v209, %v206
      %213 = vrot.lane.b32.xlu0 %v210, 127
      %v214 = vpop.permute.xlu0 %213
      %215 = vrot.lane.b32.xlu0 %v211, 127
      %v216 = vpop.permute.xlu0 %215
      %217 = vrot.lane.b32.xlu0 %v212, 127
      %v218 = vpop.permute.xlu0 %217
      %vm219 = vcmask 1039360
      %v220 = vsel %vm219, %v214, %v216
      %v221 = vsel %vm219, %v216, %v218
      %225 = vst [vmem:[#allocation2 + $0x18] sm:$0xff] %v220
      %226 = vst [vmem:[#allocation2 + $0x20] sm:$0xff] %v221
      %227 = vst.msk [vmem:[#allocation2 + $0x28] sm:$0xff] %vm194, %v218
      %v228 = vld [vmem:[%s165] sm:$0xff]
      %v229 = vld [vmem:[%s165 + $0x8] sm:$0xf]
      %v230 = vld [vmem:[%s165 + $0x10] sm:$0xff]
      %v231 = vld [vmem:[%s165 + $0x18] sm:$0xf]
      %v236 = vunpack.c.l.b16 %v228
      %v237 = vunpack.c.h.b16 %v228
      %v238 = vunpack.c.l.b16 %v229
      %v239 = vunpack.c.l.b16 %v230
      %v240 = vunpack.c.h.b16 %v230
      %v241 = vunpack.c.l.b16 %v231
      %v242 = vpack.c.b16 %v239, %v236
      %v243 = vpack.c.b16 %v240, %v237
      %v244 = vpack.c.b16 %v241, %v238
      %245 = vrot.lane.b32.xlu0 %v242, 126
      %v246 = vpop.permute.xlu0 %245
      %247 = vrot.lane.b32.xlu0 %v243, 126
      %v248 = vpop.permute.xlu0 %247
      %249 = vrot.lane.b32.xlu0 %v244, 126
      %v250 = vpop.permute.xlu0 %249
      %vm251 = vcmask 1031168
      %v252 = vsel %vm251, %v246, %v248
      %v253 = vsel %vm251, %v248, %v250
      %257 = vst [vmem:[#allocation2 + $0x30] sm:$0xff] %v252
      %258 = vst [vmem:[#allocation2 + $0x38] sm:$0xff] %v253
      %259 = vst.msk [vmem:[#allocation2 + $0x40] sm:$0xff] %vm194, %v250
      %v260 = vld [vmem:[%s165] sm:$0xff]
      %v261 = vld [vmem:[%s165 + $0x8] sm:$0xf]
      %v262 = vld [vmem:[%s165 + $0x10] sm:$0xff]
      %v263 = vld [vmem:[%s165 + $0x18] sm:$0xf]
      %v268 = vunpack.c.l.b16 %v260
      %v269 = vunpack.c.h.b16 %v260
      %v270 = vunpack.c.l.b16 %v261
      %v271 = vunpack.c.l.b16 %v262
      %v272 = vunpack.c.h.b16 %v262
      %v273 = vunpack.c.l.b16 %v263
      %v274 = vpack.c.b16 %v271, %v268
      %v275 = vpack.c.b16 %v272, %v269
      %v276 = vpack.c.b16 %v273, %v270
      %277 = vrot.lane.b32.xlu0 %v274, 125
      %v278 = vpop.permute.xlu0 %277
      %279 = vrot.lane.b32.xlu0 %v275, 125
      %v280 = vpop.permute.xlu0 %279
      %281 = vrot.lane.b32.xlu0 %v276, 125
      %v282 = vpop.permute.xlu0 %281
      %vm283 = vcmask 1022976
      %v284 = vsel %vm283, %v278, %v280
      %v285 = vsel %vm283, %v280, %v282
      %289 = vst [vmem:[#allocation2 + $0x48] sm:$0xff] %v284
      %290 = vst [vmem:[#allocation2 + $0x50] sm:$0xff] %v285
      %291 = vst.msk [vmem:[#allocation2 + $0x58] sm:$0xff] %vm194, %v282
      %v292 = vld [vmem:[%s165] sm:$0xff]
      %v293 = vld [vmem:[%s165 + $0x8] sm:$0xf]
      %v294 = vld [vmem:[%s165 + $0x10] sm:$0xff]
      %v295 = vld [vmem:[%s165 + $0x18] sm:$0xf]
      %v300 = vunpack.c.l.b16 %v292
      %v301 = vunpack.c.h.b16 %v292
      %v302 = vunpack.c.l.b16 %v293
      %v303 = vunpack.c.l.b16 %v294
      %v304 = vunpack.c.h.b16 %v294
      %v305 = vunpack.c.l.b16 %v295
      %v306 = vpack.c.b16 %v303, %v300
      %v307 = vpack.c.b16 %v304, %v301
      %v308 = vpack.c.b16 %v305, %v302
      %309 = vrot.lane.b32.xlu0 %v306, 124
      %v310 = vpop.permute.xlu0 %309
      %311 = vrot.lane.b32.xlu0 %v307, 124
      %v312 = vpop.permute.xlu0 %311
      %313 = vrot.lane.b32.xlu0 %v308, 124
      %v314 = vpop.permute.xlu0 %313
      %vm315 = vcmask 1014784
      %v316 = vsel %vm315, %v310, %v312
      %v317 = vsel %vm315, %v312, %v314
      %321 = vst [vmem:[#allocation2 + $0x60] sm:$0xff] %v316
      %322 = vst [vmem:[#allocation2 + $0x68] sm:$0xff] %v317
      %323 = vst.msk [vmem:[#allocation2 + $0x70] sm:$0xff] %vm194, %v314
      %v324 = vld [vmem:[%s165] sm:$0xff]
      %v325 = vld [vmem:[%s165 + $0x8] sm:$0xf]
      %v326 = vld [vmem:[%s165 + $0x10] sm:$0xff]
      %v327 = vld [vmem:[%s165 + $0x18] sm:$0xf]
      %v332 = vunpack.c.l.b16 %v324
      %v333 = vunpack.c.h.b16 %v324
      %v334 = vunpack.c.l.b16 %v325
      %v335 = vunpack.c.l.b16 %v326
      %v336 = vunpack.c.h.b16 %v326
      %v337 = vunpack.c.l.b16 %v327
      %v338 = vpack.c.b16 %v335, %v332
      %v339 = vpack.c.b16 %v336, %v333
      %v340 = vpack.c.b16 %v337, %v334
      %341 = vrot.lane.b32.xlu0 %v338, 123
      %v342 = vpop.permute.xlu0 %341
      %343 = vrot.lane.b32.xlu0 %v339, 123
      %v344 = vpop.permute.xlu0 %343
      %345 = vrot.lane.b32.xlu0 %v340, 123
      %v346 = vpop.permute.xlu0 %345
      %vm347 = vcmask 1006592
      %v348 = vsel %vm347, %v342, %v344
      %v349 = vsel %vm347, %v344, %v346
      %353 = vst [vmem:[#allocation2 + $0x78] sm:$0xff] %v348
      %354 = vst [vmem:[#allocation2 + $0x80] sm:$0xff] %v349
      %355 = vst.msk [vmem:[#allocation2 + $0x88] sm:$0xff] %vm194, %v346
      %v356 = vld [vmem:[%s165] sm:$0xff]
      %v357 = vld [vmem:[%s165 + $0x8] sm:$0xf]
      %v358 = vld [vmem:[%s165 + $0x10] sm:$0xff]
      %v359 = vld [vmem:[%s165 + $0x18] sm:$0xf]
      %v364 = vunpack.c.l.b16 %v356
      %v365 = vunpack.c.h.b16 %v356
      %v366 = vunpack.c.l.b16 %v357
      %v367 = vunpack.c.l.b16 %v358
      %v368 = vunpack.c.h.b16 %v358
      %v369 = vunpack.c.l.b16 %v359
      %v370 = vpack.c.b16 %v367, %v364
      %v371 = vpack.c.b16 %v368, %v365
      %v372 = vpack.c.b16 %v369, %v366
      %373 = vrot.lane.b32.xlu0 %v370, 122
      %v374 = vpop.permute.xlu0 %373
      %375 = vrot.lane.b32.xlu0 %v371, 122
      %v376 = vpop.permute.xlu0 %375
      %377 = vrot.lane.b32.xlu0 %v372, 122
      %v378 = vpop.permute.xlu0 %377
      %vm379 = vcmask 998400
      %v380 = vsel %vm379, %v374, %v376
      %v381 = vsel %vm379, %v376, %v378
      %385 = vst [vmem:[#allocation2 + $0x90] sm:$0xff] %v380
      %386 = vst [vmem:[#allocation2 + $0x98] sm:$0xff] %v381
      %387 = vst.msk [vmem:[#allocation2 + $0xa0] sm:$0xff] %vm194, %v378
      %v388 = vld [vmem:[%s165] sm:$0xff]
      %v389 = vld [vmem:[%s165 + $0x8] sm:$0xf]
      %v390 = vld [vmem:[%s165 + $0x10] sm:$0xff]
      %v391 = vld [vmem:[%s165 + $0x18] sm:$0xf]
      %v396 = vunpack.c.l.b16 %v388
      %v397 = vunpack.c.h.b16 %v388
      %v398 = vunpack.c.l.b16 %v389
      %v399 = vunpack.c.l.b16 %v390
      %v400 = vunpack.c.h.b16 %v390
      %v401 = vunpack.c.l.b16 %v391
      %v402 = vpack.c.b16 %v399, %v396
      %v403 = vpack.c.b16 %v400, %v397
      %v404 = vpack.c.b16 %v401, %v398
      %405 = vrot.lane.b32.xlu0 %v402, 106
      %v406 = vpop.permute.xlu0 %405
      %407 = vrot.lane.b32.xlu0 %v403, 106
      %v408 = vpop.permute.xlu0 %407
      %409 = vrot.lane.b32.xlu0 %v404, 106
      %v410 = vpop.permute.xlu0 %409
      %vm411 = vcmask 867328
      %v412 = vsel %vm411, %v406, %v408
      %v413 = vsel %vm411, %v408, %v410
      %417 = vst [vmem:[#allocation2 + $0xa8] sm:$0xff] %v412
      %418 = vst [vmem:[#allocation2 + $0xb0] sm:$0xff] %v413
      %419 = vst.msk [vmem:[#allocation2 + $0xb8] sm:$0xff] %vm194, %v410
      %v420 = vld [vmem:[%s165] sm:$0xff]
      %v421 = vld [vmem:[%s165 + $0x8] sm:$0xf]
      %v422 = vld [vmem:[%s165 + $0x10] sm:$0xff]
      %v423 = vld [vmem:[%s165 + $0x18] sm:$0xf]
      %v428 = vunpack.c.l.b16 %v420
      %v429 = vunpack.c.h.b16 %v420
      %v430 = vunpack.c.l.b16 %v421
      %v431 = vunpack.c.l.b16 %v422
      %v432 = vunpack.c.h.b16 %v422
      %v433 = vunpack.c.l.b16 %v423
      %v434 = vpack.c.b16 %v431, %v428
      %v435 = vpack.c.b16 %v432, %v429
      %v436 = vpack.c.b16 %v433, %v430
      %437 = vrot.lane.b32.xlu0 %v434, 105
      %v438 = vpop.permute.xlu0 %437
      %439 = vrot.lane.b32.xlu0 %v435, 105
      %v440 = vpop.permute.xlu0 %439
      %441 = vrot.lane.b32.xlu0 %v436, 105
      %v442 = vpop.permute.xlu0 %441
      %vm443 = vcmask 859136
      %v444 = vsel %vm443, %v438, %v440
      %v445 = vsel %vm443, %v440, %v442
      %449 = vst [vmem:[#allocation2 + $0xc0] sm:$0xff] %v444
      %450 = vst [vmem:[#allocation2 + $0xc8] sm:$0xff] %v445
      %451 = vst.msk [vmem:[#allocation2 + $0xd0] sm:$0xff] %vm194, %v442
      %v452 = vld [vmem:[%s165] sm:$0xff]
      %v453 = vld [vmem:[%s165 + $0x8] sm:$0xf]
      %v454 = vld [vmem:[%s165 + $0x10] sm:$0xff]
      %v455 = vld [vmem:[%s165 + $0x18] sm:$0xf]
      %v460 = vunpack.c.l.b16 %v452
      %v461 = vunpack.c.h.b16 %v452
      %v462 = vunpack.c.l.b16 %v453
      %v463 = vunpack.c.l.b16 %v454
      %v464 = vunpack.c.h.b16 %v454
      %v465 = vunpack.c.l.b16 %v455
      %v466 = vpack.c.b16 %v463, %v460
      %v467 = vpack.c.b16 %v464, %v461
      %v468 = vpack.c.b16 %v465, %v462
      %469 = vrot.lane.b32.xlu0 %v466, 104
      %v470 = vpop.permute.xlu0 %469
      %471 = vrot.lane.b32.xlu0 %v467, 104
      %v472 = vpop.permute.xlu0 %471
      %473 = vrot.lane.b32.xlu0 %v468, 104
      %v474 = vpop.permute.xlu0 %473
      %vm475 = vcmask 850944
      %v476 = vsel %vm475, %v470, %v472
      %v477 = vsel %vm475, %v472, %v474
      %481 = vst [vmem:[#allocation2 + $0xd8] sm:$0xff] %v476
      %482 = vst [vmem:[#allocation2 + $0xe0] sm:$0xff] %v477
      %483 = vst.msk [vmem:[#allocation2 + $0xe8] sm:$0xff] %vm194, %v474
      %v484 = vld [vmem:[%s165] sm:$0xff]
      %v485 = vld [vmem:[%s165 + $0x8] sm:$0xf]
      %v486 = vld [vmem:[%s165 + $0x10] sm:$0xff]
      %v487 = vld [vmem:[%s165 + $0x18] sm:$0xf]
      %v492 = vunpack.c.l.b16 %v484
      %v493 = vunpack.c.h.b16 %v484
      %v494 = vunpack.c.l.b16 %v485
      %v495 = vunpack.c.l.b16 %v486
      %v496 = vunpack.c.h.b16 %v486
      %v497 = vunpack.c.l.b16 %v487
      %v498 = vpack.c.b16 %v495, %v492
      %v499 = vpack.c.b16 %v496, %v493
      %v500 = vpack.c.b16 %v497, %v494
      %501 = vrot.lane.b32.xlu0 %v498, 103
      %v502 = vpop.permute.xlu0 %501
      %503 = vrot.lane.b32.xlu0 %v499, 103
      %v504 = vpop.permute.xlu0 %503
      %505 = vrot.lane.b32.xlu0 %v500, 103
      %v506 = vpop.permute.xlu0 %505
      %vm507 = vcmask 842752
      %v508 = vsel %vm507, %v502, %v504
      %v509 = vsel %vm507, %v504, %v506
      %513 = vst [vmem:[#allocation2 + $0xf0] sm:$0xff] %v508
      %514 = vst [vmem:[#allocation2 + $0xf8] sm:$0xff] %v509
      %515 = vst.msk [vmem:[#allocation2 + $0x100] sm:$0xff] %vm194, %v506
      %v516 = vld [vmem:[%s165] sm:$0xff]
      %v517 = vld [vmem:[%s165 + $0x8] sm:$0xf]
      %v518 = vld [vmem:[%s165 + $0x10] sm:$0xff]
      %v519 = vld [vmem:[%s165 + $0x18] sm:$0xf]
      %v524 = vunpack.c.l.b16 %v516
      %v525 = vunpack.c.h.b16 %v516
      %v526 = vunpack.c.l.b16 %v517
      %v527 = vunpack.c.l.b16 %v518
      %v528 = vunpack.c.h.b16 %v518
      %v529 = vunpack.c.l.b16 %v519
      %v530 = vpack.c.b16 %v527, %v524
      %v531 = vpack.c.b16 %v528, %v525
      %v532 = vpack.c.b16 %v529, %v526
      %533 = vrot.lane.b32.xlu0 %v530, 102
      %v534 = vpop.permute.xlu0 %533
      %535 = vrot.lane.b32.xlu0 %v531, 102
      %v536 = vpop.permute.xlu0 %535
      %537 = vrot.lane.b32.xlu0 %v532, 102
      %v538 = vpop.permute.xlu0 %537
      %vm539 = vcmask 834560
      %v540 = vsel %vm539, %v534, %v536
      %v541 = vsel %vm539, %v536, %v538
      %545 = vst [vmem:[#allocation2 + $0x108] sm:$0xff] %v540
      %546 = vst [vmem:[#allocation2 + $0x110] sm:$0xff] %v541
      %547 = vst.msk [vmem:[#allocation2 + $0x118] sm:$0xff] %vm194, %v538
      %v548 = vld [vmem:[%s165] sm:$0xff]
      %v549 = vld [vmem:[%s165 + $0x8] sm:$0xf]
      %v550 = vld [vmem:[%s165 + $0x10] sm:$0xff]
      %v551 = vld [vmem:[%s165 + $0x18] sm:$0xf]
      %v556 = vunpack.c.l.b16 %v548
      %v557 = vunpack.c.h.b16 %v548
      %v558 = vunpack.c.l.b16 %v549
      %v559 = vunpack.c.l.b16 %v550
      %v560 = vunpack.c.h.b16 %v550
      %v561 = vunpack.c.l.b16 %v551
      %v562 = vpack.c.b16 %v559, %v556
      %v563 = vpack.c.b16 %v560, %v557
      %v564 = vpack.c.b16 %v561, %v558
      %565 = vrot.lane.b32.xlu0 %v562, 101
      %v566 = vpop.permute.xlu0 %565
      %567 = vrot.lane.b32.xlu0 %v563, 101
      %v568 = vpop.permute.xlu0 %567
      %569 = vrot.lane.b32.xlu0 %v564, 101
      %v570 = vpop.permute.xlu0 %569
      %vm571 = vcmask 826368
      %v572 = vsel %vm571, %v566, %v568
      %v573 = vsel %vm571, %v568, %v570
      %577 = vst [vmem:[#allocation2 + $0x120] sm:$0xff] %v572
      %578 = vst [vmem:[#allocation2 + $0x128] sm:$0xff] %v573
      %579 = vst.msk [vmem:[#allocation2 + $0x130] sm:$0xff] %vm194, %v570
      %v580 = vld [vmem:[%s165] sm:$0xff]
      %v581 = vld [vmem:[%s165 + $0x8] sm:$0xf]
      %v582 = vld [vmem:[%s165 + $0x10] sm:$0xff]
      %v583 = vld [vmem:[%s165 + $0x18] sm:$0xf]
      %v588 = vunpack.c.l.b16 %v580
      %v589 = vunpack.c.h.b16 %v580
      %v590 = vunpack.c.l.b16 %v581
      %v591 = vunpack.c.l.b16 %v582
      %v592 = vunpack.c.h.b16 %v582
      %v593 = vunpack.c.l.b16 %v583
      %v594 = vpack.c.b16 %v591, %v588
      %v595 = vpack.c.b16 %v592, %v589
      %v596 = vpack.c.b16 %v593, %v590
      %597 = vrot.lane.b32.xlu0 %v594, 100
      %v598 = vpop.permute.xlu0 %597
      %599 = vrot.lane.b32.xlu0 %v595, 100
      %v600 = vpop.permute.xlu0 %599
      %601 = vrot.lane.b32.xlu0 %v596, 100
      %v602 = vpop.permute.xlu0 %601
      %vm603 = vcmask 818176
      %v604 = vsel %vm603, %v598, %v600
      %v605 = vsel %vm603, %v600, %v602
      %609 = vst [vmem:[#allocation2 + $0x138] sm:$0xff] %v604
      %610 = vst [vmem:[#allocation2 + $0x140] sm:$0xff] %v605
      %611 = vst.msk [vmem:[#allocation2 + $0x148] sm:$0xff] %vm194, %v602
      %v612 = vld [vmem:[%s165] sm:$0xff]
      %v613 = vld [vmem:[%s165 + $0x8] sm:$0xff]
      %v614 = vld [vmem:[%s165 + $0x10] sm:$0xff]
      %v615 = vld [vmem:[%s165 + $0x18] sm:$0xff]
      %v620 = vunpack.c.l.b16 %v612
      %v621 = vunpack.c.h.b16 %v612
      %v622 = vunpack.c.l.b16 %v613
      %v623 = vunpack.c.h.b16 %v613
      %v624 = vunpack.c.l.b16 %v614
      %v625 = vunpack.c.h.b16 %v614
      %v626 = vunpack.c.l.b16 %v615
      %v627 = vunpack.c.h.b16 %v615
      %v628 = vpack.c.b16 %v624, %v620
      %v629 = vpack.c.b16 %v625, %v621
      %v630 = vpack.c.b16 %v626, %v622
      %v631 = vpack.c.b16 %v627, %v623
      %632 = vrot.lane.b32.xlu0 %v628, 84
      %v633 = vpop.permute.xlu0 %632
      %634 = vrot.lane.b32.xlu0 %v629, 84
      %v635 = vpop.permute.xlu0 %634
      %636 = vrot.lane.b32.xlu0 %v630, 84
      %v637 = vpop.permute.xlu0 %636
      %638 = vrot.lane.b32.xlu0 %v631, 84
      %v639 = vpop.permute.xlu0 %638
      %vm640 = vcmask 687104
      %v641 = vsel %vm640, %v633, %v635
      %v642 = vsel %vm640, %v635, %v637
      %v643 = vsel %vm640, %v637, %v639
      %647 = vst [vmem:[#allocation2 + $0x150] sm:$0xff] %v641
      %648 = vst [vmem:[#allocation2 + $0x158] sm:$0xff] %v642
      %649 = vst.msk [vmem:[#allocation2 + $0x160] sm:$0xff] %vm194, %v643
      %v650 = vld [vmem:[%s165] sm:$0xff]
      %v651 = vld [vmem:[%s165 + $0x8] sm:$0xff]
      %v652 = vld [vmem:[%s165 + $0x10] sm:$0xff]
      %v653 = vld [vmem:[%s165 + $0x18] sm:$0xff]
      %v658 = vunpack.c.l.b16 %v650
      %v659 = vunpack.c.h.b16 %v650
      %v660 = vunpack.c.l.b16 %v651
      %v661 = vunpack.c.h.b16 %v651
      %v662 = vunpack.c.l.b16 %v652
      %v663 = vunpack.c.h.b16 %v652
      %v664 = vunpack.c.l.b16 %v653
      %v665 = vunpack.c.h.b16 %v653
      %v666 = vpack.c.b16 %v662, %v658
      %v667 = vpack.c.b16 %v663, %v659
      %v668 = vpack.c.b16 %v664, %v660
      %v669 = vpack.c.b16 %v665, %v661
      %670 = vrot.lane.b32.xlu0 %v666, 83
      %v671 = vpop.permute.xlu0 %670
      %672 = vrot.lane.b32.xlu0 %v667, 83
      %v673 = vpop.permute.xlu0 %672
      %674 = vrot.lane.b32.xlu0 %v668, 83
      %v675 = vpop.permute.xlu0 %674
      %676 = vrot.lane.b32.xlu0 %v669, 83
      %v677 = vpop.permute.xlu0 %676
      %vm678 = vcmask 678912
      %v679 = vsel %vm678, %v671, %v673
      %v680 = vsel %vm678, %v673, %v675
      %v681 = vsel %vm678, %v675, %v677
      %685 = vst [vmem:[#allocation2 + $0x168] sm:$0xff] %v679
      %686 = vst [vmem:[#allocation2 + $0x170] sm:$0xff] %v680
      %687 = vst.msk [vmem:[#allocation2 + $0x178] sm:$0xff] %vm194, %v681
      %v688 = vld [vmem:[%s165] sm:$0xff]
      %v689 = vld [vmem:[%s165 + $0x8] sm:$0xff]
      %v690 = vld [vmem:[%s165 + $0x10] sm:$0xff]
      %v691 = vld [vmem:[%s165 + $0x18] sm:$0xff]
      %v696 = vunpack.c.l.b16 %v688
      %v697 = vunpack.c.h.b16 %v688
      %v698 = vunpack.c.l.b16 %v689
      %v699 = vunpack.c.h.b16 %v689
      %v700 = vunpack.c.l.b16 %v690
      %v701 = vunpack.c.h.b16 %v690
      %v702 = vunpack.c.l.b16 %v691
      %v703 = vunpack.c.h.b16 %v691
      %v704 = vpack.c.b16 %v700, %v696
      %v705 = vpack.c.b16 %v701, %v697
      %v706 = vpack.c.b16 %v702, %v698
      %v707 = vpack.c.b16 %v703, %v699
      %708 = vrot.lane.b32.xlu0 %v704, 82
      %v709 = vpop.permute.xlu0 %708
      %710 = vrot.lane.b32.xlu0 %v705, 82
      %v711 = vpop.permute.xlu0 %710
      %712 = vrot.lane.b32.xlu0 %v706, 82
      %v713 = vpop.permute.xlu0 %712
      %714 = vrot.lane.b32.xlu0 %v707, 82
      %v715 = vpop.permute.xlu0 %714
      %vm716 = vcmask 670720
      %v717 = vsel %vm716, %v709, %v711
      %v718 = vsel %vm716, %v711, %v713
      %v719 = vsel %vm716, %v713, %v715
      %723 = vst [vmem:[#allocation2 + $0x180] sm:$0xff] %v717
      %724 = vst [vmem:[#allocation2 + $0x188] sm:$0xff] %v718
      %725 = vst.msk [vmem:[#allocation2 + $0x190] sm:$0xff] %vm194, %v719
      %v726 = vld [vmem:[%s165] sm:$0xff]
      %v727 = vld [vmem:[%s165 + $0x8] sm:$0xff]
      %v728 = vld [vmem:[%s165 + $0x10] sm:$0xff]
      %v729 = vld [vmem:[%s165 + $0x18] sm:$0xff]
      %v734 = vunpack.c.l.b16 %v726
      %v735 = vunpack.c.h.b16 %v726
      %v736 = vunpack.c.l.b16 %v727
      %v737 = vunpack.c.h.b16 %v727
      %v738 = vunpack.c.l.b16 %v728
      %v739 = vunpack.c.h.b16 %v728
      %v740 = vunpack.c.l.b16 %v729
      %v741 = vunpack.c.h.b16 %v729
      %v742 = vpack.c.b16 %v738, %v734
      %v743 = vpack.c.b16 %v739, %v735
      %v744 = vpack.c.b16 %v740, %v736
      %v745 = vpack.c.b16 %v741, %v737
      %746 = vrot.lane.b32.xlu0 %v742, 81
      %v747 = vpop.permute.xlu0 %746
      %748 = vrot.lane.b32.xlu0 %v743, 81
      %v749 = vpop.permute.xlu0 %748
      %750 = vrot.lane.b32.xlu0 %v744, 81
      %v751 = vpop.permute.xlu0 %750
      %752 = vrot.lane.b32.xlu0 %v745, 81
      %v753 = vpop.permute.xlu0 %752
      %vm754 = vcmask 662528
      %v755 = vsel %vm754, %v747, %v749
      %v756 = vsel %vm754, %v749, %v751
      %v757 = vsel %vm754, %v751, %v753
      %761 = vst [vmem:[#allocation2 + $0x198] sm:$0xff] %v755
      %762 = vst [vmem:[#allocation2 + $0x1a0] sm:$0xff] %v756
      %763 = vst.msk [vmem:[#allocation2 + $0x1a8] sm:$0xff] %vm194, %v757
      %v764 = vld [vmem:[%s165] sm:$0xff]
      %v765 = vld [vmem:[%s165 + $0x8] sm:$0xff]
      %v766 = vld [vmem:[%s165 + $0x10] sm:$0xff]
      %v767 = vld [vmem:[%s165 + $0x18] sm:$0xff]
      %v772 = vunpack.c.l.b16 %v764
      %v773 = vunpack.c.h.b16 %v764
      %v774 = vunpack.c.l.b16 %v765
      %v775 = vunpack.c.h.b16 %v765
      %v776 = vunpack.c.l.b16 %v766
      %v777 = vunpack.c.h.b16 %v766
      %v778 = vunpack.c.l.b16 %v767
      %v779 = vunpack.c.h.b16 %v767
      %v780 = vpack.c.b16 %v776, %v772
      %v781 = vpack.c.b16 %v777, %v773
      %v782 = vpack.c.b16 %v778, %v774
      %v783 = vpack.c.b16 %v779, %v775
      %784 = vrot.lane.b32.xlu0 %v780, 80
      %v785 = vpop.permute.xlu0 %784
      %786 = vrot.lane.b32.xlu0 %v781, 80
      %v787 = vpop.permute.xlu0 %786
      %788 = vrot.lane.b32.xlu0 %v782, 80
      %v789 = vpop.permute.xlu0 %788
      %790 = vrot.lane.b32.xlu0 %v783, 80
      %v791 = vpop.permute.xlu0 %790
      %vm792 = vcmask 654336
      %v793 = vsel %vm792, %v785, %v787
      %v794 = vsel %vm792, %v787, %v789
      %v795 = vsel %vm792, %v789, %v791
      %799 = vst [vmem:[#allocation2 + $0x1b0] sm:$0xff] %v793
      %800 = vst [vmem:[#allocation2 + $0x1b8] sm:$0xff] %v794
      %801 = vst.msk [vmem:[#allocation2 + $0x1c0] sm:$0xff] %vm194, %v795
      %v802 = vld [vmem:[%s165] sm:$0xff]
      %v803 = vld [vmem:[%s165 + $0x8] sm:$0xff]
      %v804 = vld [vmem:[%s165 + $0x10] sm:$0xff]
      %v805 = vld [vmem:[%s165 + $0x18] sm:$0xff]
      %v810 = vunpack.c.l.b16 %v802
      %v811 = vunpack.c.h.b16 %v802
      %v812 = vunpack.c.l.b16 %v803
      %v813 = vunpack.c.h.b16 %v803
      %v814 = vunpack.c.l.b16 %v804
      %v815 = vunpack.c.h.b16 %v804
      %v816 = vunpack.c.l.b16 %v805
      %v817 = vunpack.c.h.b16 %v805
      %v818 = vpack.c.b16 %v814, %v810
      %v819 = vpack.c.b16 %v815, %v811
      %v820 = vpack.c.b16 %v816, %v812
      %v821 = vpack.c.b16 %v817, %v813
      %822 = vrot.lane.b32.xlu0 %v818, 79
      %v823 = vpop.permute.xlu0 %822
      %824 = vrot.lane.b32.xlu0 %v819, 79
      %v825 = vpop.permute.xlu0 %824
      %826 = vrot.lane.b32.xlu0 %v820, 79
      %v827 = vpop.permute.xlu0 %826
      %828 = vrot.lane.b32.xlu0 %v821, 79
      %v829 = vpop.permute.xlu0 %828
      %vm830 = vcmask 646144
      %v831 = vsel %vm830, %v823, %v825
      %v832 = vsel %vm830, %v825, %v827
      %v833 = vsel %vm830, %v827, %v829
      %837 = vst [vmem:[#allocation2 + $0x1c8] sm:$0xff] %v831
      %838 = vst [vmem:[#allocation2 + $0x1d0] sm:$0xff] %v832
      %839 = vst.msk [vmem:[#allocation2 + $0x1d8] sm:$0xff] %vm194, %v833
      %v840 = vld [vmem:[%s165] sm:$0xff]
      %v841 = vld [vmem:[%s165 + $0x8] sm:$0xff]
      %v842 = vld [vmem:[%s165 + $0x10] sm:$0xff]
      %v843 = vld [vmem:[%s165 + $0x18] sm:$0xff]
      %v848 = vunpack.c.l.b16 %v840
      %v849 = vunpack.c.h.b16 %v840
      %v850 = vunpack.c.l.b16 %v841
      %v851 = vunpack.c.h.b16 %v841
      %v852 = vunpack.c.l.b16 %v842
      %v853 = vunpack.c.h.b16 %v842
      %v854 = vunpack.c.l.b16 %v843
      %v855 = vunpack.c.h.b16 %v843
      %v856 = vpack.c.b16 %v852, %v848
      %v857 = vpack.c.b16 %v853, %v849
      %v858 = vpack.c.b16 %v854, %v850
      %v859 = vpack.c.b16 %v855, %v851
      %860 = vrot.lane.b32.xlu0 %v856, 78
      %v861 = vpop.permute.xlu0 %860
      %862 = vrot.lane.b32.xlu0 %v857, 78
      %v863 = vpop.permute.xlu0 %862
      %864 = vrot.lane.b32.xlu0 %v858, 78
      %v865 = vpop.permute.xlu0 %864
      %866 = vrot.lane.b32.xlu0 %v859, 78
      %v867 = vpop.permute.xlu0 %866
      %vm868 = vcmask 637952
      %v869 = vsel %vm868, %v861, %v863
      %v870 = vsel %vm868, %v863, %v865
      %v871 = vsel %vm868, %v865, %v867
      %875 = vst [vmem:[#allocation2 + $0x1e0] sm:$0xff] %v869
      %876 = vst [vmem:[#allocation2 + $0x1e8] sm:$0xff] %v870
      %877 = vst.msk [vmem:[#allocation2 + $0x1f0] sm:$0xff] %vm194, %v871
      %v878 = vld [vmem:[%s165] sm:$0xff]
      %v879 = vld [vmem:[%s165 + $0x8] sm:$0xff]
      %v880 = vld [vmem:[%s165 + $0x10] sm:$0xff]
      %v881 = vld [vmem:[%s165 + $0x18] sm:$0xff]
      %v886 = vunpack.c.l.b16 %v878
      %v887 = vunpack.c.h.b16 %v878
      %v888 = vunpack.c.l.b16 %v879
      %v889 = vunpack.c.h.b16 %v879
      %v890 = vunpack.c.l.b16 %v880
      %v891 = vunpack.c.h.b16 %v880
      %v892 = vunpack.c.l.b16 %v881
      %v893 = vunpack.c.h.b16 %v881
      %v894 = vpack.c.b16 %v890, %v886
      %v895 = vpack.c.b16 %v891, %v887
      %v896 = vpack.c.b16 %v892, %v888
      %v897 = vpack.c.b16 %v893, %v889
      %898 = vrot.lane.b32.xlu0 %v894, 62
      %v899 = vpop.permute.xlu0 %898
      %900 = vrot.lane.b32.xlu0 %v895, 62
      %v901 = vpop.permute.xlu0 %900
      %902 = vrot.lane.b32.xlu0 %v896, 62
      %v903 = vpop.permute.xlu0 %902
      %904 = vrot.lane.b32.xlu0 %v897, 62
      %v905 = vpop.permute.xlu0 %904
      %vm906 = vcmask 506880
      %v907 = vsel %vm906, %v899, %v901
      %v908 = vsel %vm906, %v901, %v903
      %v909 = vsel %vm906, %v903, %v905
      %913 = vst [vmem:[#allocation2 + $0x1f8] sm:$0xff] %v907
      %914 = vst [vmem:[#allocation2 + $0x200] sm:$0xff] %v908
      %915 = vst.msk [vmem:[#allocation2 + $0x208] sm:$0xff] %vm194, %v909
      %v916 = vld [vmem:[%s165] sm:$0xff]
      %v917 = vld [vmem:[%s165 + $0x8] sm:$0xff]
      %v918 = vld [vmem:[%s165 + $0x10] sm:$0xff]
      %v919 = vld [vmem:[%s165 + $0x18] sm:$0xff]
      %v924 = vunpack.c.l.b16 %v916
      %v925 = vunpack.c.h.b16 %v916
      %v926 = vunpack.c.l.b16 %v917
      %v927 = vunpack.c.h.b16 %v917
      %v928 = vunpack.c.l.b16 %v918
      %v929 = vunpack.c.h.b16 %v918
      %v930 = vunpack.c.l.b16 %v919
      %v931 = vunpack.c.h.b16 %v919
      %v932 = vpack.c.b16 %v928, %v924
      %v933 = vpack.c.b16 %v929, %v925
      %v934 = vpack.c.b16 %v930, %v926
      %v935 = vpack.c.b16 %v931, %v927
      %936 = vrot.lane.b32.xlu0 %v932, 61
      %v937 = vpop.permute.xlu0 %936
      %938 = vrot.lane.b32.xlu0 %v933, 61
      %v939 = vpop.permute.xlu0 %938
      %940 = vrot.lane.b32.xlu0 %v934, 61
      %v941 = vpop.permute.xlu0 %940
      %942 = vrot.lane.b32.xlu0 %v935, 61
      %v943 = vpop.permute.xlu0 %942
      %vm944 = vcmask 498688
      %v945 = vsel %vm944, %v937, %v939
      %v946 = vsel %vm944, %v939, %v941
      %v947 = vsel %vm944, %v941, %v943
      %951 = vst [vmem:[#allocation2 + $0x210] sm:$0xff] %v945
      %952 = vst [vmem:[#allocation2 + $0x218] sm:$0xff] %v946
      %953 = vst.msk [vmem:[#allocation2 + $0x220] sm:$0xff] %vm194, %v947
      %v954 = vld [vmem:[%s165] sm:$0xff]
      %v955 = vld [vmem:[%s165 + $0x8] sm:$0xff]
      %v956 = vld [vmem:[%s165 + $0x10] sm:$0xff]
      %v957 = vld [vmem:[%s165 + $0x18] sm:$0xff]
      %v962 = vunpack.c.l.b16 %v954
      %v963 = vunpack.c.h.b16 %v954
      %v964 = vunpack.c.l.b16 %v955
      %v965 = vunpack.c.h.b16 %v955
      %v966 = vunpack.c.l.b16 %v956
      %v967 = vunpack.c.h.b16 %v956
      %v968 = vunpack.c.l.b16 %v957
      %v969 = vunpack.c.h.b16 %v957
      %v970 = vpack.c.b16 %v966, %v962
      %v971 = vpack.c.b16 %v967, %v963
      %v972 = vpack.c.b16 %v968, %v964
      %v973 = vpack.c.b16 %v969, %v965
      %974 = vrot.lane.b32.xlu0 %v970, 60
      %v975 = vpop.permute.xlu0 %974
      %976 = vrot.lane.b32.xlu0 %v971, 60
      %v977 = vpop.permute.xlu0 %976
      %978 = vrot.lane.b32.xlu0 %v972, 60
      %v979 = vpop.permute.xlu0 %978
      %980 = vrot.lane.b32.xlu0 %v973, 60
      %v981 = vpop.permute.xlu0 %980
      %vm982 = vcmask 490496
      %v983 = vsel %vm982, %v975, %v977
      %v984 = vsel %vm982, %v977, %v979
      %v985 = vsel %vm982, %v979, %v981
      %989 = vst [vmem:[#allocation2 + $0x228] sm:$0xff] %v983
      %990 = vst [vmem:[#allocation2 + $0x230] sm:$0xff] %v984
      %991 = vst.msk [vmem:[#allocation2 + $0x238] sm:$0xff] %vm194, %v985
      %v992 = vld [vmem:[%s165] sm:$0xff]
      %v993 = vld [vmem:[%s165 + $0x8] sm:$0xff]
      %v994 = vld [vmem:[%s165 + $0x10] sm:$0xff]
      %v995 = vld [vmem:[%s165 + $0x18] sm:$0xff]
      %v1000 = vunpack.c.l.b16 %v992
      %v1001 = vunpack.c.h.b16 %v992
      %v1002 = vunpack.c.l.b16 %v993
      %v1003 = vunpack.c.h.b16 %v993
      %v1004 = vunpack.c.l.b16 %v994
      %v1005 = vunpack.c.h.b16 %v994
      %v1006 = vunpack.c.l.b16 %v995
      %v1007 = vunpack.c.h.b16 %v995
      %v1008 = vpack.c.b16 %v1004, %v1000
      %v1009 = vpack.c.b16 %v1005, %v1001
      %v1010 = vpack.c.b16 %v1006, %v1002
      %v1011 = vpack.c.b16 %v1007, %v1003
      %1012 = vrot.lane.b32.xlu0 %v1008, 59
      %v1013 = vpop.permute.xlu0 %1012
      %1014 = vrot.lane.b32.xlu0 %v1009, 59
      %v1015 = vpop.permute.xlu0 %1014
      %1016 = vrot.lane.b32.xlu0 %v1010, 59
      %v1017 = vpop.permute.xlu0 %1016
      %1018 = vrot.lane.b32.xlu0 %v1011, 59
      %v1019 = vpop.permute.xlu0 %1018
      %vm1020 = vcmask 482304
      %v1021 = vsel %vm1020, %v1013, %v1015
      %v1022 = vsel %vm1020, %v1015, %v1017
      %v1023 = vsel %vm1020, %v1017, %v1019
      %1027 = vst [vmem:[#allocation2 + $0x240] sm:$0xff] %v1021
      %1028 = vst [vmem:[#allocation2 + $0x248] sm:$0xff] %v1022
      %1029 = vst.msk [vmem:[#allocation2 + $0x250] sm:$0xff] %vm194, %v1023
      %v1030 = vld [vmem:[%s165] sm:$0xff]
      %v1031 = vld [vmem:[%s165 + $0x8] sm:$0xff]
      %v1032 = vld [vmem:[%s165 + $0x10] sm:$0xff]
      %v1033 = vld [vmem:[%s165 + $0x18] sm:$0xff]
      %v1038 = vunpack.c.l.b16 %v1030
      %v1039 = vunpack.c.h.b16 %v1030
      %v1040 = vunpack.c.l.b16 %v1031
      %v1041 = vunpack.c.h.b16 %v1031
      %v1042 = vunpack.c.l.b16 %v1032
      %v1043 = vunpack.c.h.b16 %v1032
      %v1044 = vunpack.c.l.b16 %v1033
      %v1045 = vunpack.c.h.b16 %v1033
      %v1046 = vpack.c.b16 %v1042, %v1038
      %v1047 = vpack.c.b16 %v1043, %v1039
      %v1048 = vpack.c.b16 %v1044, %v1040
      %v1049 = vpack.c.b16 %v1045, %v1041
      %1050 = vrot.lane.b32.xlu0 %v1046, 58
      %v1051 = vpop.permute.xlu0 %1050
      %1052 = vrot.lane.b32.xlu0 %v1047, 58
      %v1053 = vpop.permute.xlu0 %1052
      %1054 = vrot.lane.b32.xlu0 %v1048, 58
      %v1055 = vpop.permute.xlu0 %1054
      %1056 = vrot.lane.b32.xlu0 %v1049, 58
      %v1057 = vpop.permute.xlu0 %1056
      %vm1058 = vcmask 474112
      %v1059 = vsel %vm1058, %v1051, %v1053
      %v1060 = vsel %vm1058, %v1053, %v1055
      %v1061 = vsel %vm1058, %v1055, %v1057
      %1065 = vst [vmem:[#allocation2 + $0x258] sm:$0xff] %v1059
      %1066 = vst [vmem:[#allocation2 + $0x260] sm:$0xff] %v1060
      %1067 = vst.msk [vmem:[#allocation2 + $0x268] sm:$0xff] %vm194, %v1061
      %v1068 = vld [vmem:[%s165] sm:$0xff]
      %v1069 = vld [vmem:[%s165 + $0x8] sm:$0xff]
      %v1070 = vld [vmem:[%s165 + $0x10] sm:$0xff]
      %v1071 = vld [vmem:[%s165 + $0x18] sm:$0xff]
      %v1076 = vunpack.c.l.b16 %v1068
      %v1077 = vunpack.c.h.b16 %v1068
      %v1078 = vunpack.c.l.b16 %v1069
      %v1079 = vunpack.c.h.b16 %v1069
      %v1080 = vunpack.c.l.b16 %v1070
      %v1081 = vunpack.c.h.b16 %v1070
      %v1082 = vunpack.c.l.b16 %v1071
      %v1083 = vunpack.c.h.b16 %v1071
      %v1084 = vpack.c.b16 %v1080, %v1076
      %v1085 = vpack.c.b16 %v1081, %v1077
      %v1086 = vpack.c.b16 %v1082, %v1078
      %v1087 = vpack.c.b16 %v1083, %v1079
      %1088 = vrot.lane.b32.xlu0 %v1084, 57
      %v1089 = vpop.permute.xlu0 %1088
      %1090 = vrot.lane.b32.xlu0 %v1085, 57
      %v1091 = vpop.permute.xlu0 %1090
      %1092 = vrot.lane.b32.xlu0 %v1086, 57
      %v1093 = vpop.permute.xlu0 %1092
      %1094 = vrot.lane.b32.xlu0 %v1087, 57
      %v1095 = vpop.permute.xlu0 %1094
      %vm1096 = vcmask 465920
      %v1097 = vsel %vm1096, %v1089, %v1091
      %v1098 = vsel %vm1096, %v1091, %v1093
      %v1099 = vsel %vm1096, %v1093, %v1095
      %1103 = vst [vmem:[#allocation2 + $0x270] sm:$0xff] %v1097
      %1104 = vst [vmem:[#allocation2 + $0x278] sm:$0xff] %v1098
      %1105 = vst.msk [vmem:[#allocation2 + $0x280] sm:$0xff] %vm194, %v1099
      %v1106 = vld [vmem:[%s165] sm:$0xff]
      %v1107 = vld [vmem:[%s165 + $0x8] sm:$0xff]
      %v1108 = vld [vmem:[%s165 + $0x10] sm:$0xff]
      %v1109 = vld [vmem:[%s165 + $0x18] sm:$0xff]
      %v1114 = vunpack.c.l.b16 %v1106
      %v1115 = vunpack.c.h.b16 %v1106
      %v1116 = vunpack.c.l.b16 %v1107
      %v1117 = vunpack.c.h.b16 %v1107
      %v1118 = vunpack.c.l.b16 %v1108
      %v1119 = vunpack.c.h.b16 %v1108
      %v1120 = vunpack.c.l.b16 %v1109
      %v1121 = vunpack.c.h.b16 %v1109
      %v1122 = vpack.c.b16 %v1118, %v1114
      %v1123 = vpack.c.b16 %v1119, %v1115
      %v1124 = vpack.c.b16 %v1120, %v1116
      %v1125 = vpack.c.b16 %v1121, %v1117
      %1126 = vrot.lane.b32.xlu0 %v1122, 56
      %v1127 = vpop.permute.xlu0 %1126
      %1128 = vrot.lane.b32.xlu0 %v1123, 56
      %v1129 = vpop.permute.xlu0 %1128
      %1130 = vrot.lane.b32.xlu0 %v1124, 56
      %v1131 = vpop.permute.xlu0 %1130
      %1132 = vrot.lane.b32.xlu0 %v1125, 56
      %v1133 = vpop.permute.xlu0 %1132
      %vm1134 = vcmask 457728
      %v1135 = vsel %vm1134, %v1127, %v1129
      %v1136 = vsel %vm1134, %v1129, %v1131
      %v1137 = vsel %vm1134, %v1131, %v1133
      %1141 = vst [vmem:[#allocation2 + $0x288] sm:$0xff] %v1135
      %1142 = vst [vmem:[#allocation2 + $0x290] sm:$0xff] %v1136
      %1143 = vst.msk [vmem:[#allocation2 + $0x298] sm:$0xff] %vm194, %v1137
      %v1144 = vld [vmem:[%s165] sm:$0xff]
      %v1145 = vld [vmem:[%s165 + $0x8] sm:$0xff]
      %v1146 = vld [vmem:[%s165 + $0x10] sm:$0xff]
      %v1147 = vld [vmem:[%s165 + $0x18] sm:$0xff]
      %v1152 = vunpack.c.l.b16 %v1144
      %v1153 = vunpack.c.h.b16 %v1144
      %v1154 = vunpack.c.l.b16 %v1145
      %v1155 = vunpack.c.h.b16 %v1145
      %v1156 = vunpack.c.l.b16 %v1146
      %v1157 = vunpack.c.h.b16 %v1146
      %v1158 = vunpack.c.l.b16 %v1147
      %v1159 = vunpack.c.h.b16 %v1147
      %v1160 = vpack.c.b16 %v1156, %v1152
      %v1161 = vpack.c.b16 %v1157, %v1153
      %v1162 = vpack.c.b16 %v1158, %v1154
      %v1163 = vpack.c.b16 %v1159, %v1155
      %1164 = vrot.lane.b32.xlu0 %v1160, 40
      %v1165 = vpop.permute.xlu0 %1164
      %1166 = vrot.lane.b32.xlu0 %v1161, 40
      %v1167 = vpop.permute.xlu0 %1166
      %1168 = vrot.lane.b32.xlu0 %v1162, 40
      %v1169 = vpop.permute.xlu0 %1168
      %1170 = vrot.lane.b32.xlu0 %v1163, 40
      %v1171 = vpop.permute.xlu0 %1170
      %vm1172 = vcmask 326656
      %v1173 = vsel %vm1172, %v1165, %v1167
      %v1174 = vsel %vm1172, %v1167, %v1169
      %v1175 = vsel %vm1172, %v1169, %v1171
      %1179 = vst [vmem:[#allocation2 + $0x2a0] sm:$0xff] %v1173
      %1180 = vst [vmem:[#allocation2 + $0x2a8] sm:$0xff] %v1174
      %1181 = vst.msk [vmem:[#allocation2 + $0x2b0] sm:$0xff] %vm194, %v1175
      %v1182 = vld [vmem:[%s165] sm:$0xff]
      %v1183 = vld [vmem:[%s165 + $0x8] sm:$0xff]
      %v1184 = vld [vmem:[%s165 + $0x10] sm:$0xff]
      %v1185 = vld [vmem:[%s165 + $0x18] sm:$0xff]
      %v1190 = vunpack.c.l.b16 %v1182
      %v1191 = vunpack.c.h.b16 %v1182
      %v1192 = vunpack.c.l.b16 %v1183
      %v1193 = vunpack.c.h.b16 %v1183
      %v1194 = vunpack.c.l.b16 %v1184
      %v1195 = vunpack.c.h.b16 %v1184
      %v1196 = vunpack.c.l.b16 %v1185
      %v1197 = vunpack.c.h.b16 %v1185
      %v1198 = vpack.c.b16 %v1194, %v1190
      %v1199 = vpack.c.b16 %v1195, %v1191
      %v1200 = vpack.c.b16 %v1196, %v1192
      %v1201 = vpack.c.b16 %v1197, %v1193
      %1202 = vrot.lane.b32.xlu0 %v1198, 39
      %v1203 = vpop.permute.xlu0 %1202
      %1204 = vrot.lane.b32.xlu0 %v1199, 39
      %v1205 = vpop.permute.xlu0 %1204
      %1206 = vrot.lane.b32.xlu0 %v1200, 39
      %v1207 = vpop.permute.xlu0 %1206
      %1208 = vrot.lane.b32.xlu0 %v1201, 39
      %v1209 = vpop.permute.xlu0 %1208
      %vm1210 = vcmask 318464
      %v1211 = vsel %vm1210, %v1203, %v1205
      %v1212 = vsel %vm1210, %v1205, %v1207
      %v1213 = vsel %vm1210, %v1207, %v1209
      %1217 = vst [vmem:[#allocation2 + $0x2b8] sm:$0xff] %v1211
      %1218 = vst [vmem:[#allocation2 + $0x2c0] sm:$0xff] %v1212
      %1219 = vst.msk [vmem:[#allocation2 + $0x2c8] sm:$0xff] %vm194, %v1213
      %v1220 = vld [vmem:[%s165] sm:$0xff]
      %v1221 = vld [vmem:[%s165 + $0x8] sm:$0xff]
      %v1222 = vld [vmem:[%s165 + $0x10] sm:$0xff]
      %v1223 = vld [vmem:[%s165 + $0x18] sm:$0xff]
      %v1228 = vunpack.c.l.b16 %v1220
      %v1229 = vunpack.c.h.b16 %v1220
      %v1230 = vunpack.c.l.b16 %v1221
      %v1231 = vunpack.c.h.b16 %v1221
      %v1232 = vunpack.c.l.b16 %v1222
      %v1233 = vunpack.c.h.b16 %v1222
      %v1234 = vunpack.c.l.b16 %v1223
      %v1235 = vunpack.c.h.b16 %v1223
      %v1236 = vpack.c.b16 %v1232, %v1228
      %v1237 = vpack.c.b16 %v1233, %v1229
      %v1238 = vpack.c.b16 %v1234, %v1230
      %v1239 = vpack.c.b16 %v1235, %v1231
      %1240 = vrot.lane.b32.xlu0 %v1236, 38
      %v1241 = vpop.permute.xlu0 %1240
      %1242 = vrot.lane.b32.xlu0 %v1237, 38
      %v1243 = vpop.permute.xlu0 %1242
      %1244 = vrot.lane.b32.xlu0 %v1238, 38
      %v1245 = vpop.permute.xlu0 %1244
      %1246 = vrot.lane.b32.xlu0 %v1239, 38
      %v1247 = vpop.permute.xlu0 %1246
      %vm1248 = vcmask 310272
      %v1249 = vsel %vm1248, %v1241, %v1243
      %v1250 = vsel %vm1248, %v1243, %v1245
      %v1251 = vsel %vm1248, %v1245, %v1247
      %1255 = vst [vmem:[#allocation2 + $0x2d0] sm:$0xff] %v1249
      %1256 = vst [vmem:[#allocation2 + $0x2d8] sm:$0xff] %v1250
      %1257 = vst.msk [vmem:[#allocation2 + $0x2e0] sm:$0xff] %vm194, %v1251
      %v1258 = vld [vmem:[%s165] sm:$0xff]
      %v1259 = vld [vmem:[%s165 + $0x8] sm:$0xff]
      %v1260 = vld [vmem:[%s165 + $0x10] sm:$0xff]
      %v1261 = vld [vmem:[%s165 + $0x18] sm:$0xff]
      %v1266 = vunpack.c.l.b16 %v1258
      %v1267 = vunpack.c.h.b16 %v1258
      %v1268 = vunpack.c.l.b16 %v1259
      %v1269 = vunpack.c.h.b16 %v1259
      %v1270 = vunpack.c.l.b16 %v1260
      %v1271 = vunpack.c.h.b16 %v1260
      %v1272 = vunpack.c.l.b16 %v1261
      %v1273 = vunpack.c.h.b16 %v1261
      %v1274 = vpack.c.b16 %v1270, %v1266
      %v1275 = vpack.c.b16 %v1271, %v1267
      %v1276 = vpack.c.b16 %v1272, %v1268
      %v1277 = vpack.c.b16 %v1273, %v1269
      %1278 = vrot.lane.b32.xlu0 %v1274, 37
      %v1279 = vpop.permute.xlu0 %1278
      %1280 = vrot.lane.b32.xlu0 %v1275, 37
      %v1281 = vpop.permute.xlu0 %1280
      %1282 = vrot.lane.b32.xlu0 %v1276, 37
      %v1283 = vpop.permute.xlu0 %1282
      %1284 = vrot.lane.b32.xlu0 %v1277, 37
      %v1285 = vpop.permute.xlu0 %1284
      %vm1286 = vcmask 302080
      %v1287 = vsel %vm1286, %v1279, %v1281
      %v1288 = vsel %vm1286, %v1281, %v1283
      %v1289 = vsel %vm1286, %v1283, %v1285
      %1293 = vst [vmem:[#allocation2 + $0x2e8] sm:$0xff] %v1287
      %1294 = vst [vmem:[#allocation2 + $0x2f0] sm:$0xff] %v1288
      %1295 = vst.msk [vmem:[#allocation2 + $0x2f8] sm:$0xff] %vm194, %v1289
      %v1296 = vld [vmem:[%s165] sm:$0xff]
      %v1297 = vld [vmem:[%s165 + $0x8] sm:$0xff]
      %v1298 = vld [vmem:[%s165 + $0x10] sm:$0xff]
      %v1299 = vld [vmem:[%s165 + $0x18] sm:$0xff]
      %v1304 = vunpack.c.l.b16 %v1296
      %v1305 = vunpack.c.h.b16 %v1296
      %v1306 = vunpack.c.l.b16 %v1297
      %v1307 = vunpack.c.h.b16 %v1297
      %v1308 = vunpack.c.l.b16 %v1298
      %v1309 = vunpack.c.h.b16 %v1298
      %v1310 = vunpack.c.l.b16 %v1299
      %v1311 = vunpack.c.h.b16 %v1299
      %v1312 = vpack.c.b16 %v1308, %v1304
      %v1313 = vpack.c.b16 %v1309, %v1305
      %v1314 = vpack.c.b16 %v1310, %v1306
      %v1315 = vpack.c.b16 %v1311, %v1307
      %1316 = vrot.lane.b32.xlu0 %v1312, 36
      %v1317 = vpop.permute.xlu0 %1316
      %1318 = vrot.lane.b32.xlu0 %v1313, 36
      %v1319 = vpop.permute.xlu0 %1318
      %1320 = vrot.lane.b32.xlu0 %v1314, 36
      %v1321 = vpop.permute.xlu0 %1320
      %1322 = vrot.lane.b32.xlu0 %v1315, 36
      %v1323 = vpop.permute.xlu0 %1322
      %vm1324 = vcmask 293888
      %v1325 = vsel %vm1324, %v1317, %v1319
      %v1326 = vsel %vm1324, %v1319, %v1321
      %v1327 = vsel %vm1324, %v1321, %v1323
      %1331 = vst [vmem:[#allocation2 + $0x300] sm:$0xff] %v1325
      %1332 = vst [vmem:[#allocation2 + $0x308] sm:$0xff] %v1326
      %1333 = vst.msk [vmem:[#allocation2 + $0x310] sm:$0xff] %vm194, %v1327
      %v1334 = vld [vmem:[%s165] sm:$0xff]
      %v1335 = vld [vmem:[%s165 + $0x8] sm:$0xff]
      %v1336 = vld [vmem:[%s165 + $0x10] sm:$0xff]
      %v1337 = vld [vmem:[%s165 + $0x18] sm:$0xff]
      %v1342 = vunpack.c.l.b16 %v1334
      %v1343 = vunpack.c.h.b16 %v1334
      %v1344 = vunpack.c.l.b16 %v1335
      %v1345 = vunpack.c.h.b16 %v1335
      %v1346 = vunpack.c.l.b16 %v1336
      %v1347 = vunpack.c.h.b16 %v1336
      %v1348 = vunpack.c.l.b16 %v1337
      %v1349 = vunpack.c.h.b16 %v1337
      %v1350 = vpack.c.b16 %v1346, %v1342
      %v1351 = vpack.c.b16 %v1347, %v1343
      %v1352 = vpack.c.b16 %v1348, %v1344
      %v1353 = vpack.c.b16 %v1349, %v1345
      %1354 = vrot.lane.b32.xlu0 %v1350, 35
      %v1355 = vpop.permute.xlu0 %1354
      %1356 = vrot.lane.b32.xlu0 %v1351, 35
      %v1357 = vpop.permute.xlu0 %1356
      %1358 = vrot.lane.b32.xlu0 %v1352, 35
      %v1359 = vpop.permute.xlu0 %1358
      %1360 = vrot.lane.b32.xlu0 %v1353, 35
      %v1361 = vpop.permute.xlu0 %1360
      %vm1362 = vcmask 285696
      %v1363 = vsel %vm1362, %v1355, %v1357
      %v1364 = vsel %vm1362, %v1357, %v1359
      %v1365 = vsel %vm1362, %v1359, %v1361
      %1369 = vst [vmem:[#allocation2 + $0x318] sm:$0xff] %v1363
      %1370 = vst [vmem:[#allocation2 + $0x320] sm:$0xff] %v1364
      %1371 = vst.msk [vmem:[#allocation2 + $0x328] sm:$0xff] %vm194, %v1365
      %v1372 = vld [vmem:[%s165] sm:$0xff]
      %v1373 = vld [vmem:[%s165 + $0x8] sm:$0xff]
      %v1374 = vld [vmem:[%s165 + $0x10] sm:$0xff]
      %v1375 = vld [vmem:[%s165 + $0x18] sm:$0xff]
      %v1380 = vunpack.c.l.b16 %v1372
      %v1381 = vunpack.c.h.b16 %v1372
      %v1382 = vunpack.c.l.b16 %v1373
      %v1383 = vunpack.c.h.b16 %v1373
      %v1384 = vunpack.c.l.b16 %v1374
      %v1385 = vunpack.c.h.b16 %v1374
      %v1386 = vunpack.c.l.b16 %v1375
      %v1387 = vunpack.c.h.b16 %v1375
      %v1388 = vpack.c.b16 %v1384, %v1380
      %v1389 = vpack.c.b16 %v1385, %v1381
      %v1390 = vpack.c.b16 %v1386, %v1382
      %v1391 = vpack.c.b16 %v1387, %v1383
      %1392 = vrot.lane.b32.xlu0 %v1388, 34
      %v1393 = vpop.permute.xlu0 %1392
      %1394 = vrot.lane.b32.xlu0 %v1389, 34
      %v1395 = vpop.permute.xlu0 %1394
      %1396 = vrot.lane.b32.xlu0 %v1390, 34
      %v1397 = vpop.permute.xlu0 %1396
      %1398 = vrot.lane.b32.xlu0 %v1391, 34
      %v1399 = vpop.permute.xlu0 %1398
      %vm1400 = vcmask 277504
      %v1401 = vsel %vm1400, %v1393, %v1395
      %v1402 = vsel %vm1400, %v1395, %v1397
      %v1403 = vsel %vm1400, %v1397, %v1399
      %1407 = vst [vmem:[#allocation2 + $0x330] sm:$0xff] %v1401
      %1408 = vst [vmem:[#allocation2 + $0x338] sm:$0xff] %v1402
      %1409 = vst.msk [vmem:[#allocation2 + $0x340] sm:$0xff] %vm194, %v1403
      %v1410 = vld [vmem:[%s165] sm:$0xff]
      %v1411 = vld [vmem:[%s165 + $0x8] sm:$0xff]
      %v1412 = vld [vmem:[%s165 + $0x10] sm:$0xff]
      %v1413 = vld [vmem:[%s165 + $0x18] sm:$0xff]
      %v1418 = vunpack.c.l.b16 %v1410
      %v1419 = vunpack.c.h.b16 %v1410
      %v1420 = vunpack.c.l.b16 %v1411
      %v1421 = vunpack.c.h.b16 %v1411
      %v1422 = vunpack.c.l.b16 %v1412
      %v1423 = vunpack.c.h.b16 %v1412
      %v1424 = vunpack.c.l.b16 %v1413
      %v1425 = vunpack.c.h.b16 %v1413
      %v1426 = vpack.c.b16 %v1422, %v1418
      %v1427 = vpack.c.b16 %v1423, %v1419
      %v1428 = vpack.c.b16 %v1424, %v1420
      %v1429 = vpack.c.b16 %v1425, %v1421
      %1430 = vrot.lane.b32.xlu0 %v1426, 18
      %v1431 = vpop.permute.xlu0 %1430
      %1432 = vrot.lane.b32.xlu0 %v1427, 18
      %v1433 = vpop.permute.xlu0 %1432
      %1434 = vrot.lane.b32.xlu0 %v1428, 18
      %v1435 = vpop.permute.xlu0 %1434
      %1436 = vrot.lane.b32.xlu0 %v1429, 18
      %v1437 = vpop.permute.xlu0 %1436
      %vm1438 = vcmask 146432
      %v1439 = vsel %vm1438, %v1431, %v1433
      %v1440 = vsel %vm1438, %v1433, %v1435
      %v1441 = vsel %vm1438, %v1435, %v1437
      %1445 = vst [vmem:[#allocation2 + $0x348] sm:$0xff] %v1439
      %1446 = vst [vmem:[#allocation2 + $0x350] sm:$0xff] %v1440
      %1447 = vst.msk [vmem:[#allocation2 + $0x358] sm:$0xff] %vm194, %v1441
      %v1448 = vld [vmem:[%s165] sm:$0xff]
      %v1449 = vld [vmem:[%s165 + $0x8] sm:$0xff]
      %v1450 = vld [vmem:[%s165 + $0x10] sm:$0xff]
      %v1451 = vld [vmem:[%s165 + $0x18] sm:$0xff]
      %v1456 = vunpack.c.l.b16 %v1448
      %v1457 = vunpack.c.h.b16 %v1448
      %v1458 = vunpack.c.l.b16 %v1449
      %v1459 = vunpack.c.h.b16 %v1449
      %v1460 = vunpack.c.l.b16 %v1450
      %v1461 = vunpack.c.h.b16 %v1450
      %v1462 = vunpack.c.l.b16 %v1451
      %v1463 = vunpack.c.h.b16 %v1451
      %v1464 = vpack.c.b16 %v1460, %v1456
      %v1465 = vpack.c.b16 %v1461, %v1457
      %v1466 = vpack.c.b16 %v1462, %v1458
      %v1467 = vpack.c.b16 %v1463, %v1459
      %1468 = vrot.lane.b32.xlu0 %v1464, 17
      %v1469 = vpop.permute.xlu0 %1468
      %1470 = vrot.lane.b32.xlu0 %v1465, 17
      %v1471 = vpop.permute.xlu0 %1470
      %1472 = vrot.lane.b32.xlu0 %v1466, 17
      %v1473 = vpop.permute.xlu0 %1472
      %1474 = vrot.lane.b32.xlu0 %v1467, 17
      %v1475 = vpop.permute.xlu0 %1474
      %vm1476 = vcmask 138240
      %v1477 = vsel %vm1476, %v1469, %v1471
      %v1478 = vsel %vm1476, %v1471, %v1473
      %v1479 = vsel %vm1476, %v1473, %v1475
      %1483 = vst [vmem:[#allocation2 + $0x360] sm:$0xff] %v1477
      %1484 = vst [vmem:[#allocation2 + $0x368] sm:$0xff] %v1478
      %1485 = vst.msk [vmem:[#allocation2 + $0x370] sm:$0xff] %vm194, %v1479
      %v1486 = vld [vmem:[%s165] sm:$0xff]
      %v1487 = vld [vmem:[%s165 + $0x8] sm:$0xff]
      %v1488 = vld [vmem:[%s165 + $0x10] sm:$0xff]
      %v1489 = vld [vmem:[%s165 + $0x18] sm:$0xff]
      %v1494 = vunpack.c.l.b16 %v1486
      %v1495 = vunpack.c.h.b16 %v1486
      %v1496 = vunpack.c.l.b16 %v1487
      %v1497 = vunpack.c.h.b16 %v1487
      %v1498 = vunpack.c.l.b16 %v1488
      %v1499 = vunpack.c.h.b16 %v1488
      %v1500 = vunpack.c.l.b16 %v1489
      %v1501 = vunpack.c.h.b16 %v1489
      %v1502 = vpack.c.b16 %v1498, %v1494
      %v1503 = vpack.c.b16 %v1499, %v1495
      %v1504 = vpack.c.b16 %v1500, %v1496
      %v1505 = vpack.c.b16 %v1501, %v1497
      %1506 = vrot.lane.b32.xlu0 %v1502, 16
      %v1507 = vpop.permute.xlu0 %1506
      %1508 = vrot.lane.b32.xlu0 %v1503, 16
      %v1509 = vpop.permute.xlu0 %1508
      %1510 = vrot.lane.b32.xlu0 %v1504, 16
      %v1511 = vpop.permute.xlu0 %1510
      %1512 = vrot.lane.b32.xlu0 %v1505, 16
      %v1513 = vpop.permute.xlu0 %1512
      %vm1514 = vcmask 130048
      %v1515 = vsel %vm1514, %v1507, %v1509
      %v1516 = vsel %vm1514, %v1509, %v1511
      %v1517 = vsel %vm1514, %v1511, %v1513
      %1521 = vst [vmem:[#allocation2 + $0x378] sm:$0xff] %v1515
      %1522 = vst [vmem:[#allocation2 + $0x380] sm:$0xff] %v1516
      %1523 = vst.msk [vmem:[#allocation2 + $0x388] sm:$0xff] %vm194, %v1517
      %v1524 = vld [vmem:[%s165] sm:$0xff]
      %v1525 = vld [vmem:[%s165 + $0x8] sm:$0xff]
      %v1526 = vld [vmem:[%s165 + $0x10] sm:$0xff]
      %v1527 = vld [vmem:[%s165 + $0x18] sm:$0xff]
      %v1532 = vunpack.c.l.b16 %v1524
      %v1533 = vunpack.c.h.b16 %v1524
      %v1534 = vunpack.c.l.b16 %v1525
      %v1535 = vunpack.c.h.b16 %v1525
      %v1536 = vunpack.c.l.b16 %v1526
      %v1537 = vunpack.c.h.b16 %v1526
      %v1538 = vunpack.c.l.b16 %v1527
      %v1539 = vunpack.c.h.b16 %v1527
      %v1540 = vpack.c.b16 %v1536, %v1532
      %v1541 = vpack.c.b16 %v1537, %v1533
      %v1542 = vpack.c.b16 %v1538, %v1534
      %v1543 = vpack.c.b16 %v1539, %v1535
      %1544 = vrot.lane.b32.xlu0 %v1540, 15
      %v1545 = vpop.permute.xlu0 %1544
      %1546 = vrot.lane.b32.xlu0 %v1541, 15
      %v1547 = vpop.permute.xlu0 %1546
      %1548 = vrot.lane.b32.xlu0 %v1542, 15
      %v1549 = vpop.permute.xlu0 %1548
      %1550 = vrot.lane.b32.xlu0 %v1543, 15
      %v1551 = vpop.permute.xlu0 %1550
      %vm1552 = vcmask 121856
      %v1553 = vsel %vm1552, %v1545, %v1547
      %v1554 = vsel %vm1552, %v1547, %v1549
      %v1555 = vsel %vm1552, %v1549, %v1551
      %1559 = vst [vmem:[#allocation2 + $0x390] sm:$0xff] %v1553
      %1560 = vst [vmem:[#allocation2 + $0x398] sm:$0xff] %v1554
      %1561 = vst.msk [vmem:[#allocation2 + $0x3a0] sm:$0xff] %vm194, %v1555
      %v1562 = vld [vmem:[%s165] sm:$0xff]
      %v1563 = vld [vmem:[%s165 + $0x8] sm:$0xff]
      %v1564 = vld [vmem:[%s165 + $0x10] sm:$0xff]
      %v1565 = vld [vmem:[%s165 + $0x18] sm:$0xff]
      %v1570 = vunpack.c.l.b16 %v1562
      %v1571 = vunpack.c.h.b16 %v1562
      %v1572 = vunpack.c.l.b16 %v1563
      %v1573 = vunpack.c.h.b16 %v1563
      %v1574 = vunpack.c.l.b16 %v1564
      %v1575 = vunpack.c.h.b16 %v1564
      %v1576 = vunpack.c.l.b16 %v1565
      %v1577 = vunpack.c.h.b16 %v1565
      %v1578 = vpack.c.b16 %v1574, %v1570
      %v1579 = vpack.c.b16 %v1575, %v1571
      %v1580 = vpack.c.b16 %v1576, %v1572
      %v1581 = vpack.c.b16 %v1577, %v1573
      %1582 = vrot.lane.b32.xlu0 %v1578, 14
      %v1583 = vpop.permute.xlu0 %1582
      %1584 = vrot.lane.b32.xlu0 %v1579, 14
      %v1585 = vpop.permute.xlu0 %1584
      %1586 = vrot.lane.b32.xlu0 %v1580, 14
      %v1587 = vpop.permute.xlu0 %1586
      %1588 = vrot.lane.b32.xlu0 %v1581, 14
      %v1589 = vpop.permute.xlu0 %1588
      %vm1590 = vcmask 113664
      %v1591 = vsel %vm1590, %v1583, %v1585
      %v1592 = vsel %vm1590, %v1585, %v1587
      %v1593 = vsel %vm1590, %v1587, %v1589
      %1597 = vst [vmem:[#allocation2 + $0x3a8] sm:$0xff] %v1591
      %1598 = vst [vmem:[#allocation2 + $0x3b0] sm:$0xff] %v1592
      %1599 = vst.msk [vmem:[#allocation2 + $0x3b8] sm:$0xff] %vm194, %v1593
      %v1600 = vld [vmem:[%s165] sm:$0xff]
      %v1601 = vld [vmem:[%s165 + $0x8] sm:$0xff]
      %v1602 = vld [vmem:[%s165 + $0x10] sm:$0xff]
      %v1603 = vld [vmem:[%s165 + $0x18] sm:$0xff]
      %v1608 = vunpack.c.l.b16 %v1600
      %v1609 = vunpack.c.h.b16 %v1600
      %v1610 = vunpack.c.l.b16 %v1601
      %v1611 = vunpack.c.h.b16 %v1601
      %v1612 = vunpack.c.l.b16 %v1602
      %v1613 = vunpack.c.h.b16 %v1602
      %v1614 = vunpack.c.l.b16 %v1603
      %v1615 = vunpack.c.h.b16 %v1603
      %v1616 = vpack.c.b16 %v1612, %v1608
      %v1617 = vpack.c.b16 %v1613, %v1609
      %v1618 = vpack.c.b16 %v1614, %v1610
      %v1619 = vpack.c.b16 %v1615, %v1611
      %1620 = vrot.lane.b32.xlu0 %v1616, 13
      %v1621 = vpop.permute.xlu0 %1620
      %1622 = vrot.lane.b32.xlu0 %v1617, 13
      %v1623 = vpop.permute.xlu0 %1622
      %1624 = vrot.lane.b32.xlu0 %v1618, 13
      %v1625 = vpop.permute.xlu0 %1624
      %1626 = vrot.lane.b32.xlu0 %v1619, 13
      %v1627 = vpop.permute.xlu0 %1626
      %vm1628 = vcmask 105472
      %v1629 = vsel %vm1628, %v1621, %v1623
      %v1630 = vsel %vm1628, %v1623, %v1625
      %v1631 = vsel %vm1628, %v1625, %v1627
      %1635 = vst [vmem:[#allocation2 + $0x3c0] sm:$0xff] %v1629
      %1636 = vst [vmem:[#allocation2 + $0x3c8] sm:$0xff] %v1630
      %1637 = vst.msk [vmem:[#allocation2 + $0x3d0] sm:$0xff] %vm194, %v1631
      %v1638 = vld [vmem:[%s165] sm:$0xff]
      %v1639 = vld [vmem:[%s165 + $0x8] sm:$0xff]
      %v1640 = vld [vmem:[%s165 + $0x10] sm:$0xff]
      %v1641 = vld [vmem:[%s165 + $0x18] sm:$0xff]
      %v1646 = vunpack.c.l.b16 %v1638
      %v1647 = vunpack.c.h.b16 %v1638
      %v1648 = vunpack.c.l.b16 %v1639
      %v1649 = vunpack.c.h.b16 %v1639
      %v1650 = vunpack.c.l.b16 %v1640
      %v1651 = vunpack.c.h.b16 %v1640
      %v1652 = vunpack.c.l.b16 %v1641
      %v1653 = vunpack.c.h.b16 %v1641
      %v1654 = vpack.c.b16 %v1650, %v1646
      %v1655 = vpack.c.b16 %v1651, %v1647
      %v1656 = vpack.c.b16 %v1652, %v1648
      %v1657 = vpack.c.b16 %v1653, %v1649
      %1658 = vrot.lane.b32.xlu0 %v1654, 12
      %v1659 = vpop.permute.xlu0 %1658
      %1660 = vrot.lane.b32.xlu0 %v1655, 12
      %v1661 = vpop.permute.xlu0 %1660
      %1662 = vrot.lane.b32.xlu0 %v1656, 12
      %v1663 = vpop.permute.xlu0 %1662
      %1664 = vrot.lane.b32.xlu0 %v1657, 12
      %v1665 = vpop.permute.xlu0 %1664
      %vm1666 = vcmask 97280
      %v1667 = vsel %vm1666, %v1659, %v1661
      %v1668 = vsel %vm1666, %v1661, %v1663
      %v1669 = vsel %vm1666, %v1663, %v1665
      %1673 = vst [vmem:[#allocation2 + $0x3d8] sm:$0xff] %v1667
      %1674 = vst [vmem:[#allocation2 + $0x3e0] sm:$0xff] %v1668
      %1675 = vst.msk [vmem:[#allocation2 + $0x3e8] sm:$0xff] %vm194, %v1669
      %v1676 = vld [vmem:[%s165 + $0x4] sm:$0xff]
      %v1677 = vld [vmem:[%s165 + $0xc] sm:$0xf]
      %v1678 = vld [vmem:[%s165 + $0x14] sm:$0xff]
      %v1679 = vld [vmem:[%s165 + $0x1c] sm:$0xf]
      %v1684 = vunpack.c.l.b16 %v1676
      %v1685 = vunpack.c.h.b16 %v1676
      %v1686 = vunpack.c.l.b16 %v1677
      %v1687 = vunpack.c.l.b16 %v1678
      %v1688 = vunpack.c.h.b16 %v1678
      %v1689 = vunpack.c.l.b16 %v1679
      %v1690 = vpack.c.b16 %v1687, %v1684
      %v1691 = vpack.c.b16 %v1688, %v1685
      %v1692 = vpack.c.b16 %v1689, %v1686
      %1693 = vrot.lane.b32.xlu0 %v1690, 124
      %v1694 = vpop.permute.xlu0 %1693
      %1695 = vrot.lane.b32.xlu0 %v1691, 124
      %v1696 = vpop.permute.xlu0 %1695
      %1697 = vrot.lane.b32.xlu0 %v1692, 124
      %v1698 = vpop.permute.xlu0 %1697
      %v1699 = vsel %vm315, %v1694, %v1696
      %v1700 = vsel %vm315, %v1696, %v1698
      %1704 = vst [vmem:[#allocation2 + $0x3f0] sm:$0xff] %v1699
      %1705 = vst [vmem:[#allocation2 + $0x3f8] sm:$0xff] %v1700
      %1706 = vst.msk [vmem:[#allocation2 + $0x400] sm:$0xff] %vm194, %v1698
      %v1707 = vld [vmem:[%s165 + $0x4] sm:$0xff]
      %v1708 = vld [vmem:[%s165 + $0xc] sm:$0xf]
      %v1709 = vld [vmem:[%s165 + $0x14] sm:$0xff]
      %v1710 = vld [vmem:[%s165 + $0x1c] sm:$0xf]
      %v1715 = vunpack.c.l.b16 %v1707
      %v1716 = vunpack.c.h.b16 %v1707
      %v1717 = vunpack.c.l.b16 %v1708
      %v1718 = vunpack.c.l.b16 %v1709
      %v1719 = vunpack.c.h.b16 %v1709
      %v1720 = vunpack.c.l.b16 %v1710
      %v1721 = vpack.c.b16 %v1718, %v1715
      %v1722 = vpack.c.b16 %v1719, %v1716
      %v1723 = vpack.c.b16 %v1720, %v1717
      %1724 = vrot.lane.b32.xlu0 %v1721, 123
      %v1725 = vpop.permute.xlu0 %1724
      %1726 = vrot.lane.b32.xlu0 %v1722, 123
      %v1727 = vpop.permute.xlu0 %1726
      %1728 = vrot.lane.b32.xlu0 %v1723, 123
      %v1729 = vpop.permute.xlu0 %1728
      %v1730 = vsel %vm347, %v1725, %v1727
      %v1731 = vsel %vm347, %v1727, %v1729
      %1735 = vst [vmem:[#allocation2 + $0x408] sm:$0xff] %v1730
      %1736 = vst [vmem:[#allocation2 + $0x410] sm:$0xff] %v1731
      %1737 = vst.msk [vmem:[#allocation2 + $0x418] sm:$0xff] %vm194, %v1729
      %v1738 = vld [vmem:[%s165 + $0x4] sm:$0xff]
      %v1739 = vld [vmem:[%s165 + $0xc] sm:$0xf]
      %v1740 = vld [vmem:[%s165 + $0x14] sm:$0xff]
      %v1741 = vld [vmem:[%s165 + $0x1c] sm:$0xf]
      %v1746 = vunpack.c.l.b16 %v1738
      %v1747 = vunpack.c.h.b16 %v1738
      %v1748 = vunpack.c.l.b16 %v1739
      %v1749 = vunpack.c.l.b16 %v1740
      %v1750 = vunpack.c.h.b16 %v1740
      %v1751 = vunpack.c.l.b16 %v1741
      %v1752 = vpack.c.b16 %v1749, %v1746
      %v1753 = vpack.c.b16 %v1750, %v1747
      %v1754 = vpack.c.b16 %v1751, %v1748
      %1755 = vrot.lane.b32.xlu0 %v1752, 122
      %v1756 = vpop.permute.xlu0 %1755
      %1757 = vrot.lane.b32.xlu0 %v1753, 122
      %v1758 = vpop.permute.xlu0 %1757
      %1759 = vrot.lane.b32.xlu0 %v1754, 122
      %v1760 = vpop.permute.xlu0 %1759
      %v1761 = vsel %vm379, %v1756, %v1758
      %v1762 = vsel %vm379, %v1758, %v1760
      %1766 = vst [vmem:[#allocation2 + $0x420] sm:$0xff] %v1761
      %1767 = vst [vmem:[#allocation2 + $0x428] sm:$0xff] %v1762
      %1768 = vst.msk [vmem:[#allocation2 + $0x430] sm:$0xff] %vm194, %v1760
      %v1769 = vld [vmem:[%s165 + $0x4] sm:$0xff]
      %v1770 = vld [vmem:[%s165 + $0xc] sm:$0xf]
      %v1771 = vld [vmem:[%s165 + $0x14] sm:$0xff]
      %v1772 = vld [vmem:[%s165 + $0x1c] sm:$0xf]
      %v1777 = vunpack.c.l.b16 %v1769
      %v1778 = vunpack.c.h.b16 %v1769
      %v1779 = vunpack.c.l.b16 %v1770
      %v1780 = vunpack.c.l.b16 %v1771
      %v1781 = vunpack.c.h.b16 %v1771
      %v1782 = vunpack.c.l.b16 %v1772
      %v1783 = vpack.c.b16 %v1780, %v1777
      %v1784 = vpack.c.b16 %v1781, %v1778
      %v1785 = vpack.c.b16 %v1782, %v1779
      %1786 = vrot.lane.b32.xlu0 %v1783, 121
      %v1787 = vpop.permute.xlu0 %1786
      %1788 = vrot.lane.b32.xlu0 %v1784, 121
      %v1789 = vpop.permute.xlu0 %1788
      %1790 = vrot.lane.b32.xlu0 %v1785, 121
      %v1791 = vpop.permute.xlu0 %1790
      %vm1792 = vcmask 990208
      %v1793 = vsel %vm1792, %v1787, %v1789
      %v1794 = vsel %vm1792, %v1789, %v1791
      %1798 = vst [vmem:[#allocation2 + $0x438] sm:$0xff] %v1793
      %1799 = vst [vmem:[#allocation2 + $0x440] sm:$0xff] %v1794
      %1800 = vst.msk [vmem:[#allocation2 + $0x448] sm:$0xff] %vm194, %v1791
      %v1801 = vld [vmem:[%s165 + $0x4] sm:$0xff]
      %v1802 = vld [vmem:[%s165 + $0xc] sm:$0xf]
      %v1803 = vld [vmem:[%s165 + $0x14] sm:$0xff]
      %v1804 = vld [vmem:[%s165 + $0x1c] sm:$0xf]
      %v1809 = vunpack.c.l.b16 %v1801
      %v1810 = vunpack.c.h.b16 %v1801
      %v1811 = vunpack.c.l.b16 %v1802
      %v1812 = vunpack.c.l.b16 %v1803
      %v1813 = vunpack.c.h.b16 %v1803
      %v1814 = vunpack.c.l.b16 %v1804
      %v1815 = vpack.c.b16 %v1812, %v1809
      %v1816 = vpack.c.b16 %v1813, %v1810
      %v1817 = vpack.c.b16 %v1814, %v1811
      %1818 = vrot.lane.b32.xlu0 %v1815, 120
      %v1819 = vpop.permute.xlu0 %1818
      %1820 = vrot.lane.b32.xlu0 %v1816, 120
      %v1821 = vpop.permute.xlu0 %1820
      %1822 = vrot.lane.b32.xlu0 %v1817, 120
      %v1823 = vpop.permute.xlu0 %1822
      %vm1824 = vcmask 982016
      %v1825 = vsel %vm1824, %v1819, %v1821
      %v1826 = vsel %vm1824, %v1821, %v1823
      %1830 = vst [vmem:[#allocation2 + $0x450] sm:$0xff] %v1825
      %1831 = vst [vmem:[#allocation2 + $0x458] sm:$0xff] %v1826
      %1832 = vst.msk [vmem:[#allocation2 + $0x460] sm:$0xff] %vm194, %v1823
      %v1833 = vld [vmem:[%s165 + $0x4] sm:$0xff]
      %v1834 = vld [vmem:[%s165 + $0xc] sm:$0xf]
      %v1835 = vld [vmem:[%s165 + $0x14] sm:$0xff]
      %v1836 = vld [vmem:[%s165 + $0x1c] sm:$0xf]
      %v1841 = vunpack.c.l.b16 %v1833
      %v1842 = vunpack.c.h.b16 %v1833
      %v1843 = vunpack.c.l.b16 %v1834
      %v1844 = vunpack.c.l.b16 %v1835
      %v1845 = vunpack.c.h.b16 %v1835
      %v1846 = vunpack.c.l.b16 %v1836
      %v1847 = vpack.c.b16 %v1844, %v1841
      %v1848 = vpack.c.b16 %v1845, %v1842
      %v1849 = vpack.c.b16 %v1846, %v1843
      %1850 = vrot.lane.b32.xlu0 %v1847, 119
      %v1851 = vpop.permute.xlu0 %1850
      %1852 = vrot.lane.b32.xlu0 %v1848, 119
      %v1853 = vpop.permute.xlu0 %1852
      %1854 = vrot.lane.b32.xlu0 %v1849, 119
      %v1855 = vpop.permute.xlu0 %1854
      %vm1856 = vcmask 973824
      %v1857 = vsel %vm1856, %v1851, %v1853
      %v1858 = vsel %vm1856, %v1853, %v1855
      %1862 = vst [vmem:[#allocation2 + $0x468] sm:$0xff] %v1857
      %1863 = vst [vmem:[#allocation2 + $0x470] sm:$0xff] %v1858
      %1864 = vst.msk [vmem:[#allocation2 + $0x478] sm:$0xff] %vm194, %v1855
      %v1865 = vld [vmem:[%s165 + $0x4] sm:$0xff]
      %v1866 = vld [vmem:[%s165 + $0xc] sm:$0xf]
      %v1867 = vld [vmem:[%s165 + $0x14] sm:$0xff]
      %v1868 = vld [vmem:[%s165 + $0x1c] sm:$0xf]
      %v1873 = vunpack.c.l.b16 %v1865
      %v1874 = vunpack.c.h.b16 %v1865
      %v1875 = vunpack.c.l.b16 %v1866
      %v1876 = vunpack.c.l.b16 %v1867
      %v1877 = vunpack.c.h.b16 %v1867
      %v1878 = vunpack.c.l.b16 %v1868
      %v1879 = vpack.c.b16 %v1876, %v1873
      %v1880 = vpack.c.b16 %v1877, %v1874
      %v1881 = vpack.c.b16 %v1878, %v1875
      %1882 = vrot.lane.b32.xlu0 %v1879, 118
      %v1883 = vpop.permute.xlu0 %1882
      %1884 = vrot.lane.b32.xlu0 %v1880, 118
      %v1885 = vpop.permute.xlu0 %1884
      %1886 = vrot.lane.b32.xlu0 %v1881, 118
      %v1887 = vpop.permute.xlu0 %1886
      %vm1888 = vcmask 965632
      %v1889 = vsel %vm1888, %v1883, %v1885
      %v1890 = vsel %vm1888, %v1885, %v1887
      %1894 = vst [vmem:[#allocation2 + $0x480] sm:$0xff] %v1889
      %1895 = vst [vmem:[#allocation2 + $0x488] sm:$0xff] %v1890
      %1896 = vst.msk [vmem:[#allocation2 + $0x490] sm:$0xff] %vm194, %v1887
      %v1897 = vld [vmem:[%s1] sm:$0xff]
      %v1898 = vld [vmem:[%s1 + $0x8] sm:$0xff]
      %v1899 = vld [vmem:[%s1 + $0x10] sm:$0xff]
      %v1900 = vld [vmem:[%s1 + $0x18] sm:$0xf]
      %v1901 = vld [vmem:[#allocation2] sm:$0xff]
      %v1902 = vld [vmem:[#allocation2 + $0x8] sm:$0xff]
      %v1903 = vld [vmem:[#allocation2 + $0x10] sm:$0xff]
      %v1904 = vld [vmem:[#allocation2 + $0x18] sm:$0xff]
      %v1905 = vld [vmem:[#allocation2 + $0x20] sm:$0xff]
      %v1906 = vld [vmem:[#allocation2 + $0x28] sm:$0xff]
      %v1907 = vld [vmem:[#allocation2 + $0x30] sm:$0xff]
      %v1908 = vld [vmem:[#allocation2 + $0x38] sm:$0xff]
      %v1909 = vld [vmem:[#allocation2 + $0x40] sm:$0xff]
      %v1910 = vld [vmem:[#allocation2 + $0x48] sm:$0xff]
      %v1911 = vld [vmem:[#allocation2 + $0x50] sm:$0xff]
      %v1912 = vld [vmem:[#allocation2 + $0x58] sm:$0xff]
      %v1913 = vld [vmem:[#allocation2 + $0x60] sm:$0xff]
      %v1914 = vld [vmem:[#allocation2 + $0x68] sm:$0xff]
      %v1915 = vld [vmem:[#allocation2 + $0x70] sm:$0xff]
      %v1916 = vld [vmem:[#allocation2 + $0x78] sm:$0xff]
      %v1917 = vld [vmem:[#allocation2 + $0x80] sm:$0xff]
      %v1918 = vld [vmem:[#allocation2 + $0x88] sm:$0xff]
      %v1919 = vld [vmem:[#allocation2 + $0x90] sm:$0xff]
      %v1920 = vld [vmem:[#allocation2 + $0x98] sm:$0xff]
      %v1921 = vld [vmem:[#allocation2 + $0xa0] sm:$0xff]
      %v1922 = vld [vmem:[#allocation2 + $0xa8] sm:$0xff]
      %v1923 = vld [vmem:[#allocation2 + $0xb0] sm:$0xff]
      %v1924 = vld [vmem:[#allocation2 + $0xb8] sm:$0xff]
      %v1925 = vld [vmem:[#allocation2 + $0xc0] sm:$0xff]
      %v1926 = vld [vmem:[#allocation2 + $0xc8] sm:$0xff]
      %v1927 = vld [vmem:[#allocation2 + $0xd0] sm:$0xff]
      %v1928 = vld [vmem:[#allocation2 + $0xd8] sm:$0xff]
      %v1929 = vld [vmem:[#allocation2 + $0xe0] sm:$0xff]
      %v1930 = vld [vmem:[#allocation2 + $0xe8] sm:$0xff]
      %v1931 = vld [vmem:[#allocation2 + $0xf0] sm:$0xff]
      %v1932 = vld [vmem:[#allocation2 + $0xf8] sm:$0xff]
      %v1933 = vld [vmem:[#allocation2 + $0x100] sm:$0xff]
      %v1934 = vld [vmem:[#allocation2 + $0x108] sm:$0xff]
      %v1935 = vld [vmem:[#allocation2 + $0x110] sm:$0xff]
      %v1936 = vld [vmem:[#allocation2 + $0x118] sm:$0xff]
      %v1937 = vld [vmem:[#allocation2 + $0x120] sm:$0xff]
      %v1938 = vld [vmem:[#allocation2 + $0x128] sm:$0xff]
      %v1939 = vld [vmem:[#allocation2 + $0x130] sm:$0xff]
      %v1940 = vld [vmem:[#allocation2 + $0x138] sm:$0xff]
      %v1941 = vld [vmem:[#allocation2 + $0x140] sm:$0xff]
      %v1942 = vld [vmem:[#allocation2 + $0x148] sm:$0xff]
      %v1943 = vld [vmem:[#allocation2 + $0x150] sm:$0xff]
      %v1944 = vld [vmem:[#allocation2 + $0x158] sm:$0xff]
      %v1945 = vld [vmem:[#allocation2 + $0x160] sm:$0xff]
      %v1946 = vld [vmem:[#allocation2 + $0x168] sm:$0xff]
      %v1947 = vld [vmem:[#allocation2 + $0x170] sm:$0xff]
      %v1948 = vld [vmem:[#allocation2 + $0x178] sm:$0xff]
      %v1949 = vld [vmem:[#allocation2 + $0x180] sm:$0xff]
      %v1950 = vld [vmem:[#allocation2 + $0x188] sm:$0xff]
      %v1951 = vld [vmem:[#allocation2 + $0x190] sm:$0xff]
      %v1952 = vld [vmem:[#allocation2 + $0x198] sm:$0xff]
      %v1953 = vld [vmem:[#allocation2 + $0x1a0] sm:$0xff]
      %v1954 = vld [vmem:[#allocation2 + $0x1a8] sm:$0xff]
      %v1955 = vld [vmem:[#allocation2 + $0x1b0] sm:$0xff]
      %v1956 = vld [vmem:[#allocation2 + $0x1b8] sm:$0xff]
      %v1957 = vld [vmem:[#allocation2 + $0x1c0] sm:$0xff]
      %v1958 = vld [vmem:[#allocation2 + $0x1c8] sm:$0xff]
      %v1959 = vld [vmem:[#allocation2 + $0x1d0] sm:$0xff]
      %v1960 = vld [vmem:[#allocation2 + $0x1d8] sm:$0xff]
      %v1961 = vld [vmem:[#allocation2 + $0x1e0] sm:$0xff]
      %v1962 = vld [vmem:[#allocation2 + $0x1e8] sm:$0xff]
      %v1963 = vld [vmem:[#allocation2 + $0x1f0] sm:$0xff]
      %v1964 = vld [vmem:[#allocation2 + $0x1f8] sm:$0xff]
      %v1965 = vld [vmem:[#allocation2 + $0x200] sm:$0xff]
      %v1966 = vld [vmem:[#allocation2 + $0x208] sm:$0xff]
      %v1967 = vld [vmem:[#allocation2 + $0x210] sm:$0xff]
      %v1968 = vld [vmem:[#allocation2 + $0x218] sm:$0xff]
      %v1969 = vld [vmem:[#allocation2 + $0x220] sm:$0xff]
      %v1970 = vld [vmem:[#allocation2 + $0x228] sm:$0xff]
      %v1971 = vld [vmem:[#allocation2 + $0x230] sm:$0xff]
      %v1972 = vld [vmem:[#allocation2 + $0x238] sm:$0xff]
      %v1973 = vld [vmem:[#allocation2 + $0x240] sm:$0xff]
      %v1974 = vld [vmem:[#allocation2 + $0x248] sm:$0xff]
      %v1975 = vld [vmem:[#allocation2 + $0x250] sm:$0xff]
      %v1976 = vld [vmem:[#allocation2 + $0x258] sm:$0xff]
      %v1977 = vld [vmem:[#allocation2 + $0x260] sm:$0xff]
      %v1978 = vld [vmem:[#allocation2 + $0x268] sm:$0xff]
      %v1979 = vld [vmem:[#allocation2 + $0x270] sm:$0xff]
      %v1980 = vld [vmem:[#allocation2 + $0x278] sm:$0xff]
      %v1981 = vld [vmem:[#allocation2 + $0x280] sm:$0xff]
      %v1982 = vld [vmem:[#allocation2 + $0x288] sm:$0xff]
      %v1983 = vld [vmem:[#allocation2 + $0x290] sm:$0xff]
      %v1984 = vld [vmem:[#allocation2 + $0x298] sm:$0xff]
      %v1985 = vld [vmem:[#allocation2 + $0x2a0] sm:$0xff]
      %v1986 = vld [vmem:[#allocation2 + $0x2a8] sm:$0xff]
      %v1987 = vld [vmem:[#allocation2 + $0x2b0] sm:$0xff]
      %v1988 = vld [vmem:[#allocation2 + $0x2b8] sm:$0xff]
      %v1989 = vld [vmem:[#allocation2 + $0x2c0] sm:$0xff]
      %v1990 = vld [vmem:[#allocation2 + $0x2c8] sm:$0xff]
      %v1991 = vld [vmem:[#allocation2 + $0x2d0] sm:$0xff]
      %v1992 = vld [vmem:[#allocation2 + $0x2d8] sm:$0xff]
      %v1993 = vld [vmem:[#allocation2 + $0x2e0] sm:$0xff]
      %v1994 = vld [vmem:[#allocation2 + $0x2e8] sm:$0xff]
      %v1995 = vld [vmem:[#allocation2 + $0x2f0] sm:$0xff]
      %v1996 = vld [vmem:[#allocation2 + $0x2f8] sm:$0xff]
      %v1997 = vld [vmem:[#allocation2 + $0x300] sm:$0xff]
      %v1998 = vld [vmem:[#allocation2 + $0x308] sm:$0xff]
      %v1999 = vld [vmem:[#allocation2 + $0x310] sm:$0xff]
      %v2000 = vld [vmem:[#allocation2 + $0x318] sm:$0xff]
      %v2001 = vld [vmem:[#allocation2 + $0x320] sm:$0xff]
      %v2002 = vld [vmem:[#allocation2 + $0x328] sm:$0xff]
      %v2003 = vld [vmem:[#allocation2 + $0x330] sm:$0xff]
      %v2004 = vld [vmem:[#allocation2 + $0x338] sm:$0xff]
      %v2005 = vld [vmem:[#allocation2 + $0x340] sm:$0xff]
      %v2006 = vld [vmem:[#allocation2 + $0x348] sm:$0xff]
      %v2007 = vld [vmem:[#allocation2 + $0x350] sm:$0xff]
      %v2008 = vld [vmem:[#allocation2 + $0x358] sm:$0xff]
      %v2009 = vld [vmem:[#allocation2 + $0x360] sm:$0xff]
      %v2010 = vld [vmem:[#allocation2 + $0x368] sm:$0xff]
      %v2011 = vld [vmem:[#allocation2 + $0x370] sm:$0xff]
      %v2012 = vld [vmem:[#allocation2 + $0x378] sm:$0xff]
      %v2013 = vld [vmem:[#allocation2 + $0x380] sm:$0xff]
      %v2014 = vld [vmem:[#allocation2 + $0x388] sm:$0xff]
      %v2015 = vld [vmem:[#allocation2 + $0x390] sm:$0xff]
      %v2016 = vld [vmem:[#allocation2 + $0x398] sm:$0xff]
      %v2017 = vld [vmem:[#allocation2 + $0x3a0] sm:$0xff]
      %v2018 = vld [vmem:[#allocation2 + $0x3a8] sm:$0xff]
      %v2019 = vld [vmem:[#allocation2 + $0x3b0] sm:$0xff]
      %v2020 = vld [vmem:[#allocation2 + $0x3b8] sm:$0xff]
      %v2021 = vld [vmem:[#allocation2 + $0x3c0] sm:$0xff]
      %v2022 = vld [vmem:[#allocation2 + $0x3c8] sm:$0xff]
      %v2023 = vld [vmem:[#allocation2 + $0x3d0] sm:$0xff]
      %v2024 = vld [vmem:[#allocation2 + $0x3d8] sm:$0xff]
      %v2025 = vld [vmem:[#allocation2 + $0x3e0] sm:$0xff]
      %v2026 = vld [vmem:[#allocation2 + $0x3e8] sm:$0xff]
      %v2027 = vld [vmem:[#allocation2 + $0x3f0] sm:$0xff]
      %v2028 = vld [vmem:[#allocation2 + $0x3f8] sm:$0xff]
      %v2029 = vld [vmem:[#allocation2 + $0x400] sm:$0xff]
      %v2030 = vld [vmem:[#allocation2 + $0x408] sm:$0xff]
      %v2031 = vld [vmem:[#allocation2 + $0x410] sm:$0xff]
      %v2032 = vld [vmem:[#allocation2 + $0x418] sm:$0xff]
      %v2033 = vld [vmem:[#allocation2 + $0x420] sm:$0xff]
      %v2034 = vld [vmem:[#allocation2 + $0x428] sm:$0xff]
      %v2035 = vld [vmem:[#allocation2 + $0x430] sm:$0xff]
      %v2036 = vld [vmem:[#allocation2 + $0x438] sm:$0xff]
      %v2037 = vld [vmem:[#allocation2 + $0x440] sm:$0xff]
      %v2038 = vld [vmem:[#allocation2 + $0x448] sm:$0xff]
      %v2039 = vld [vmem:[#allocation2 + $0x450] sm:$0xff]
      %v2040 = vld [vmem:[#allocation2 + $0x458] sm:$0xff]
      %v2041 = vld [vmem:[#allocation2 + $0x460] sm:$0xff]
      %v2042 = vld [vmem:[#allocation2 + $0x468] sm:$0xff]
      %v2043 = vld [vmem:[#allocation2 + $0x470] sm:$0xff]
      %v2044 = vld [vmem:[#allocation2 + $0x478] sm:$0xff]
      %v2045 = vld [vmem:[#allocation2 + $0x480] sm:$0xff]
      %v2046 = vld [vmem:[#allocation2 + $0x488] sm:$0xff]
      %v2047 = vld [vmem:[#allocation2 + $0x490] sm:$0xff]
      %v2052 = vunpack.c.l.b16 %v1897
      %v2053 = vunpack.c.h.b16 %v1897
      %v2054 = vunpack.c.l.b16 %v1898
      %v2055 = vunpack.c.h.b16 %v1898
      %v2056 = vunpack.c.l.b16 %v1899
      %v2057 = vunpack.c.h.b16 %v1899
      %v2058 = vunpack.c.l.b16 %v1900
      %v2059 = vpack.c.b16 %v2052, %v2052
      %v2060 = vpack.c.b16 %v2053, %v2053
      %v2061 = vpack.c.b16 %v2054, %v2054
      %v2062 = vpack.c.b16 %v2055, %v2055
      %v2063 = vpack.c.b16 %v2056, %v2056
      %v2064 = vpack.c.b16 %v2057, %v2057
      %v2065 = vpack.c.b16 %v2058, %v2058
      %vm2072 = vcmask 130048
      %v2074 = vsel %vm2072, %v2065, 0
      %2076 = vmatprep.subr.bf16.mxu0 %v1902
      %2077 = vmatpush1.bf16.msra.mxu0 %v1901
      %2078 = vmatprep.subr.bf16.mxu0 %v1905
      %2079 = vmatpush1.bf16.msra.mxu0 %v1904
      %2080 = vmatprep.subr.bf16.mxu0 %v1908
      %2081 = vmatpush1.bf16.msra.mxu0 %v1907
      %2082 = vmatprep.subr.bf16.mxu0 %v1911
      %2083 = vmatpush1.bf16.msra.mxu0 %v1910
      %2084 = vmatprep.subr.bf16.mxu0 %v1914
      %2085 = vmatpush1.bf16.msra.mxu0 %v1913
      %2086 = vmatprep.subr.bf16.mxu0 %v1917
      %2087 = vmatpush1.bf16.msra.mxu0 %v1916
      %2088 = vmatprep.subr.bf16.mxu0 %v1920
      %2089 = vmatpush1.bf16.msra.mxu0 %v1919
      %2090 = vmatprep.subr.bf16.mxu0 %v1923
      %2091 = vmatpush1.bf16.msra.mxu0 %v1922
      %2092 = vmatprep.subr.bf16.mxu0 %v1926
      %2093 = vmatpush1.bf16.msra.mxu0 %v1925
      %2094 = vmatprep.subr.bf16.mxu0 %v1929
      %2095 = vmatpush1.bf16.msra.mxu0 %v1928
      %2096 = vmatprep.subr.bf16.mxu0 %v1932
      %2097 = vmatpush1.bf16.msra.mxu0 %v1931
      %2098 = vmatprep.subr.bf16.mxu0 %v1935
      %2099 = vmatpush1.bf16.msra.mxu0 %v1934
      %2100 = vmatprep.subr.bf16.mxu0 %v1938
      %2101 = vmatpush1.bf16.msra.mxu0 %v1937
      %2102 = vmatprep.subr.bf16.mxu0 %v1941
      %2103 = vmatpush1.bf16.msra.mxu0 %v1940
      %2104 = vmatprep.subr.bf16.mxu0 %v1944
      %2105 = vmatpush1.bf16.msra.mxu0 %v1943
      %2106 = vmatprep.subr.bf16.mxu0 %v1947
      %2107 = vmatpush1.bf16.msra.mxu0 %v1946
      %2108 = vmatprep.mubr.bf16.mxu0 %v2060
      %2109 = vmatmul.mubr.bf16.gmra.mrb[0].mxu0 %v2059
      %v2110 = vpop.f32.mrb[0].mxu0
      %v2111 = vadd.f32 0.0, %v2110
      %v2112 = vpop.f32.mrb[0].mxu0
      %v2113 = vadd.f32 0.0, %v2112
      %v2114 = vpop.f32.mrb[0].mxu0
      %v2115 = vpop.f32.mrb[0].mxu0
      %2116 = vdwg.mxu0
      %2117 = vmatprep.subr.bf16.mxu0 %v1950
      %2118 = vmatpush1.bf16.msra.mxu0 %v1949
      %2119 = vmatprep.subr.bf16.mxu0 %v1953
      %2120 = vmatpush1.bf16.msra.mxu0 %v1952
      %2121 = vmatprep.subr.bf16.mxu0 %v1956
      %2122 = vmatpush1.bf16.msra.mxu0 %v1955
      %2123 = vmatprep.subr.bf16.mxu0 %v1959
      %2124 = vmatpush1.bf16.msra.mxu0 %v1958
      %2125 = vmatprep.subr.bf16.mxu0 %v1962
      %2126 = vmatpush1.bf16.msra.mxu0 %v1961
      %2127 = vmatprep.subr.bf16.mxu0 %v1965
      %2128 = vmatpush1.bf16.msra.mxu0 %v1964
      %2129 = vmatprep.subr.bf16.mxu0 %v1968
      %2130 = vmatpush1.bf16.msra.mxu0 %v1967
      %2131 = vmatprep.subr.bf16.mxu0 %v1971
      %2132 = vmatpush1.bf16.msra.mxu0 %v1970
      %2133 = vmatprep.subr.bf16.mxu0 %v1974
      %2134 = vmatpush1.bf16.msra.mxu0 %v1973
      %2135 = vmatprep.subr.bf16.mxu0 %v1977
      %2136 = vmatpush1.bf16.msra.mxu0 %v1976
      %2137 = vmatprep.subr.bf16.mxu0 %v1980
      %2138 = vmatpush1.bf16.msra.mxu0 %v1979
      %2139 = vmatprep.subr.bf16.mxu0 %v1983
      %2140 = vmatpush1.bf16.msra.mxu0 %v1982
      %2141 = vmatprep.subr.bf16.mxu0 %v1986
      %2142 = vmatpush1.bf16.msra.mxu0 %v1985
      %2143 = vmatprep.subr.bf16.mxu0 %v1989
      %2144 = vmatpush1.bf16.msra.mxu0 %v1988
      %2145 = vmatprep.subr.bf16.mxu0 %v1992
      %2146 = vmatpush1.bf16.msra.mxu0 %v1991
      %2147 = vmatprep.subr.bf16.mxu0 %v1995
      %2148 = vmatpush1.bf16.msra.mxu0 %v1994
      %2149 = vmatprep.mubr.bf16.mxu0 %v2062
      %2150 = vmatmul.mubr.bf16.gmra.mrb[0].mxu0 %v2061
      %v2151 = vpop.f32.mrb[0].mxu0
      %v2152 = vadd.f32 %v2111, %v2151
      %v2153 = vpop.f32.mrb[0].mxu0
      %v2154 = vadd.f32 %v2113, %v2153
      %v2155 = vpop.f32.mrb[0].mxu0
      %v2156 = vpop.f32.mrb[0].mxu0
      %2157 = vdwg.mxu0
      %2158 = vmatprep.subr.bf16.mxu0 %v1998
      %2159 = vmatpush1.bf16.msra.mxu0 %v1997
      %2160 = vmatprep.subr.bf16.mxu0 %v2001
      %2161 = vmatpush1.bf16.msra.mxu0 %v2000
      %2162 = vmatprep.subr.bf16.mxu0 %v2004
      %2163 = vmatpush1.bf16.msra.mxu0 %v2003
      %2164 = vmatprep.subr.bf16.mxu0 %v2007
      %2165 = vmatpush1.bf16.msra.mxu0 %v2006
      %2166 = vmatprep.subr.bf16.mxu0 %v2010
      %2167 = vmatpush1.bf16.msra.mxu0 %v2009
      %2168 = vmatprep.subr.bf16.mxu0 %v2013
      %2169 = vmatpush1.bf16.msra.mxu0 %v2012
      %2170 = vmatprep.subr.bf16.mxu0 %v2016
      %2171 = vmatpush1.bf16.msra.mxu0 %v2015
      %2172 = vmatprep.subr.bf16.mxu0 %v2019
      %2173 = vmatpush1.bf16.msra.mxu0 %v2018
      %2174 = vmatprep.subr.bf16.mxu0 %v2022
      %2175 = vmatpush1.bf16.msra.mxu0 %v2021
      %2176 = vmatprep.subr.bf16.mxu0 %v2025
      %2177 = vmatpush1.bf16.msra.mxu0 %v2024
      %2178 = vmatprep.subr.bf16.mxu0 %v2028
      %2179 = vmatpush1.bf16.msra.mxu0 %v2027
      %2180 = vmatprep.subr.bf16.mxu0 %v2031
      %2181 = vmatpush1.bf16.msra.mxu0 %v2030
      %2182 = vmatprep.subr.bf16.mxu0 %v2034
      %2183 = vmatpush1.bf16.msra.mxu0 %v2033
      %2184 = vmatprep.subr.bf16.mxu0 %v2037
      %2185 = vmatpush1.bf16.msra.mxu0 %v2036
      %2186 = vmatprep.subr.bf16.mxu0 %v2040
      %2187 = vmatpush1.bf16.msra.mxu0 %v2039
      %2188 = vmatprep.subr.bf16.mxu0 %v2043
      %2189 = vmatpush1.bf16.msra.mxu0 %v2042
      %2190 = vmatprep.mubr.bf16.mxu0 %v2064
      %2191 = vmatmul.mubr.bf16.gmra.mrb[0].mxu0 %v2063
      %v2192 = vpop.f32.mrb[0].mxu0
      %v2193 = vadd.f32 %v2152, %v2192
      %v2194 = vpop.f32.mrb[0].mxu0
      %v2195 = vadd.f32 %v2154, %v2194
      %v2196 = vpop.f32.mrb[0].mxu0
      %v2197 = vpop.f32.mrb[0].mxu0
      %2198 = vdwg.mxu0
      %2199 = vmatprep.subr.bf16.mxu0 %v2046
      %2200 = vmatpush1.bf16.msra.mxu0 %v2045
      %2201 = vmatprep.subr.bf16.mxu0 0
      %2202 = vmatpush1.bf16.msra.mxu0 0
      %2203 = vmatprep.subr.bf16.mxu0 0
      %2204 = vmatpush1.bf16.msra.mxu0 0
      %2205 = vmatprep.subr.bf16.mxu0 0
      %2206 = vmatpush1.bf16.msra.mxu0 0
      %2207 = vmatprep.subr.bf16.mxu0 0
      %2208 = vmatpush1.bf16.msra.mxu0 0
      %2209 = vmatprep.subr.bf16.mxu0 0
      %2210 = vmatpush1.bf16.msra.mxu0 0
      %2211 = vmatprep.subr.bf16.mxu0 0
      %2212 = vmatpush1.bf16.msra.mxu0 0
      %2213 = vmatprep.subr.bf16.mxu0 0
      %2214 = vmatpush1.bf16.msra.mxu0 0
      %2215 = vmatprep.subr.bf16.mxu0 0
      %2216 = vmatpush1.bf16.msra.mxu0 0
      %2217 = vmatprep.subr.bf16.mxu0 0
      %2218 = vmatpush1.bf16.msra.mxu0 0
      %2219 = vmatprep.subr.bf16.mxu0 0
      %2220 = vmatpush1.bf16.msra.mxu0 0
      %2221 = vmatprep.subr.bf16.mxu0 0
      %2222 = vmatpush1.bf16.msra.mxu0 0
      %2223 = vmatprep.subr.bf16.mxu0 0
      %2224 = vmatpush1.bf16.msra.mxu0 0
      %2225 = vmatprep.subr.bf16.mxu0 0
      %2226 = vmatpush1.bf16.msra.mxu0 0
      %2227 = vmatprep.subr.bf16.mxu0 0
      %2228 = vmatpush1.bf16.msra.mxu0 0
      %2229 = vmatprep.subr.bf16.mxu0 0
      %2230 = vmatpush1.bf16.msra.mxu0 0
      %2231 = vmatprep.mubr.bf16.mxu0 0
      %2232 = vmatmul.mubr.bf16.gmra.mrb[0].mxu0 %v2074
      %v2233 = vpop.f32.mrb[0].mxu0
      %v2234 = vadd.f32 %v2193, %v2233
      %v2235 = vpop.f32.mrb[0].mxu0
      %v2236 = vadd.f32 %v2195, %v2235
      %v2237 = vpop.f32.mrb[0].mxu0
      %v2238 = vpop.f32.mrb[0].mxu0
      %2239 = vdwg.mxu0
      %2240 = vmatprep.subr.bf16.mxu0 0
      %2241 = vmatpush1.bf16.msra.mxu0 %v1903
      %2242 = vmatprep.subr.bf16.mxu0 0
      %2243 = vmatpush1.bf16.msra.mxu0 %v1906
      %2244 = vmatprep.subr.bf16.mxu0 0
      %2245 = vmatpush1.bf16.msra.mxu0 %v1909
      %2246 = vmatprep.subr.bf16.mxu0 0
      %2247 = vmatpush1.bf16.msra.mxu0 %v1912
      %2248 = vmatprep.subr.bf16.mxu0 0
      %2249 = vmatpush1.bf16.msra.mxu0 %v1915
      %2250 = vmatprep.subr.bf16.mxu0 0
      %2251 = vmatpush1.bf16.msra.mxu0 %v1918
      %2252 = vmatprep.subr.bf16.mxu0 0
      %2253 = vmatpush1.bf16.msra.mxu0 %v1921
      %2254 = vmatprep.subr.bf16.mxu0 0
      %2255 = vmatpush1.bf16.msra.mxu0 %v1924
      %2256 = vmatprep.subr.bf16.mxu0 0
      %2257 = vmatpush1.bf16.msra.mxu0 %v1927
      %2258 = vmatprep.subr.bf16.mxu0 0
      %2259 = vmatpush1.bf16.msra.mxu0 %v1930
      %2260 = vmatprep.subr.bf16.mxu0 0
      %2261 = vmatpush1.bf16.msra.mxu0 %v1933
      %2262 = vmatprep.subr.bf16.mxu0 0
      %2263 = vmatpush1.bf16.msra.mxu0 %v1936
      %2264 = vmatprep.subr.bf16.mxu0 0
      %2265 = vmatpush1.bf16.msra.mxu0 %v1939
      %2266 = vmatprep.subr.bf16.mxu0 0
      %2267 = vmatpush1.bf16.msra.mxu0 %v1942
      %2268 = vmatprep.subr.bf16.mxu0 0
      %2269 = vmatpush1.bf16.msra.mxu0 %v1945
      %2270 = vmatprep.subr.bf16.mxu0 0
      %2271 = vmatpush1.bf16.msra.mxu0 %v1948
      %2272 = vmatprep.mubr.bf16.mxu0 %v2060
      %2273 = vmatmul.mubr.bf16.gmra.mrb[0].mxu0 %v2059
      %v2274 = vpop.f32.mrb[0].mxu0
      %v2275 = vadd.f32 0.0, %v2274
      %v2276 = vpop.f32.mrb[0].mxu0
      %v2277 = vpop.f32.mrb[0].mxu0
      %v2278 = vpop.f32.mrb[0].mxu0
      %2279 = vdwg.mxu0
      %2280 = vmatprep.subr.bf16.mxu0 0
      %2281 = vmatpush1.bf16.msra.mxu0 %v1951
      %2282 = vmatprep.subr.bf16.mxu0 0
      %2283 = vmatpush1.bf16.msra.mxu0 %v1954
      %2284 = vmatprep.subr.bf16.mxu0 0
      %2285 = vmatpush1.bf16.msra.mxu0 %v1957
      %2286 = vmatprep.subr.bf16.mxu0 0
      %2287 = vmatpush1.bf16.msra.mxu0 %v1960
      %2288 = vmatprep.subr.bf16.mxu0 0
      %2289 = vmatpush1.bf16.msra.mxu0 %v1963
      %2290 = vmatprep.subr.bf16.mxu0 0
      %2291 = vmatpush1.bf16.msra.mxu0 %v1966
      %2292 = vmatprep.subr.bf16.mxu0 0
      %2293 = vmatpush1.bf16.msra.mxu0 %v1969
      %2294 = vmatprep.subr.bf16.mxu0 0
      %2295 = vmatpush1.bf16.msra.mxu0 %v1972
      %2296 = vmatprep.subr.bf16.mxu0 0
      %2297 = vmatpush1.bf16.msra.mxu0 %v1975
      %2298 = vmatprep.subr.bf16.mxu0 0
      %2299 = vmatpush1.bf16.msra.mxu0 %v1978
      %2300 = vmatprep.subr.bf16.mxu0 0
      %2301 = vmatpush1.bf16.msra.mxu0 %v1981
      %2302 = vmatprep.subr.bf16.mxu0 0
      %2303 = vmatpush1.bf16.msra.mxu0 %v1984
      %2304 = vmatprep.subr.bf16.mxu0 0
      %2305 = vmatpush1.bf16.msra.mxu0 %v1987
      %2306 = vmatprep.subr.bf16.mxu0 0
      %2307 = vmatpush1.bf16.msra.mxu0 %v1990
      %2308 = vmatprep.subr.bf16.mxu0 0
      %2309 = vmatpush1.bf16.msra.mxu0 %v1993
      %2310 = vmatprep.subr.bf16.mxu0 0
      %2311 = vmatpush1.bf16.msra.mxu0 %v1996
      %2312 = vmatprep.mubr.bf16.mxu0 %v2062
      %2313 = vmatmul.mubr.bf16.gmra.mrb[0].mxu0 %v2061
      %v2314 = vpop.f32.mrb[0].mxu0
      %v2315 = vadd.f32 %v2275, %v2314
      %v2316 = vpop.f32.mrb[0].mxu0
      %v2317 = vpop.f32.mrb[0].mxu0
      %v2318 = vpop.f32.mrb[0].mxu0
      %2319 = vdwg.mxu0
      %2320 = vmatprep.subr.bf16.mxu0 0
      %2321 = vmatpush1.bf16.msra.mxu0 %v1999
      %2322 = vmatprep.subr.bf16.mxu0 0
      %2323 = vmatpush1.bf16.msra.mxu0 %v2002
      %2324 = vmatprep.subr.bf16.mxu0 0
      %2325 = vmatpush1.bf16.msra.mxu0 %v2005
      %2326 = vmatprep.subr.bf16.mxu0 0
      %2327 = vmatpush1.bf16.msra.mxu0 %v2008
      %2328 = vmatprep.subr.bf16.mxu0 0
      %2329 = vmatpush1.bf16.msra.mxu0 %v2011
      %2330 = vmatprep.subr.bf16.mxu0 0
      %2331 = vmatpush1.bf16.msra.mxu0 %v2014
      %2332 = vmatprep.subr.bf16.mxu0 0
      %2333 = vmatpush1.bf16.msra.mxu0 %v2017
      %2334 = vmatprep.subr.bf16.mxu0 0
      %2335 = vmatpush1.bf16.msra.mxu0 %v2020
      %2336 = vmatprep.subr.bf16.mxu0 0
      %2337 = vmatpush1.bf16.msra.mxu0 %v2023
      %2338 = vmatprep.subr.bf16.mxu0 0
      %2339 = vmatpush1.bf16.msra.mxu0 %v2026
      %2340 = vmatprep.subr.bf16.mxu0 0
      %2341 = vmatpush1.bf16.msra.mxu0 %v2029
      %2342 = vmatprep.subr.bf16.mxu0 0
      %2343 = vmatpush1.bf16.msra.mxu0 %v2032
      %2344 = vmatprep.subr.bf16.mxu0 0
      %2345 = vmatpush1.bf16.msra.mxu0 %v2035
      %2346 = vmatprep.subr.bf16.mxu0 0
      %2347 = vmatpush1.bf16.msra.mxu0 %v2038
      %2348 = vmatprep.subr.bf16.mxu0 0
      %2349 = vmatpush1.bf16.msra.mxu0 %v2041
      %2350 = vmatprep.subr.bf16.mxu0 0
      %2351 = vmatpush1.bf16.msra.mxu0 %v2044
      %2352 = vmatprep.mubr.bf16.mxu0 %v2064
      %2353 = vmatmul.mubr.bf16.gmra.mrb[0].mxu0 %v2063
      %v2354 = vpop.f32.mrb[0].mxu0
      %v2355 = vadd.f32 %v2315, %v2354
      %v2356 = vpop.f32.mrb[0].mxu0
      %v2357 = vpop.f32.mrb[0].mxu0
      %v2358 = vpop.f32.mrb[0].mxu0
      %2359 = vdwg.mxu0
      %2360 = vmatprep.subr.bf16.mxu0 0
      %2361 = vmatpush1.bf16.msra.mxu0 %v2047
      %2362 = vmatprep.subr.bf16.mxu0 0
      %2363 = vmatpush1.bf16.msra.mxu0 0
      %2364 = vmatprep.subr.bf16.mxu0 0
      %2365 = vmatpush1.bf16.msra.mxu0 0
      %2366 = vmatprep.subr.bf16.mxu0 0
      %2367 = vmatpush1.bf16.msra.mxu0 0
      %2368 = vmatprep.subr.bf16.mxu0 0
      %2369 = vmatpush1.bf16.msra.mxu0 0
      %2370 = vmatprep.subr.bf16.mxu0 0
      %2371 = vmatpush1.bf16.msra.mxu0 0
      %2372 = vmatprep.subr.bf16.mxu0 0
      %2373 = vmatpush1.bf16.msra.mxu0 0
      %2374 = vmatprep.subr.bf16.mxu0 0
      %2375 = vmatpush1.bf16.msra.mxu0 0
      %2376 = vmatprep.subr.bf16.mxu0 0
      %2377 = vmatpush1.bf16.msra.mxu0 0
      %2378 = vmatprep.subr.bf16.mxu0 0
      %2379 = vmatpush1.bf16.msra.mxu0 0
      %2380 = vmatprep.subr.bf16.mxu0 0
      %2381 = vmatpush1.bf16.msra.mxu0 0
      %2382 = vmatprep.subr.bf16.mxu0 0
      %2383 = vmatpush1.bf16.msra.mxu0 0
      %2384 = vmatprep.subr.bf16.mxu0 0
      %2385 = vmatpush1.bf16.msra.mxu0 0
      %2386 = vmatprep.subr.bf16.mxu0 0
      %2387 = vmatpush1.bf16.msra.mxu0 0
      %2388 = vmatprep.subr.bf16.mxu0 0
      %2389 = vmatpush1.bf16.msra.mxu0 0
      %2390 = vmatprep.subr.bf16.mxu0 0
      %2391 = vmatpush1.bf16.msra.mxu0 0
      %2392 = vmatprep.mubr.bf16.mxu0 0
      %2393 = vmatmul.mubr.bf16.gmra.mrb[0].mxu0 %v2074
      %v2394 = vpop.f32.mrb[0].mxu0
      %v2395 = vadd.f32 %v2355, %v2394
      %v2396 = vpop.f32.mrb[0].mxu0
      %v2397 = vpop.f32.mrb[0].mxu0
      %v2398 = vpop.f32.mrb[0].mxu0
      %2399 = vdwg.mxu0
      %v2400 = vmax.f32 %v2234, 0.0
      %v2401 = vmax.f32 %v2236, 0.0
      %v2402 = vmax.f32 %v2395, 0.0
      %v2403 = vld [vmem:[%s2] sm:$0xff]
      %v2404 = vld [vmem:[%s2 + $0x8] sm:$0xff]
      %v2405 = vld [vmem:[%s2 + $0x10] sm:$0xff]
      %v2406 = vld [vmem:[%s2 + $0x18] sm:$0xff]
      %v2407 = vld [vmem:[%s2 + $0x20] sm:$0xff]
      %v2408 = vld [vmem:[%s2 + $0x28] sm:$0xff]
      %v2409 = vld [vmem:[%s2 + $0x30] sm:$0xff]
      %v2410 = vld [vmem:[%s2 + $0x38] sm:$0xff]
      %v2411 = vld [vmem:[%s2 + $0x40] sm:$0xff]
      %v2412 = vld [vmem:[%s2 + $0x48] sm:$0xff]
      %v2413 = vld [vmem:[%s2 + $0x50] sm:$0xff]
      %v2414 = vld [vmem:[%s2 + $0x58] sm:$0xff]
      %v2415 = vld [vmem:[%s2 + $0x60] sm:$0xff]
      %v2416 = vld [vmem:[%s2 + $0x68] sm:$0xff]
      %v2417 = vld [vmem:[%s2 + $0x70] sm:$0xff]
      %v2418 = vld [vmem:[%s2 + $0x78] sm:$0xff]
      %v2419 = vld [vmem:[%s2 + $0x80] sm:$0xff]
      %v2420 = vld [vmem:[%s2 + $0x88] sm:$0xff]
      %v2421 = vld [vmem:[%s2 + $0x90] sm:$0xff]
      %v2422 = vld [vmem:[%s2 + $0x98] sm:$0xff]
      %v2423 = vld [vmem:[%s2 + $0xa0] sm:$0xff]
      %v2424 = vld [vmem:[%s2 + $0xa8] sm:$0xff]
      %v2425 = vld [vmem:[%s2 + $0xb0] sm:$0xff]
      %v2426 = vld [vmem:[%s2 + $0xb8] sm:$0xff]
      %v2427 = vld [vmem:[%s2 + $0xc0] sm:$0xff]
      %v2428 = vld [vmem:[%s2 + $0xc8] sm:$0xff]
      %v2429 = vld [vmem:[%s2 + $0xd0] sm:$0xff]
      %v2430 = vld [vmem:[%s2 + $0xd8] sm:$0xff]
      %v2431 = vld [vmem:[%s2 + $0xe0] sm:$0xff]
      %v2432 = vld [vmem:[%s2 + $0xe8] sm:$0xff]
      %v2433 = vld [vmem:[%s2 + $0xf0] sm:$0xff]
      %v2434 = vld [vmem:[%s2 + $0xf8] sm:$0xff]
      %v2435 = vld [vmem:[%s2 + $0x100] sm:$0xff]
      %v2436 = vld [vmem:[%s2 + $0x108] sm:$0xff]
      %v2437 = vld [vmem:[%s2 + $0x110] sm:$0xff]
      %v2438 = vld [vmem:[%s2 + $0x118] sm:$0xff]
      %v2439 = vld [vmem:[%s2 + $0x120] sm:$0xff]
      %v2440 = vld [vmem:[%s2 + $0x128] sm:$0xff]
      %v2441 = vld [vmem:[%s2 + $0x130] sm:$0xff]
      %v2442 = vld [vmem:[%s2 + $0x138] sm:$0xff]
      %v2443 = vld [vmem:[%s2 + $0x140] sm:$0xff]
      %v2444 = vld [vmem:[%s2 + $0x148] sm:$0xff]
      %v2445 = vld [vmem:[%s2 + $0x150] sm:$0xff]
      %v2446 = vld [vmem:[%s2 + $0x158] sm:$0xff]
      %v2447 = vld [vmem:[%s2 + $0x160] sm:$0xff]
      %v2448 = vld [vmem:[%s2 + $0x168] sm:$0xff]
      %v2449 = vld [vmem:[%s2 + $0x170] sm:$0xff]
      %v2450 = vld [vmem:[%s2 + $0x178] sm:$0xff]
      %v2451 = vld [vmem:[%s2 + $0x180] sm:$0xff]
      %v2452 = vld [vmem:[%s2 + $0x188] sm:$0xff]
      %v2453 = vld [vmem:[%s2 + $0x190] sm:$0xff]
      %v2454 = vld [vmem:[%s2 + $0x198] sm:$0xff]
      %v2455 = vld [vmem:[%s2 + $0x1a0] sm:$0xff]
      %v2456 = vld [vmem:[%s2 + $0x1a8] sm:$0xff]
      %v2457 = vld [vmem:[%s2 + $0x1b0] sm:$0xff]
      %v2458 = vld [vmem:[%s2 + $0x1b8] sm:$0xff]
      %v2459 = vld [vmem:[%s2 + $0x1c0] sm:$0xff]
      %v2460 = vld [vmem:[%s2 + $0x1c8] sm:$0xff]
      %v2461 = vld [vmem:[%s2 + $0x1d0] sm:$0xff]
      %v2462 = vld [vmem:[%s2 + $0x1d8] sm:$0xff]
      %v2463 = vld [vmem:[%s2 + $0x1e0] sm:$0xff]
      %v2464 = vld [vmem:[%s2 + $0x1e8] sm:$0xff]
      %v2465 = vld [vmem:[%s2 + $0x1f0] sm:$0xff]
      %v2466 = vld [vmem:[%s2 + $0x1f8] sm:$0xff]
      %v2467 = vld [vmem:[%s2 + $0x200] sm:$0xff]
      %v2468 = vld [vmem:[%s2 + $0x208] sm:$0xff]
      %v2469 = vld [vmem:[%s2 + $0x210] sm:$0xff]
      %v2470 = vld [vmem:[%s2 + $0x218] sm:$0xff]
      %v2471 = vld [vmem:[%s2 + $0x220] sm:$0xff]
      %v2472 = vld [vmem:[%s2 + $0x228] sm:$0xff]
      %v2473 = vld [vmem:[%s2 + $0x230] sm:$0xff]
      %v2474 = vld [vmem:[%s2 + $0x238] sm:$0xff]
      %v2475 = vld [vmem:[%s2 + $0x240] sm:$0xff]
      %v2476 = vld [vmem:[%s2 + $0x248] sm:$0xff]
      %v2477 = vld [vmem:[%s2 + $0x250] sm:$0xff]
      %v2478 = vld [vmem:[%s2 + $0x258] sm:$0xff]
      %v2479 = vld [vmem:[%s2 + $0x260] sm:$0xff]
      %v2480 = vld [vmem:[%s2 + $0x268] sm:$0xff]
      %v2481 = vld [vmem:[%s2 + $0x270] sm:$0xff]
      %v2482 = vld [vmem:[%s2 + $0x278] sm:$0xff]
      %v2483 = vld [vmem:[%s2 + $0x280] sm:$0xff]
      %v2484 = vld [vmem:[%s2 + $0x288] sm:$0xff]
      %v2485 = vld [vmem:[%s2 + $0x290] sm:$0xff]
      %v2486 = vld [vmem:[%s2 + $0x298] sm:$0xff]
      %v2487 = vld [vmem:[%s2 + $0x2a0] sm:$0xff]
      %v2488 = vld [vmem:[%s2 + $0x2a8] sm:$0xff]
      %v2489 = vld [vmem:[%s2 + $0x2b0] sm:$0xff]
      %v2490 = vld [vmem:[%s2 + $0x2b8] sm:$0xff]
      %v2492 = vsel %vm194, %v2402, 0
      %2494 = vmatprep.subr.mxu0 %v2404
      %2495 = vmatpush1.msra.mxu0 %v2403
      %2496 = vmatprep.subr.mxu0 %v2406
      %2497 = vmatpush1.msra.mxu0 %v2405
      %2498 = vmatprep.subr.mxu0 %v2408
      %2499 = vmatpush1.msra.mxu0 %v2407
      %2500 = vmatprep.subr.mxu0 %v2410
      %2501 = vmatpush1.msra.mxu0 %v2409
      %2502 = vmatprep.subr.mxu0 %v2412
      %2503 = vmatpush1.msra.mxu0 %v2411
      %2504 = vmatprep.subr.mxu0 %v2414
      %2505 = vmatpush1.msra.mxu0 %v2413
      %2506 = vmatprep.subr.mxu0 %v2416
      %2507 = vmatpush1.msra.mxu0 %v2415
      %2508 = vmatprep.subr.mxu0 %v2418
      %2509 = vmatpush1.msra.mxu0 %v2417
      %2510 = vmatprep.subr.mxu0 %v2420
      %2511 = vmatpush1.msra.mxu0 %v2419
      %2512 = vmatprep.subr.mxu0 %v2422
      %2513 = vmatpush1.msra.mxu0 %v2421
      %2514 = vmatprep.subr.mxu0 %v2424
      %2515 = vmatpush1.msra.mxu0 %v2423
      %2516 = vmatprep.subr.mxu0 %v2426
      %2517 = vmatpush1.msra.mxu0 %v2425
      %2518 = vmatprep.subr.mxu0 %v2428
      %2519 = vmatpush1.msra.mxu0 %v2427
      %2520 = vmatprep.subr.mxu0 %v2430
      %2521 = vmatpush1.msra.mxu0 %v2429
      %2522 = vmatprep.subr.mxu0 %v2432
      %2523 = vmatpush1.msra.mxu0 %v2431
      %2524 = vmatprep.subr.mxu0 %v2434
      %2525 = vmatpush1.msra.mxu0 %v2433
      %2526 = vmatprep.subr.mxu0 %v2436
      %2527 = vmatpush1.msra.mxu0 %v2435
      %2528 = vmatprep.subr.mxu0 %v2438
      %2529 = vmatpush1.msra.mxu0 %v2437
      %2530 = vmatprep.subr.mxu0 %v2440
      %2531 = vmatpush1.msra.mxu0 %v2439
      %2532 = vmatprep.subr.mxu0 %v2442
      %2533 = vmatpush1.msra.mxu0 %v2441
      %2534 = vmatprep.subr.mxu0 %v2444
      %2535 = vmatpush1.msra.mxu0 %v2443
      %2536 = vmatprep.subr.mxu0 %v2446
      %2537 = vmatpush1.msra.mxu0 %v2445
      %2538 = vmatprep.subr.mxu0 %v2448
      %2539 = vmatpush1.msra.mxu0 %v2447
      %2540 = vmatprep.subr.mxu0 %v2450
      %2541 = vmatpush1.msra.mxu0 %v2449
      %2542 = vmatprep.subr.mxu0 %v2452
      %2543 = vmatpush1.msra.mxu0 %v2451
      %2544 = vmatprep.subr.mxu0 %v2454
      %2545 = vmatpush1.msra.mxu0 %v2453
      %2546 = vmatprep.subr.mxu0 %v2456
      %2547 = vmatpush1.msra.mxu0 %v2455
      %2548 = vmatprep.subr.mxu0 %v2458
      %2549 = vmatpush1.msra.mxu0 %v2457
      %2550 = vmatprep.subr.mxu0 %v2460
      %2551 = vmatpush1.msra.mxu0 %v2459
      %2552 = vmatprep.subr.mxu0 %v2462
      %2553 = vmatpush1.msra.mxu0 %v2461
      %2554 = vmatprep.subr.mxu0 %v2464
      %2555 = vmatpush1.msra.mxu0 %v2463
      %2556 = vmatprep.subr.mxu0 %v2466
      %2557 = vmatpush1.msra.mxu0 %v2465
      %2558 = vmatprep.mubr.f32.mxu0 %v2401
      %2559 = vmatmul.mubr.f32.gmra.mrb[0].mxu0 %v2400
      %v2560 = vpop.f32.mrb[0].mxu0
      %v2561 = vadd.f32 0.0, %v2560
      %v2562 = vpop.f32.mrb[0].mxu0
      %v2563 = vadd.f32 0.0, %v2562
      %2564 = vdwg.mxu0
      %2565 = vmatprep.subr.mxu0 %v2468
      %2566 = vmatpush1.msra.mxu0 %v2467
      %2567 = vmatprep.subr.mxu0 %v2470
      %2568 = vmatpush1.msra.mxu0 %v2469
      %2569 = vmatprep.subr.mxu0 %v2472
      %2570 = vmatpush1.msra.mxu0 %v2471
      %2571 = vmatprep.subr.mxu0 %v2474
      %2572 = vmatpush1.msra.mxu0 %v2473
      %2573 = vmatprep.subr.mxu0 %v2476
      %2574 = vmatpush1.msra.mxu0 %v2475
      %2575 = vmatprep.subr.mxu0 %v2478
      %2576 = vmatpush1.msra.mxu0 %v2477
      %2577 = vmatprep.subr.mxu0 %v2480
      %2578 = vmatpush1.msra.mxu0 %v2479
      %2579 = vmatprep.subr.mxu0 %v2482
      %2580 = vmatpush1.msra.mxu0 %v2481
      %2581 = vmatprep.subr.mxu0 %v2484
      %2582 = vmatpush1.msra.mxu0 %v2483
      %2583 = vmatprep.subr.mxu0 %v2486
      %2584 = vmatpush1.msra.mxu0 %v2485
      %2585 = vmatprep.subr.mxu0 %v2488
      %2586 = vmatpush1.msra.mxu0 %v2487
      %2587 = vmatprep.subr.mxu0 %v2490
      %2588 = vmatpush1.msra.mxu0 %v2489
      %2589 = vmatprep.subr.mxu0 0.0
      %2590 = vmatpush1.msra.mxu0 0.0
      %2591 = vmatprep.subr.mxu0 0.0
      %2592 = vmatpush1.msra.mxu0 0.0
      %2593 = vmatprep.subr.mxu0 0.0
      %2594 = vmatpush1.msra.mxu0 0.0
      %2595 = vmatprep.subr.mxu0 0.0
      %2596 = vmatpush1.msra.mxu0 0.0
      %2597 = vmatprep.subr.mxu0 0.0
      %2598 = vmatpush1.msra.mxu0 0.0
      %2599 = vmatprep.subr.mxu0 0.0
      %2600 = vmatpush1.msra.mxu0 0.0
      %2601 = vmatprep.subr.mxu0 0.0
      %2602 = vmatpush1.msra.mxu0 0.0
      %2603 = vmatprep.subr.mxu0 0.0
      %2604 = vmatpush1.msra.mxu0 0.0
      %2605 = vmatprep.subr.mxu0 0.0
      %2606 = vmatpush1.msra.mxu0 0.0
      %2607 = vmatprep.subr.mxu0 0.0
      %2608 = vmatpush1.msra.mxu0 0.0
      %2609 = vmatprep.subr.mxu0 0.0
      %2610 = vmatpush1.msra.mxu0 0.0
      %2611 = vmatprep.subr.mxu0 0.0
      %2612 = vmatpush1.msra.mxu0 0.0
      %2613 = vmatprep.subr.mxu0 0.0
      %2614 = vmatpush1.msra.mxu0 0.0
      %2615 = vmatprep.subr.mxu0 0.0
      %2616 = vmatpush1.msra.mxu0 0.0
      %2617 = vmatprep.subr.mxu0 0.0
      %2618 = vmatpush1.msra.mxu0 0.0
      %2619 = vmatprep.subr.mxu0 0.0
      %2620 = vmatpush1.msra.mxu0 0.0
      %2621 = vmatprep.subr.mxu0 0.0
      %2622 = vmatpush1.msra.mxu0 0.0
      %2623 = vmatprep.subr.mxu0 0.0
      %2624 = vmatpush1.msra.mxu0 0.0
      %2625 = vmatprep.subr.mxu0 0.0
      %2626 = vmatpush1.msra.mxu0 0.0
      %2627 = vmatprep.subr.mxu0 0.0
      %2628 = vmatpush1.msra.mxu0 0.0
      %2629 = vmatprep.mubr.f32.mxu0 0.0
      %2630 = vmatmul.mubr.f32.gmra.mrb[0].mxu0 %v2492
      %v2631 = vpop.f32.mrb[0].mxu0
      %v2632 = vadd.f32 %v2561, %v2631
      %v2633 = vpop.f32.mrb[0].mxu0
      %v2634 = vadd.f32 %v2563, %v2633
      %2635 = vdwg.mxu0
      %2636 = vst [vmem:[%s170] sm:$0xff] %v2632
      %2637 = vst [vmem:[%s170 + $0x8] sm:$0xff] %v2634
      %p2638 = scmp.lt.s32.totalorder %s14, 1
      %s2639 = scalar_select %p2638, %s14, 1
      %s2640 = smul.addr %s2639, 2
      %s2641 = smul.addr %s2640, 8
      %s2642 = scalar_lea.vmem %s3, %s2641
      // Predicated region
      $region33: #{conv_block.1} parent=31 // pred_check
        %p2643 = pneg %p100
      $region34: #{conv_block.1} parent=31 // pred_check_branch
        %2645 = sbr.rel (%p2643) target = $region36
      $region35: #{conv_block.1} parent=31 // pred_region
        _
      $region36: #{conv_block.1} parent=31 // pred_fallthru
        _
    $region32: #{conv_block.1} parent=5 // pred_fallthru
      _
    %p2646 = scmp.le.s32.totalorder 2, %s9
    // Predicated region
    $region37: #{conv_block.1} parent=5 // pred_check
      %p2647 = pneg %p2646
    $region38: #{conv_block.1} parent=5 // pred_check_branch
      %2649 = sbr.rel (%p2647) target = $region40
    $region39: #{conv_block.1} parent=5 // pred_region
      %s2650 = ssub.s32 %s9, 2
      // Predicated region
      $region41: #{conv_block.1} parent=39 // pred_check
        %p2651 = pneg %p106
      $region42: #{conv_block.1} parent=39 // pred_check_branch
        %2653 = sbr.rel (%p2651) target = $region44
      $region43: #{conv_block.1} parent=39 // pred_region
        %p2654 = scmp.lt.s32.totalorder %s15, 1
        %s2655 = scalar_select %p2654, %s15, 1
        %s2656 = smul.addr %s2655, 2
        %s2657 = smul.addr %s2656, 8
        %s2658 = scalar_lea.vmem %s3, %s2657
      $region44: #{conv_block.1} parent=39 // pred_fallthru
        _
    $region40: #{conv_block.1} parent=5 // pred_fallthru
      _
  $region6: #{conv_block.1} parent=0 // loop_footer
    %s13 = sadd.s32 1, %s9
  $region7: #{conv_block.1} parent=0 // loop_footer_branch
    %8 = sbr.rel target = $region3
  $region8: #{conv_block.1} parent=0 // loop_exit
    _

</llo_original>
